<compile_context>
chip_gen: v5e
topology: v5e:2x2
jax: 0.10.0
libtpu: 0.0.40
codegen_flags: <defaults>
</compile_context>

<pallas_src>
import functools

import jax
import jax.numpy as jnp
from jax.experimental import pallas as pl
from jax.experimental.pallas import tpu as pltpu

PARAMS_PER_LAYER = 16
HEAD_PARAMS = 6


# ----------------------------------------------------------------------------
# Fused Pallas kernel: encoder stack + flatten + MLP head
# ----------------------------------------------------------------------------
def fused_forward_kernel(*refs, num_layers, num_heads):
    x_ref = refs[0]
    out_ref = refs[-1]
    params = refs[1:-1]

    f32 = jnp.float32
    h = x_ref[...].astype(f32)
    B, L, E = h.shape

    def layer_norm(v, g, b):
        mu = jnp.mean(v, axis=-1, keepdims=True)
        var = jnp.mean((v - mu) ** 2, axis=-1, keepdims=True)
        return (v - mu) * jax.lax.rsqrt(var + 1e-5) * g + b

    idx = 0
    for _ in range(num_layers):
        (wq_ref, bq_ref, wk_ref, bk_ref, wv_ref, bv_ref, wo_ref, bo_ref,
         ln1_g_ref, ln1_b_ref, w1_ref, b1_ref, w2_ref, b2_ref,
         ln2_g_ref, ln2_b_ref) = params[idx:idx + PARAMS_PER_LAYER]
        idx += PARAMS_PER_LAYER

        # --- multi-head self-attention, unrolled per head -------------------
        # Weights are head-major, so every op is a plain single-contraction
        # matmul or a batched matmul; no activation transposes/reshapes.
        # Softmax scale 1/sqrt(Dh) is pre-folded into wq/bq at init.
        attn = jnp.broadcast_to(bo_ref[...], (B, L, E))
        for hh in range(num_heads):
            q = jnp.einsum('ble,ed->bld', h, wq_ref[hh],
                           preferred_element_type=f32) + bq_ref[hh]
            k = jnp.einsum('ble,ed->bld', h, wk_ref[hh],
                           preferred_element_type=f32) + bk_ref[hh]
            v = jnp.einsum('ble,ed->bld', h, wv_ref[hh],
                           preferred_element_type=f32) + bv_ref[hh]
            s = jnp.einsum('bld,bmd->blm', q, k, preferred_element_type=f32)
            s = s - jnp.max(s, axis=-1, keepdims=True)
            p = jnp.exp(s)
            p = p * pl.reciprocal(jnp.sum(p, axis=-1, keepdims=True),
                                  approx=True)
            ctx = jnp.einsum('blm,bmd->bld', p, v, preferred_element_type=f32)
            # concat-of-heads @ Wo == sum_h ctx_h @ Wo_h  (Wo stored (H,Dh,E))
            attn = attn + jnp.einsum('bld,de->ble', ctx, wo_ref[hh],
                                     preferred_element_type=f32)

        h = layer_norm(h + attn, ln1_g_ref[...], ln1_b_ref[...])

        # --- feed-forward ----------------------------------------------------
        f = jnp.einsum('ble,ef->blf', h, w1_ref[...],
                       preferred_element_type=f32) + b1_ref[...]
        f = jnp.maximum(f, 0.0)
        f = jnp.einsum('blf,fe->ble', f, w2_ref[...],
                       preferred_element_type=f32) + b2_ref[...]
        h = layer_norm(h + f, ln2_g_ref[...], ln2_b_ref[...])

    # --- MLP head ------------------------------------------------------------
    (w1h_ref, b1h_ref, w2h_ref, b2h_ref, w3h_ref, b3h_ref) = \
        params[idx:idx + HEAD_PARAMS]

    # x.view(-1, L*E) @ W1 == sum_l x[:, l, :] @ W1[l] with W1 stored (L,E,256):
    # the flatten never materializes as an in-kernel cross-tile reshape.
    z = jnp.broadcast_to(b1h_ref[...], (B, b1h_ref.shape[1]))
    for l in range(L):
        z = z + jnp.dot(h[:, l, :], w1h_ref[l], preferred_element_type=f32)
    z = jnp.maximum(z, 0.0)                                    # relu (dropout=id)
    z = jnp.dot(z, w2h_ref[...], preferred_element_type=f32) + b2h_ref[...]
    z = jnp.maximum(z, 0.0)                                    # relu (dropout=id)
    # linear3 is zero-padded to 128 output lanes -> unmasked lane-dense store.
    z = jnp.dot(z, w3h_ref[...], preferred_element_type=f32) + b3h_ref[...]
    out_ref[...] = z.astype(out_ref.dtype)


# ----------------------------------------------------------------------------
# Wrapper
# ----------------------------------------------------------------------------
_VMEM = pl.BlockSpec(memory_space=pltpu.MemorySpace.VMEM)


def simple_classifier_forward(x, enc_layers, head, num_heads, output_dim):
    flat_params = [p for layer in enc_layers for p in layer] + list(head)
    padded_out = head[-2].shape[1]                 # lane-padded linear3 width
    out = pl.pallas_call(
        functools.partial(fused_forward_kernel,
                          num_layers=len(enc_layers), num_heads=num_heads),
        out_shape=jax.ShapeDtypeStruct((x.shape[0], padded_out), jnp.float32),
        in_specs=[_VMEM] * (1 + len(flat_params)),
        out_specs=_VMEM,
        compiler_params=pltpu.CompilerParams(
            vmem_limit_bytes=32 * 1024 * 1024),
    )(x, *flat_params)
    return out[:, :output_dim]                     # drop lane padding (XLA-side)


# ----------------------------------------------------------------------------
# Deterministic parameter construction (kernel-friendly layouts)
# ----------------------------------------------------------------------------
def init_params(key, num_encoder_layer, max_len, embed_dim, num_heads,
                dim_ffn, output_dim):
    E, F, H = embed_dim, dim_ffn, num_heads
    Dh = E // H
    keys = iter(jax.random.split(key, 16 * num_encoder_layer + 16))

    def w(shape, scale=0.02):
        return (scale * jax.random.normal(next(keys), shape)).astype(jnp.float32)

    qk_scale = 1.0 / float(Dh) ** 0.5
    enc_layers = []
    for _ in range(num_encoder_layer):
        wq, bq = w((E, E)), w((E,))
        wk, bk = w((E, E)), w((E,))
        wv, bv = w((E, E)), w((E,))
        wo, bo = w((E, E)), w((E,))
        layer = (
            # head-major projections; softmax scale folded into q weights/bias
            (wq * qk_scale).reshape(E, H, Dh).transpose(1, 0, 2),   # (H, E, Dh)
            (bq * qk_scale).reshape(H, 1, Dh),
            wk.reshape(E, H, Dh).transpose(1, 0, 2),
            bk.reshape(H, 1, Dh),
            wv.reshape(E, H, Dh).transpose(1, 0, 2),
            bv.reshape(H, 1, Dh),
            wo.reshape(H, Dh, E),                                   # (H, Dh, E)
            bo.reshape(1, 1, E),
            jnp.ones((1, 1, E), jnp.float32),                       # ln1 gamma
            jnp.zeros((1, 1, E), jnp.float32),                      # ln1 beta
            w((E, F)), w((1, 1, F)),                                # ffn W1, b1
            w((F, E)), w((1, 1, E)),                                # ffn W2, b2
            jnp.ones((1, 1, E), jnp.float32),                       # ln2 gamma
            jnp.zeros((1, 1, E), jnp.float32),                      # ln2 beta
        )
        enc_layers.append(layer)

    # MLP head: flatten folded into W1 layout; linear3 lane-padded to 128.
    lane = 128
    out_pad = lane * ((output_dim + lane - 1) // lane)
    w1h = w((max_len * E, 256)).reshape(max_len, E, 256)            # (L, E, 256)
    b1h = w((1, 256))
    w2h, b2h = w((256, 128)), w((1, 128))
    w3h = jnp.zeros((128, out_pad), jnp.float32).at[:, :output_dim].set(
        w((128, output_dim)))
    b3h = jnp.zeros((1, out_pad), jnp.float32).at[:, :output_dim].set(
        w((1, output_dim)))
    head = (w1h, b1h, w2h, b2h, w3h, b3h)
    return enc_layers, head


# ----------------------------------------------------------------------------
# Main
# ----------------------------------------------------------------------------
if __name__ == "__main__":
    num_encoder_layer = 2
    max_len = 8
    embed_dim = 32
    num_heads = 4
    d_model = 32           # assumed == embed_dim
    dim_ffn = 64
    output_dim = 10
    batch = 2

    key = jax.random.PRNGKey(0)
    k_x, k_p = jax.random.split(key)

    # Input: (batch, max_len, embed_dim), batch-first layout.
    x = jax.random.normal(k_x, (batch, max_len, embed_dim), dtype=jnp.float32)

    enc_layers, head = init_params(k_p, num_encoder_layer, max_len, embed_dim,
                                   num_heads, dim_ffn, output_dim)

    out = simple_classifier_forward(x, enc_layers, head, num_heads, output_dim)
    out = jax.block_until_ready(out)
    assert out.shape == (batch, output_dim), out.shape
    assert bool(jnp.all(jnp.isfinite(out))), "non-finite output"
    print("KERNEL_OK")
</pallas_src>

<mosaic_0001>
module attributes {stable_mosaic.version = 11 : i64} {
  func.func @fused_forward_kernel(%arg0: memref<2x8x32xf32, #tpu.memory_space<vmem>>, %arg1: memref<4x32x8xf32, #tpu.memory_space<vmem>>, %arg2: memref<4x1x8xf32, #tpu.memory_space<vmem>>, %arg3: memref<4x32x8xf32, #tpu.memory_space<vmem>>, %arg4: memref<4x1x8xf32, #tpu.memory_space<vmem>>, %arg5: memref<4x32x8xf32, #tpu.memory_space<vmem>>, %arg6: memref<4x1x8xf32, #tpu.memory_space<vmem>>, %arg7: memref<4x8x32xf32, #tpu.memory_space<vmem>>, %arg8: memref<1x1x32xf32, #tpu.memory_space<vmem>>, %arg9: memref<1x1x32xf32, #tpu.memory_space<vmem>>, %arg10: memref<1x1x32xf32, #tpu.memory_space<vmem>>, %arg11: memref<32x64xf32, #tpu.memory_space<vmem>>, %arg12: memref<1x1x64xf32, #tpu.memory_space<vmem>>, %arg13: memref<64x32xf32, #tpu.memory_space<vmem>>, %arg14: memref<1x1x32xf32, #tpu.memory_space<vmem>>, %arg15: memref<1x1x32xf32, #tpu.memory_space<vmem>>, %arg16: memref<1x1x32xf32, #tpu.memory_space<vmem>>, %arg17: memref<4x32x8xf32, #tpu.memory_space<vmem>>, %arg18: memref<4x1x8xf32, #tpu.memory_space<vmem>>, %arg19: memref<4x32x8xf32, #tpu.memory_space<vmem>>, %arg20: memref<4x1x8xf32, #tpu.memory_space<vmem>>, %arg21: memref<4x32x8xf32, #tpu.memory_space<vmem>>, %arg22: memref<4x1x8xf32, #tpu.memory_space<vmem>>, %arg23: memref<4x8x32xf32, #tpu.memory_space<vmem>>, %arg24: memref<1x1x32xf32, #tpu.memory_space<vmem>>, %arg25: memref<1x1x32xf32, #tpu.memory_space<vmem>>, %arg26: memref<1x1x32xf32, #tpu.memory_space<vmem>>, %arg27: memref<32x64xf32, #tpu.memory_space<vmem>>, %arg28: memref<1x1x64xf32, #tpu.memory_space<vmem>>, %arg29: memref<64x32xf32, #tpu.memory_space<vmem>>, %arg30: memref<1x1x32xf32, #tpu.memory_space<vmem>>, %arg31: memref<1x1x32xf32, #tpu.memory_space<vmem>>, %arg32: memref<1x1x32xf32, #tpu.memory_space<vmem>>, %arg33: memref<8x32x256xf32, #tpu.memory_space<vmem>>, %arg34: memref<1x256xf32, #tpu.memory_space<vmem>>, %arg35: memref<256x128xf32, #tpu.memory_space<vmem>>, %arg36: memref<1x128xf32, #tpu.memory_space<vmem>>, %arg37: memref<128x128xf32, #tpu.memory_space<vmem>>, %arg38: memref<1x128xf32, #tpu.memory_space<vmem>>, %arg39: memref<2x128xf32, #tpu.memory_space<vmem>>) attributes {dimension_semantics = [], scalar_prefetch = 0 : i64, scratch_operands = 0 : i64, tpu.core_type = #tpu.core_type<tc>} {
    %c0 = arith.constant 0 : index
    %c0_0 = arith.constant 0 : index
    %c0_1 = arith.constant 0 : index
    %0 = vector.load %arg0[%c0, %c0_0, %c0_1] : memref<2x8x32xf32, #tpu.memory_space<vmem>>, vector<2x8x32xf32>
    %c0_2 = arith.constant 0 : index
    %c0_3 = arith.constant 0 : index
    %c0_4 = arith.constant 0 : index
    %1 = vector.load %arg8[%c0_2, %c0_3, %c0_4] : memref<1x1x32xf32, #tpu.memory_space<vmem>>, vector<1x1x32xf32>
    %2 = vector.shape_cast %1 : vector<1x1x32xf32> to vector<1x1x32xf32>
    %3 = vector.broadcast %2 : vector<1x1x32xf32> to vector<2x8x32xf32>
    %c0_5 = arith.constant 0 : index
    %c0_6 = arith.constant 0 : index
    %c0_7 = arith.constant 0 : index
    %4 = vector.load %arg1[%c0_5, %c0_6, %c0_7] : memref<4x32x8xf32, #tpu.memory_space<vmem>>, vector<1x32x8xf32>
    %5 = vector.shape_cast %4 : vector<1x32x8xf32> to vector<32x8xf32>
    "tpu.trace_start"() <{level = 10 : i32, message = "ble,ed->bld"}> : () -> ()
    %cst = arith.constant dense<0.000000e+00> : vector<2x8x8xf32>
    %6 = tpu.matmul %0, %5, %cst {dimension_numbers = #tpu.dot_dimension_numbers<[2], [0], [0, 1], [1], [0, 0, 0, 1, 1, 1], [], []>} : vector<2x8x32xf32>, vector<32x8xf32>, vector<2x8x8xf32> -> vector<2x8x8xf32>
    "tpu.trace_stop"() : () -> ()
    %c0_8 = arith.constant 0 : index
    %c0_9 = arith.constant 0 : index
    %c0_10 = arith.constant 0 : index
    %7 = vector.load %arg2[%c0_8, %c0_9, %c0_10] : memref<4x1x8xf32, #tpu.memory_space<vmem>>, vector<1x1x8xf32>
    %8 = vector.shape_cast %7 : vector<1x1x8xf32> to vector<1x8xf32>
    %9 = vector.shape_cast %8 : vector<1x8xf32> to vector<1x1x8xf32>
    %10 = vector.broadcast %9 : vector<1x1x8xf32> to vector<2x8x8xf32>
    %11 = arith.addf %6, %10 : vector<2x8x8xf32>
    %c0_11 = arith.constant 0 : index
    %c0_12 = arith.constant 0 : index
    %c0_13 = arith.constant 0 : index
    %12 = vector.load %arg3[%c0_11, %c0_12, %c0_13] : memref<4x32x8xf32, #tpu.memory_space<vmem>>, vector<1x32x8xf32>
    %13 = vector.shape_cast %12 : vector<1x32x8xf32> to vector<32x8xf32>
    "tpu.trace_start"() <{level = 10 : i32, message = "ble,ed->bld"}> : () -> ()
    %cst_14 = arith.constant dense<0.000000e+00> : vector<2x8x8xf32>
    %14 = tpu.matmul %0, %13, %cst_14 {dimension_numbers = #tpu.dot_dimension_numbers<[2], [0], [0, 1], [1], [0, 0, 0, 1, 1, 1], [], []>} : vector<2x8x32xf32>, vector<32x8xf32>, vector<2x8x8xf32> -> vector<2x8x8xf32>
    "tpu.trace_stop"() : () -> ()
    %c0_15 = arith.constant 0 : index
    %c0_16 = arith.constant 0 : index
    %c0_17 = arith.constant 0 : index
    %15 = vector.load %arg4[%c0_15, %c0_16, %c0_17] : memref<4x1x8xf32, #tpu.memory_space<vmem>>, vector<1x1x8xf32>
    %16 = vector.shape_cast %15 : vector<1x1x8xf32> to vector<1x8xf32>
    %17 = vector.shape_cast %16 : vector<1x8xf32> to vector<1x1x8xf32>
    %18 = vector.broadcast %17 : vector<1x1x8xf32> to vector<2x8x8xf32>
    %19 = arith.addf %14, %18 : vector<2x8x8xf32>
    %c0_18 = arith.constant 0 : index
    %c0_19 = arith.constant 0 : index
    %c0_20 = arith.constant 0 : index
    %20 = vector.load %arg5[%c0_18, %c0_19, %c0_20] : memref<4x32x8xf32, #tpu.memory_space<vmem>>, vector<1x32x8xf32>
    %21 = vector.shape_cast %20 : vector<1x32x8xf32> to vector<32x8xf32>
    "tpu.trace_start"() <{level = 10 : i32, message = "ble,ed->bld"}> : () -> ()
    %cst_21 = arith.constant dense<0.000000e+00> : vector<2x8x8xf32>
    %22 = tpu.matmul %0, %21, %cst_21 {dimension_numbers = #tpu.dot_dimension_numbers<[2], [0], [0, 1], [1], [0, 0, 0, 1, 1, 1], [], []>} : vector<2x8x32xf32>, vector<32x8xf32>, vector<2x8x8xf32> -> vector<2x8x8xf32>
    "tpu.trace_stop"() : () -> ()
    %c0_22 = arith.constant 0 : index
    %c0_23 = arith.constant 0 : index
    %c0_24 = arith.constant 0 : index
    %23 = vector.load %arg6[%c0_22, %c0_23, %c0_24] : memref<4x1x8xf32, #tpu.memory_space<vmem>>, vector<1x1x8xf32>
    %24 = vector.shape_cast %23 : vector<1x1x8xf32> to vector<1x8xf32>
    %25 = vector.shape_cast %24 : vector<1x8xf32> to vector<1x1x8xf32>
    %26 = vector.broadcast %25 : vector<1x1x8xf32> to vector<2x8x8xf32>
    %27 = arith.addf %22, %26 : vector<2x8x8xf32>
    "tpu.trace_start"() <{level = 10 : i32, message = "bld,bmd->blm"}> : () -> ()
    %cst_25 = arith.constant dense<0.000000e+00> : vector<2x8x8xf32>
    %28 = tpu.matmul %11, %19, %cst_25 {dimension_numbers = #tpu.dot_dimension_numbers<[2], [2], [1], [1], [0, 0, 0, 1, 1, 1], [0], [0]>} : vector<2x8x8xf32>, vector<2x8x8xf32>, vector<2x8x8xf32> -> vector<2x8x8xf32>
    "tpu.trace_stop"() : () -> ()
    %cst_26 = arith.constant dense<0xFF800000> : vector<2x8xf32>
    %29 = vector.multi_reduction <maximumf>, %28, %cst_26 [2] : vector<2x8x8xf32> to vector<2x8xf32>
    %30 = vector.shape_cast %29 : vector<2x8xf32> to vector<2x8x1xf32>
    %31 = vector.broadcast %30 : vector<2x8x1xf32> to vector<2x8x8xf32>
    %32 = arith.subf %28, %31 : vector<2x8x8xf32>
    %33 = math.exp %32 : vector<2x8x8xf32>
    %cst_27 = arith.constant dense<0.000000e+00> : vector<2x8xf32>
    %34 = vector.multi_reduction <add>, %33, %cst_27 [2] : vector<2x8x8xf32> to vector<2x8xf32>
    %35 = vector.shape_cast %34 : vector<2x8xf32> to vector<2x8x1xf32>
    %36 = tpu.reciprocal %35 {approx = true} : vector<2x8x1xf32> -> vector<2x8x1xf32>
    %37 = vector.broadcast %36 : vector<2x8x1xf32> to vector<2x8x8xf32>
    %38 = arith.mulf %33, %37 : vector<2x8x8xf32>
    "tpu.trace_start"() <{level = 10 : i32, message = "blm,bmd->bld"}> : () -> ()
    %cst_28 = arith.constant dense<0.000000e+00> : vector<2x8x8xf32>
    %39 = tpu.matmul %38, %27, %cst_28 {dimension_numbers = #tpu.dot_dimension_numbers<[2], [1], [1], [2], [0, 0, 0, 1, 1, 2], [0], [0]>} : vector<2x8x8xf32>, vector<2x8x8xf32>, vector<2x8x8xf32> -> vector<2x8x8xf32>
    "tpu.trace_stop"() : () -> ()
    %c0_29 = arith.constant 0 : index
    %c0_30 = arith.constant 0 : index
    %c0_31 = arith.constant 0 : index
    %40 = vector.load %arg7[%c0_29, %c0_30, %c0_31] : memref<4x8x32xf32, #tpu.memory_space<vmem>>, vector<1x8x32xf32>
    %41 = vector.shape_cast %40 : vector<1x8x32xf32> to vector<8x32xf32>
    "tpu.trace_start"() <{level = 10 : i32, message = "bld,de->ble"}> : () -> ()
    %cst_32 = arith.constant dense<0.000000e+00> : vector<2x8x32xf32>
    %42 = tpu.matmul %39, %41, %cst_32 {dimension_numbers = #tpu.dot_dimension_numbers<[2], [0], [0, 1], [1], [0, 0, 0, 1, 1, 1], [], []>} : vector<2x8x8xf32>, vector<8x32xf32>, vector<2x8x32xf32> -> vector<2x8x32xf32>
    "tpu.trace_stop"() : () -> ()
    %43 = arith.addf %3, %42 : vector<2x8x32xf32>
    %c1 = arith.constant 1 : index
    %c0_33 = arith.constant 0 : index
    %c0_34 = arith.constant 0 : index
    %44 = vector.load %arg1[%c1, %c0_33, %c0_34] : memref<4x32x8xf32, #tpu.memory_space<vmem>>, vector<1x32x8xf32>
    %45 = vector.shape_cast %44 : vector<1x32x8xf32> to vector<32x8xf32>
    "tpu.trace_start"() <{level = 10 : i32, message = "ble,ed->bld"}> : () -> ()
    %cst_35 = arith.constant dense<0.000000e+00> : vector<2x8x8xf32>
    %46 = tpu.matmul %0, %45, %cst_35 {dimension_numbers = #tpu.dot_dimension_numbers<[2], [0], [0, 1], [1], [0, 0, 0, 1, 1, 1], [], []>} : vector<2x8x32xf32>, vector<32x8xf32>, vector<2x8x8xf32> -> vector<2x8x8xf32>
    "tpu.trace_stop"() : () -> ()
    %c1_36 = arith.constant 1 : index
    %c0_37 = arith.constant 0 : index
    %c0_38 = arith.constant 0 : index
    %47 = vector.load %arg2[%c1_36, %c0_37, %c0_38] : memref<4x1x8xf32, #tpu.memory_space<vmem>>, vector<1x1x8xf32>
    %48 = vector.shape_cast %47 : vector<1x1x8xf32> to vector<1x8xf32>
    %49 = vector.shape_cast %48 : vector<1x8xf32> to vector<1x1x8xf32>
    %50 = vector.broadcast %49 : vector<1x1x8xf32> to vector<2x8x8xf32>
    %51 = arith.addf %46, %50 : vector<2x8x8xf32>
    %c1_39 = arith.constant 1 : index
    %c0_40 = arith.constant 0 : index
    %c0_41 = arith.constant 0 : index
    %52 = vector.load %arg3[%c1_39, %c0_40, %c0_41] : memref<4x32x8xf32, #tpu.memory_space<vmem>>, vector<1x32x8xf32>
    %53 = vector.shape_cast %52 : vector<1x32x8xf32> to vector<32x8xf32>
    "tpu.trace_start"() <{level = 10 : i32, message = "ble,ed->bld"}> : () -> ()
    %cst_42 = arith.constant dense<0.000000e+00> : vector<2x8x8xf32>
    %54 = tpu.matmul %0, %53, %cst_42 {dimension_numbers = #tpu.dot_dimension_numbers<[2], [0], [0, 1], [1], [0, 0, 0, 1, 1, 1], [], []>} : vector<2x8x32xf32>, vector<32x8xf32>, vector<2x8x8xf32> -> vector<2x8x8xf32>
    "tpu.trace_stop"() : () -> ()
    %c1_43 = arith.constant 1 : index
    %c0_44 = arith.constant 0 : index
    %c0_45 = arith.constant 0 : index
    %55 = vector.load %arg4[%c1_43, %c0_44, %c0_45] : memref<4x1x8xf32, #tpu.memory_space<vmem>>, vector<1x1x8xf32>
    %56 = vector.shape_cast %55 : vector<1x1x8xf32> to vector<1x8xf32>
    %57 = vector.shape_cast %56 : vector<1x8xf32> to vector<1x1x8xf32>
    %58 = vector.broadcast %57 : vector<1x1x8xf32> to vector<2x8x8xf32>
    %59 = arith.addf %54, %58 : vector<2x8x8xf32>
    %c1_46 = arith.constant 1 : index
    %c0_47 = arith.constant 0 : index
    %c0_48 = arith.constant 0 : index
    %60 = vector.load %arg5[%c1_46, %c0_47, %c0_48] : memref<4x32x8xf32, #tpu.memory_space<vmem>>, vector<1x32x8xf32>
    %61 = vector.shape_cast %60 : vector<1x32x8xf32> to vector<32x8xf32>
    "tpu.trace_start"() <{level = 10 : i32, message = "ble,ed->bld"}> : () -> ()
    %cst_49 = arith.constant dense<0.000000e+00> : vector<2x8x8xf32>
    %62 = tpu.matmul %0, %61, %cst_49 {dimension_numbers = #tpu.dot_dimension_numbers<[2], [0], [0, 1], [1], [0, 0, 0, 1, 1, 1], [], []>} : vector<2x8x32xf32>, vector<32x8xf32>, vector<2x8x8xf32> -> vector<2x8x8xf32>
    "tpu.trace_stop"() : () -> ()
    %c1_50 = arith.constant 1 : index
    %c0_51 = arith.constant 0 : index
    %c0_52 = arith.constant 0 : index
    %63 = vector.load %arg6[%c1_50, %c0_51, %c0_52] : memref<4x1x8xf32, #tpu.memory_space<vmem>>, vector<1x1x8xf32>
    %64 = vector.shape_cast %63 : vector<1x1x8xf32> to vector<1x8xf32>
    %65 = vector.shape_cast %64 : vector<1x8xf32> to vector<1x1x8xf32>
    %66 = vector.broadcast %65 : vector<1x1x8xf32> to vector<2x8x8xf32>
    %67 = arith.addf %62, %66 : vector<2x8x8xf32>
    "tpu.trace_start"() <{level = 10 : i32, message = "bld,bmd->blm"}> : () -> ()
    %cst_53 = arith.constant dense<0.000000e+00> : vector<2x8x8xf32>
    %68 = tpu.matmul %51, %59, %cst_53 {dimension_numbers = #tpu.dot_dimension_numbers<[2], [2], [1], [1], [0, 0, 0, 1, 1, 1], [0], [0]>} : vector<2x8x8xf32>, vector<2x8x8xf32>, vector<2x8x8xf32> -> vector<2x8x8xf32>
    "tpu.trace_stop"() : () -> ()
    %cst_54 = arith.constant dense<0xFF800000> : vector<2x8xf32>
    %69 = vector.multi_reduction <maximumf>, %68, %cst_54 [2] : vector<2x8x8xf32> to vector<2x8xf32>
    %70 = vector.shape_cast %69 : vector<2x8xf32> to vector<2x8x1xf32>
    %71 = vector.broadcast %70 : vector<2x8x1xf32> to vector<2x8x8xf32>
    %72 = arith.subf %68, %71 : vector<2x8x8xf32>
    %73 = math.exp %72 : vector<2x8x8xf32>
    %cst_55 = arith.constant dense<0.000000e+00> : vector<2x8xf32>
    %74 = vector.multi_reduction <add>, %73, %cst_55 [2] : vector<2x8x8xf32> to vector<2x8xf32>
    %75 = vector.shape_cast %74 : vector<2x8xf32> to vector<2x8x1xf32>
    %76 = tpu.reciprocal %75 {approx = true} : vector<2x8x1xf32> -> vector<2x8x1xf32>
    %77 = vector.broadcast %76 : vector<2x8x1xf32> to vector<2x8x8xf32>
    %78 = arith.mulf %73, %77 : vector<2x8x8xf32>
    "tpu.trace_start"() <{level = 10 : i32, message = "blm,bmd->bld"}> : () -> ()
    %cst_56 = arith.constant dense<0.000000e+00> : vector<2x8x8xf32>
    %79 = tpu.matmul %78, %67, %cst_56 {dimension_numbers = #tpu.dot_dimension_numbers<[2], [1], [1], [2], [0, 0, 0, 1, 1, 2], [0], [0]>} : vector<2x8x8xf32>, vector<2x8x8xf32>, vector<2x8x8xf32> -> vector<2x8x8xf32>
    "tpu.trace_stop"() : () -> ()
    %c1_57 = arith.constant 1 : index
    %c0_58 = arith.constant 0 : index
    %c0_59 = arith.constant 0 : index
    %80 = vector.load %arg7[%c1_57, %c0_58, %c0_59] : memref<4x8x32xf32, #tpu.memory_space<vmem>>, vector<1x8x32xf32>
    %81 = vector.shape_cast %80 : vector<1x8x32xf32> to vector<8x32xf32>
    "tpu.trace_start"() <{level = 10 : i32, message = "bld,de->ble"}> : () -> ()
    %cst_60 = arith.constant dense<0.000000e+00> : vector<2x8x32xf32>
    %82 = tpu.matmul %79, %81, %cst_60 {dimension_numbers = #tpu.dot_dimension_numbers<[2], [0], [0, 1], [1], [0, 0, 0, 1, 1, 1], [], []>} : vector<2x8x8xf32>, vector<8x32xf32>, vector<2x8x32xf32> -> vector<2x8x32xf32>
    "tpu.trace_stop"() : () -> ()
    %83 = arith.addf %43, %82 : vector<2x8x32xf32>
    %c2 = arith.constant 2 : index
    %c0_61 = arith.constant 0 : index
    %c0_62 = arith.constant 0 : index
    %84 = vector.load %arg1[%c2, %c0_61, %c0_62] : memref<4x32x8xf32, #tpu.memory_space<vmem>>, vector<1x32x8xf32>
    %85 = vector.shape_cast %84 : vector<1x32x8xf32> to vector<32x8xf32>
    "tpu.trace_start"() <{level = 10 : i32, message = "ble,ed->bld"}> : () -> ()
    %cst_63 = arith.constant dense<0.000000e+00> : vector<2x8x8xf32>
    %86 = tpu.matmul %0, %85, %cst_63 {dimension_numbers = #tpu.dot_dimension_numbers<[2], [0], [0, 1], [1], [0, 0, 0, 1, 1, 1], [], []>} : vector<2x8x32xf32>, vector<32x8xf32>, vector<2x8x8xf32> -> vector<2x8x8xf32>
    "tpu.trace_stop"() : () -> ()
    %c2_64 = arith.constant 2 : index
    %c0_65 = arith.constant 0 : index
    %c0_66 = arith.constant 0 : index
    %87 = vector.load %arg2[%c2_64, %c0_65, %c0_66] : memref<4x1x8xf32, #tpu.memory_space<vmem>>, vector<1x1x8xf32>
    %88 = vector.shape_cast %87 : vector<1x1x8xf32> to vector<1x8xf32>
    %89 = vector.shape_cast %88 : vector<1x8xf32> to vector<1x1x8xf32>
    %90 = vector.broadcast %89 : vector<1x1x8xf32> to vector<2x8x8xf32>
    %91 = arith.addf %86, %90 : vector<2x8x8xf32>
    %c2_67 = arith.constant 2 : index
    %c0_68 = arith.constant 0 : index
    %c0_69 = arith.constant 0 : index
    %92 = vector.load %arg3[%c2_67, %c0_68, %c0_69] : memref<4x32x8xf32, #tpu.memory_space<vmem>>, vector<1x32x8xf32>
    %93 = vector.shape_cast %92 : vector<1x32x8xf32> to vector<32x8xf32>
    "tpu.trace_start"() <{level = 10 : i32, message = "ble,ed->bld"}> : () -> ()
    %cst_70 = arith.constant dense<0.000000e+00> : vector<2x8x8xf32>
    %94 = tpu.matmul %0, %93, %cst_70 {dimension_numbers = #tpu.dot_dimension_numbers<[2], [0], [0, 1], [1], [0, 0, 0, 1, 1, 1], [], []>} : vector<2x8x32xf32>, vector<32x8xf32>, vector<2x8x8xf32> -> vector<2x8x8xf32>
    "tpu.trace_stop"() : () -> ()
    %c2_71 = arith.constant 2 : index
    %c0_72 = arith.constant 0 : index
    %c0_73 = arith.constant 0 : index
    %95 = vector.load %arg4[%c2_71, %c0_72, %c0_73] : memref<4x1x8xf32, #tpu.memory_space<vmem>>, vector<1x1x8xf32>
    %96 = vector.shape_cast %95 : vector<1x1x8xf32> to vector<1x8xf32>
    %97 = vector.shape_cast %96 : vector<1x8xf32> to vector<1x1x8xf32>
    %98 = vector.broadcast %97 : vector<1x1x8xf32> to vector<2x8x8xf32>
    %99 = arith.addf %94, %98 : vector<2x8x8xf32>
    %c2_74 = arith.constant 2 : index
    %c0_75 = arith.constant 0 : index
    %c0_76 = arith.constant 0 : index
    %100 = vector.load %arg5[%c2_74, %c0_75, %c0_76] : memref<4x32x8xf32, #tpu.memory_space<vmem>>, vector<1x32x8xf32>
    %101 = vector.shape_cast %100 : vector<1x32x8xf32> to vector<32x8xf32>
    "tpu.trace_start"() <{level = 10 : i32, message = "ble,ed->bld"}> : () -> ()
    %cst_77 = arith.constant dense<0.000000e+00> : vector<2x8x8xf32>
    %102 = tpu.matmul %0, %101, %cst_77 {dimension_numbers = #tpu.dot_dimension_numbers<[2], [0], [0, 1], [1], [0, 0, 0, 1, 1, 1], [], []>} : vector<2x8x32xf32>, vector<32x8xf32>, vector<2x8x8xf32> -> vector<2x8x8xf32>
    "tpu.trace_stop"() : () -> ()
    %c2_78 = arith.constant 2 : index
    %c0_79 = arith.constant 0 : index
    %c0_80 = arith.constant 0 : index
    %103 = vector.load %arg6[%c2_78, %c0_79, %c0_80] : memref<4x1x8xf32, #tpu.memory_space<vmem>>, vector<1x1x8xf32>
    %104 = vector.shape_cast %103 : vector<1x1x8xf32> to vector<1x8xf32>
    %105 = vector.shape_cast %104 : vector<1x8xf32> to vector<1x1x8xf32>
    %106 = vector.broadcast %105 : vector<1x1x8xf32> to vector<2x8x8xf32>
    %107 = arith.addf %102, %106 : vector<2x8x8xf32>
    "tpu.trace_start"() <{level = 10 : i32, message = "bld,bmd->blm"}> : () -> ()
    %cst_81 = arith.constant dense<0.000000e+00> : vector<2x8x8xf32>
    %108 = tpu.matmul %91, %99, %cst_81 {dimension_numbers = #tpu.dot_dimension_numbers<[2], [2], [1], [1], [0, 0, 0, 1, 1, 1], [0], [0]>} : vector<2x8x8xf32>, vector<2x8x8xf32>, vector<2x8x8xf32> -> vector<2x8x8xf32>
    "tpu.trace_stop"() : () -> ()
    %cst_82 = arith.constant dense<0xFF800000> : vector<2x8xf32>
    %109 = vector.multi_reduction <maximumf>, %108, %cst_82 [2] : vector<2x8x8xf32> to vector<2x8xf32>
    %110 = vector.shape_cast %109 : vector<2x8xf32> to vector<2x8x1xf32>
    %111 = vector.broadcast %110 : vector<2x8x1xf32> to vector<2x8x8xf32>
    %112 = arith.subf %108, %111 : vector<2x8x8xf32>
    %113 = math.exp %112 : vector<2x8x8xf32>
    %cst_83 = arith.constant dense<0.000000e+00> : vector<2x8xf32>
    %114 = vector.multi_reduction <add>, %113, %cst_83 [2] : vector<2x8x8xf32> to vector<2x8xf32>
    %115 = vector.shape_cast %114 : vector<2x8xf32> to vector<2x8x1xf32>
    %116 = tpu.reciprocal %115 {approx = true} : vector<2x8x1xf32> -> vector<2x8x1xf32>
    %117 = vector.broadcast %116 : vector<2x8x1xf32> to vector<2x8x8xf32>
    %118 = arith.mulf %113, %117 : vector<2x8x8xf32>
    "tpu.trace_start"() <{level = 10 : i32, message = "blm,bmd->bld"}> : () -> ()
    %cst_84 = arith.constant dense<0.000000e+00> : vector<2x8x8xf32>
    %119 = tpu.matmul %118, %107, %cst_84 {dimension_numbers = #tpu.dot_dimension_numbers<[2], [1], [1], [2], [0, 0, 0, 1, 1, 2], [0], [0]>} : vector<2x8x8xf32>, vector<2x8x8xf32>, vector<2x8x8xf32> -> vector<2x8x8xf32>
    "tpu.trace_stop"() : () -> ()
    %c2_85 = arith.constant 2 : index
    %c0_86 = arith.constant 0 : index
    %c0_87 = arith.constant 0 : index
    %120 = vector.load %arg7[%c2_85, %c0_86, %c0_87] : memref<4x8x32xf32, #tpu.memory_space<vmem>>, vector<1x8x32xf32>
    %121 = vector.shape_cast %120 : vector<1x8x32xf32> to vector<8x32xf32>
    "tpu.trace_start"() <{level = 10 : i32, message = "bld,de->ble"}> : () -> ()
    %cst_88 = arith.constant dense<0.000000e+00> : vector<2x8x32xf32>
    %122 = tpu.matmul %119, %121, %cst_88 {dimension_numbers = #tpu.dot_dimension_numbers<[2], [0], [0, 1], [1], [0, 0, 0, 1, 1, 1], [], []>} : vector<2x8x8xf32>, vector<8x32xf32>, vector<2x8x32xf32> -> vector<2x8x32xf32>
    "tpu.trace_stop"() : () -> ()
    %123 = arith.addf %83, %122 : vector<2x8x32xf32>
    %c3 = arith.constant 3 : index
    %c0_89 = arith.constant 0 : index
    %c0_90 = arith.constant 0 : index
    %124 = vector.load %arg1[%c3, %c0_89, %c0_90] : memref<4x32x8xf32, #tpu.memory_space<vmem>>, vector<1x32x8xf32>
    %125 = vector.shape_cast %124 : vector<1x32x8xf32> to vector<32x8xf32>
    "tpu.trace_start"() <{level = 10 : i32, message = "ble,ed->bld"}> : () -> ()
    %cst_91 = arith.constant dense<0.000000e+00> : vector<2x8x8xf32>
    %126 = tpu.matmul %0, %125, %cst_91 {dimension_numbers = #tpu.dot_dimension_numbers<[2], [0], [0, 1], [1], [0, 0, 0, 1, 1, 1], [], []>} : vector<2x8x32xf32>, vector<32x8xf32>, vector<2x8x8xf32> -> vector<2x8x8xf32>
    "tpu.trace_stop"() : () -> ()
    %c3_92 = arith.constant 3 : index
    %c0_93 = arith.constant 0 : index
    %c0_94 = arith.constant 0 : index
    %127 = vector.load %arg2[%c3_92, %c0_93, %c0_94] : memref<4x1x8xf32, #tpu.memory_space<vmem>>, vector<1x1x8xf32>
    %128 = vector.shape_cast %127 : vector<1x1x8xf32> to vector<1x8xf32>
    %129 = vector.shape_cast %128 : vector<1x8xf32> to vector<1x1x8xf32>
    %130 = vector.broadcast %129 : vector<1x1x8xf32> to vector<2x8x8xf32>
    %131 = arith.addf %126, %130 : vector<2x8x8xf32>
    %c3_95 = arith.constant 3 : index
    %c0_96 = arith.constant 0 : index
    %c0_97 = arith.constant 0 : index
    %132 = vector.load %arg3[%c3_95, %c0_96, %c0_97] : memref<4x32x8xf32, #tpu.memory_space<vmem>>, vector<1x32x8xf32>
    %133 = vector.shape_cast %132 : vector<1x32x8xf32> to vector<32x8xf32>
    "tpu.trace_start"() <{level = 10 : i32, message = "ble,ed->bld"}> : () -> ()
    %cst_98 = arith.constant dense<0.000000e+00> : vector<2x8x8xf32>
    %134 = tpu.matmul %0, %133, %cst_98 {dimension_numbers = #tpu.dot_dimension_numbers<[2], [0], [0, 1], [1], [0, 0, 0, 1, 1, 1], [], []>} : vector<2x8x32xf32>, vector<32x8xf32>, vector<2x8x8xf32> -> vector<2x8x8xf32>
    "tpu.trace_stop"() : () -> ()
    %c3_99 = arith.constant 3 : index
    %c0_100 = arith.constant 0 : index
    %c0_101 = arith.constant 0 : index
    %135 = vector.load %arg4[%c3_99, %c0_100, %c0_101] : memref<4x1x8xf32, #tpu.memory_space<vmem>>, vector<1x1x8xf32>
    %136 = vector.shape_cast %135 : vector<1x1x8xf32> to vector<1x8xf32>
    %137 = vector.shape_cast %136 : vector<1x8xf32> to vector<1x1x8xf32>
    %138 = vector.broadcast %137 : vector<1x1x8xf32> to vector<2x8x8xf32>
    %139 = arith.addf %134, %138 : vector<2x8x8xf32>
    %c3_102 = arith.constant 3 : index
    %c0_103 = arith.constant 0 : index
    %c0_104 = arith.constant 0 : index
    %140 = vector.load %arg5[%c3_102, %c0_103, %c0_104] : memref<4x32x8xf32, #tpu.memory_space<vmem>>, vector<1x32x8xf32>
    %141 = vector.shape_cast %140 : vector<1x32x8xf32> to vector<32x8xf32>
    "tpu.trace_start"() <{level = 10 : i32, message = "ble,ed->bld"}> : () -> ()
    %cst_105 = arith.constant dense<0.000000e+00> : vector<2x8x8xf32>
    %142 = tpu.matmul %0, %141, %cst_105 {dimension_numbers = #tpu.dot_dimension_numbers<[2], [0], [0, 1], [1], [0, 0, 0, 1, 1, 1], [], []>} : vector<2x8x32xf32>, vector<32x8xf32>, vector<2x8x8xf32> -> vector<2x8x8xf32>
    "tpu.trace_stop"() : () -> ()
    %c3_106 = arith.constant 3 : index
    %c0_107 = arith.constant 0 : index
    %c0_108 = arith.constant 0 : index
    %143 = vector.load %arg6[%c3_106, %c0_107, %c0_108] : memref<4x1x8xf32, #tpu.memory_space<vmem>>, vector<1x1x8xf32>
    %144 = vector.shape_cast %143 : vector<1x1x8xf32> to vector<1x8xf32>
    %145 = vector.shape_cast %144 : vector<1x8xf32> to vector<1x1x8xf32>
    %146 = vector.broadcast %145 : vector<1x1x8xf32> to vector<2x8x8xf32>
    %147 = arith.addf %142, %146 : vector<2x8x8xf32>
    "tpu.trace_start"() <{level = 10 : i32, message = "bld,bmd->blm"}> : () -> ()
    %cst_109 = arith.constant dense<0.000000e+00> : vector<2x8x8xf32>
    %148 = tpu.matmul %131, %139, %cst_109 {dimension_numbers = #tpu.dot_dimension_numbers<[2], [2], [1], [1], [0, 0, 0, 1, 1, 1], [0], [0]>} : vector<2x8x8xf32>, vector<2x8x8xf32>, vector<2x8x8xf32> -> vector<2x8x8xf32>
    "tpu.trace_stop"() : () -> ()
    %cst_110 = arith.constant dense<0xFF800000> : vector<2x8xf32>
    %149 = vector.multi_reduction <maximumf>, %148, %cst_110 [2] : vector<2x8x8xf32> to vector<2x8xf32>
    %150 = vector.shape_cast %149 : vector<2x8xf32> to vector<2x8x1xf32>
    %151 = vector.broadcast %150 : vector<2x8x1xf32> to vector<2x8x8xf32>
    %152 = arith.subf %148, %151 : vector<2x8x8xf32>
    %153 = math.exp %152 : vector<2x8x8xf32>
    %cst_111 = arith.constant dense<0.000000e+00> : vector<2x8xf32>
    %154 = vector.multi_reduction <add>, %153, %cst_111 [2] : vector<2x8x8xf32> to vector<2x8xf32>
    %155 = vector.shape_cast %154 : vector<2x8xf32> to vector<2x8x1xf32>
    %156 = tpu.reciprocal %155 {approx = true} : vector<2x8x1xf32> -> vector<2x8x1xf32>
    %157 = vector.broadcast %156 : vector<2x8x1xf32> to vector<2x8x8xf32>
    %158 = arith.mulf %153, %157 : vector<2x8x8xf32>
    "tpu.trace_start"() <{level = 10 : i32, message = "blm,bmd->bld"}> : () -> ()
    %cst_112 = arith.constant dense<0.000000e+00> : vector<2x8x8xf32>
    %159 = tpu.matmul %158, %147, %cst_112 {dimension_numbers = #tpu.dot_dimension_numbers<[2], [1], [1], [2], [0, 0, 0, 1, 1, 2], [0], [0]>} : vector<2x8x8xf32>, vector<2x8x8xf32>, vector<2x8x8xf32> -> vector<2x8x8xf32>
    "tpu.trace_stop"() : () -> ()
    %c3_113 = arith.constant 3 : index
    %c0_114 = arith.constant 0 : index
    %c0_115 = arith.constant 0 : index
    %160 = vector.load %arg7[%c3_113, %c0_114, %c0_115] : memref<4x8x32xf32, #tpu.memory_space<vmem>>, vector<1x8x32xf32>
    %161 = vector.shape_cast %160 : vector<1x8x32xf32> to vector<8x32xf32>
    "tpu.trace_start"() <{level = 10 : i32, message = "bld,de->ble"}> : () -> ()
    %cst_116 = arith.constant dense<0.000000e+00> : vector<2x8x32xf32>
    %162 = tpu.matmul %159, %161, %cst_116 {dimension_numbers = #tpu.dot_dimension_numbers<[2], [0], [0, 1], [1], [0, 0, 0, 1, 1, 1], [], []>} : vector<2x8x8xf32>, vector<8x32xf32>, vector<2x8x32xf32> -> vector<2x8x32xf32>
    "tpu.trace_stop"() : () -> ()
    %163 = arith.addf %123, %162 : vector<2x8x32xf32>
    %164 = arith.addf %0, %163 : vector<2x8x32xf32>
    %c0_117 = arith.constant 0 : index
    %c0_118 = arith.constant 0 : index
    %c0_119 = arith.constant 0 : index
    %165 = vector.load %arg9[%c0_117, %c0_118, %c0_119] : memref<1x1x32xf32, #tpu.memory_space<vmem>>, vector<1x1x32xf32>
    %c0_120 = arith.constant 0 : index
    %c0_121 = arith.constant 0 : index
    %c0_122 = arith.constant 0 : index
    %166 = vector.load %arg10[%c0_120, %c0_121, %c0_122] : memref<1x1x32xf32, #tpu.memory_space<vmem>>, vector<1x1x32xf32>
    %cst_123 = arith.constant dense<0.000000e+00> : vector<2x8xf32>
    %167 = vector.multi_reduction <add>, %164, %cst_123 [2] : vector<2x8x32xf32> to vector<2x8xf32>
    %168 = vector.shape_cast %167 : vector<2x8xf32> to vector<2x8x1xf32>
    %cst_124 = arith.constant 3.200000e+01 : f32
    %169 = vector.broadcast %cst_124 : f32 to vector<2x8x1xf32>
    %170 = arith.divf %168, %169 : vector<2x8x1xf32>
    %171 = vector.broadcast %170 : vector<2x8x1xf32> to vector<2x8x32xf32>
    %172 = arith.subf %164, %171 : vector<2x8x32xf32>
    %173 = arith.mulf %172, %172 : vector<2x8x32xf32>
    %cst_125 = arith.constant dense<0.000000e+00> : vector<2x8xf32>
    %174 = vector.multi_reduction <add>, %173, %cst_125 [2] : vector<2x8x32xf32> to vector<2x8xf32>
    %175 = vector.shape_cast %174 : vector<2x8xf32> to vector<2x8x1xf32>
    %cst_126 = arith.constant 3.200000e+01 : f32
    %176 = vector.broadcast %cst_126 : f32 to vector<2x8x1xf32>
    %177 = arith.divf %175, %176 : vector<2x8x1xf32>
    %178 = vector.broadcast %170 : vector<2x8x1xf32> to vector<2x8x32xf32>
    %179 = arith.subf %164, %178 : vector<2x8x32xf32>
    %cst_127 = arith.constant 9.99999974E-6 : f32
    %180 = vector.broadcast %cst_127 : f32 to vector<2x8x1xf32>
    %181 = arith.addf %177, %180 : vector<2x8x1xf32>
    %182 = math.rsqrt %181 : vector<2x8x1xf32>
    %183 = vector.broadcast %182 : vector<2x8x1xf32> to vector<2x8x32xf32>
    %184 = arith.mulf %179, %183 : vector<2x8x32xf32>
    %185 = vector.broadcast %165 : vector<1x1x32xf32> to vector<2x8x32xf32>
    %186 = arith.mulf %184, %185 : vector<2x8x32xf32>
    %187 = vector.broadcast %166 : vector<1x1x32xf32> to vector<2x8x32xf32>
    %188 = arith.addf %186, %187 : vector<2x8x32xf32>
    %c0_128 = arith.constant 0 : index
    %c0_129 = arith.constant 0 : index
    %189 = vector.load %arg11[%c0_128, %c0_129] : memref<32x64xf32, #tpu.memory_space<vmem>>, vector<32x64xf32>
    "tpu.trace_start"() <{level = 10 : i32, message = "ble,ef->blf"}> : () -> ()
    %cst_130 = arith.constant dense<0.000000e+00> : vector<2x8x64xf32>
    %190 = tpu.matmul %188, %189, %cst_130 {dimension_numbers = #tpu.dot_dimension_numbers<[2], [0], [0, 1], [1], [0, 0, 0, 1, 1, 1], [], []>} : vector<2x8x32xf32>, vector<32x64xf32>, vector<2x8x64xf32> -> vector<2x8x64xf32>
    "tpu.trace_stop"() : () -> ()
    %c0_131 = arith.constant 0 : index
    %c0_132 = arith.constant 0 : index
    %c0_133 = arith.constant 0 : index
    %191 = vector.load %arg12[%c0_131, %c0_132, %c0_133] : memref<1x1x64xf32, #tpu.memory_space<vmem>>, vector<1x1x64xf32>
    %192 = vector.broadcast %191 : vector<1x1x64xf32> to vector<2x8x64xf32>
    %193 = arith.addf %190, %192 : vector<2x8x64xf32>
    %cst_134 = arith.constant 0.000000e+00 : f32
    %194 = vector.broadcast %cst_134 : f32 to vector<2x8x64xf32>
    %195 = arith.maximumf %193, %194 : vector<2x8x64xf32>
    %c0_135 = arith.constant 0 : index
    %c0_136 = arith.constant 0 : index
    %196 = vector.load %arg13[%c0_135, %c0_136] : memref<64x32xf32, #tpu.memory_space<vmem>>, vector<64x32xf32>
    "tpu.trace_start"() <{level = 10 : i32, message = "blf,fe->ble"}> : () -> ()
    %cst_137 = arith.constant dense<0.000000e+00> : vector<2x8x32xf32>
    %197 = tpu.matmul %195, %196, %cst_137 {dimension_numbers = #tpu.dot_dimension_numbers<[2], [0], [0, 1], [1], [0, 0, 0, 1, 1, 1], [], []>} : vector<2x8x64xf32>, vector<64x32xf32>, vector<2x8x32xf32> -> vector<2x8x32xf32>
    "tpu.trace_stop"() : () -> ()
    %c0_138 = arith.constant 0 : index
    %c0_139 = arith.constant 0 : index
    %c0_140 = arith.constant 0 : index
    %198 = vector.load %arg14[%c0_138, %c0_139, %c0_140] : memref<1x1x32xf32, #tpu.memory_space<vmem>>, vector<1x1x32xf32>
    %199 = vector.broadcast %198 : vector<1x1x32xf32> to vector<2x8x32xf32>
    %200 = arith.addf %197, %199 : vector<2x8x32xf32>
    %201 = arith.addf %188, %200 : vector<2x8x32xf32>
    %c0_141 = arith.constant 0 : index
    %c0_142 = arith.constant 0 : index
    %c0_143 = arith.constant 0 : index
    %202 = vector.load %arg15[%c0_141, %c0_142, %c0_143] : memref<1x1x32xf32, #tpu.memory_space<vmem>>, vector<1x1x32xf32>
    %c0_144 = arith.constant 0 : index
    %c0_145 = arith.constant 0 : index
    %c0_146 = arith.constant 0 : index
    %203 = vector.load %arg16[%c0_144, %c0_145, %c0_146] : memref<1x1x32xf32, #tpu.memory_space<vmem>>, vector<1x1x32xf32>
    %cst_147 = arith.constant dense<0.000000e+00> : vector<2x8xf32>
    %204 = vector.multi_reduction <add>, %201, %cst_147 [2] : vector<2x8x32xf32> to vector<2x8xf32>
    %205 = vector.shape_cast %204 : vector<2x8xf32> to vector<2x8x1xf32>
    %cst_148 = arith.constant 3.200000e+01 : f32
    %206 = vector.broadcast %cst_148 : f32 to vector<2x8x1xf32>
    %207 = arith.divf %205, %206 : vector<2x8x1xf32>
    %208 = vector.broadcast %207 : vector<2x8x1xf32> to vector<2x8x32xf32>
    %209 = arith.subf %201, %208 : vector<2x8x32xf32>
    %210 = arith.mulf %209, %209 : vector<2x8x32xf32>
    %cst_149 = arith.constant dense<0.000000e+00> : vector<2x8xf32>
    %211 = vector.multi_reduction <add>, %210, %cst_149 [2] : vector<2x8x32xf32> to vector<2x8xf32>
    %212 = vector.shape_cast %211 : vector<2x8xf32> to vector<2x8x1xf32>
    %cst_150 = arith.constant 3.200000e+01 : f32
    %213 = vector.broadcast %cst_150 : f32 to vector<2x8x1xf32>
    %214 = arith.divf %212, %213 : vector<2x8x1xf32>
    %215 = vector.broadcast %207 : vector<2x8x1xf32> to vector<2x8x32xf32>
    %216 = arith.subf %201, %215 : vector<2x8x32xf32>
    %cst_151 = arith.constant 9.99999974E-6 : f32
    %217 = vector.broadcast %cst_151 : f32 to vector<2x8x1xf32>
    %218 = arith.addf %214, %217 : vector<2x8x1xf32>
    %219 = math.rsqrt %218 : vector<2x8x1xf32>
    %220 = vector.broadcast %219 : vector<2x8x1xf32> to vector<2x8x32xf32>
    %221 = arith.mulf %216, %220 : vector<2x8x32xf32>
    %222 = vector.broadcast %202 : vector<1x1x32xf32> to vector<2x8x32xf32>
    %223 = arith.mulf %221, %222 : vector<2x8x32xf32>
    %224 = vector.broadcast %203 : vector<1x1x32xf32> to vector<2x8x32xf32>
    %225 = arith.addf %223, %224 : vector<2x8x32xf32>
    %c0_152 = arith.constant 0 : index
    %c0_153 = arith.constant 0 : index
    %c0_154 = arith.constant 0 : index
    %226 = vector.load %arg24[%c0_152, %c0_153, %c0_154] : memref<1x1x32xf32, #tpu.memory_space<vmem>>, vector<1x1x32xf32>
    %227 = vector.shape_cast %226 : vector<1x1x32xf32> to vector<1x1x32xf32>
    %228 = vector.broadcast %227 : vector<1x1x32xf32> to vector<2x8x32xf32>
    %c0_155 = arith.constant 0 : index
    %c0_156 = arith.constant 0 : index
    %c0_157 = arith.constant 0 : index
    %229 = vector.load %arg17[%c0_155, %c0_156, %c0_157] : memref<4x32x8xf32, #tpu.memory_space<vmem>>, vector<1x32x8xf32>
    %230 = vector.shape_cast %229 : vector<1x32x8xf32> to vector<32x8xf32>
    "tpu.trace_start"() <{level = 10 : i32, message = "ble,ed->bld"}> : () -> ()
    %cst_158 = arith.constant dense<0.000000e+00> : vector<2x8x8xf32>
    %231 = tpu.matmul %225, %230, %cst_158 {dimension_numbers = #tpu.dot_dimension_numbers<[2], [0], [0, 1], [1], [0, 0, 0, 1, 1, 1], [], []>} : vector<2x8x32xf32>, vector<32x8xf32>, vector<2x8x8xf32> -> vector<2x8x8xf32>
    "tpu.trace_stop"() : () -> ()
    %c0_159 = arith.constant 0 : index
    %c0_160 = arith.constant 0 : index
    %c0_161 = arith.constant 0 : index
    %232 = vector.load %arg18[%c0_159, %c0_160, %c0_161] : memref<4x1x8xf32, #tpu.memory_space<vmem>>, vector<1x1x8xf32>
    %233 = vector.shape_cast %232 : vector<1x1x8xf32> to vector<1x8xf32>
    %234 = vector.shape_cast %233 : vector<1x8xf32> to vector<1x1x8xf32>
    %235 = vector.broadcast %234 : vector<1x1x8xf32> to vector<2x8x8xf32>
    %236 = arith.addf %231, %235 : vector<2x8x8xf32>
    %c0_162 = arith.constant 0 : index
    %c0_163 = arith.constant 0 : index
    %c0_164 = arith.constant 0 : index
    %237 = vector.load %arg19[%c0_162, %c0_163, %c0_164] : memref<4x32x8xf32, #tpu.memory_space<vmem>>, vector<1x32x8xf32>
    %238 = vector.shape_cast %237 : vector<1x32x8xf32> to vector<32x8xf32>
    "tpu.trace_start"() <{level = 10 : i32, message = "ble,ed->bld"}> : () -> ()
    %cst_165 = arith.constant dense<0.000000e+00> : vector<2x8x8xf32>
    %239 = tpu.matmul %225, %238, %cst_165 {dimension_numbers = #tpu.dot_dimension_numbers<[2], [0], [0, 1], [1], [0, 0, 0, 1, 1, 1], [], []>} : vector<2x8x32xf32>, vector<32x8xf32>, vector<2x8x8xf32> -> vector<2x8x8xf32>
    "tpu.trace_stop"() : () -> ()
    %c0_166 = arith.constant 0 : index
    %c0_167 = arith.constant 0 : index
    %c0_168 = arith.constant 0 : index
    %240 = vector.load %arg20[%c0_166, %c0_167, %c0_168] : memref<4x1x8xf32, #tpu.memory_space<vmem>>, vector<1x1x8xf32>
    %241 = vector.shape_cast %240 : vector<1x1x8xf32> to vector<1x8xf32>
    %242 = vector.shape_cast %241 : vector<1x8xf32> to vector<1x1x8xf32>
    %243 = vector.broadcast %242 : vector<1x1x8xf32> to vector<2x8x8xf32>
    %244 = arith.addf %239, %243 : vector<2x8x8xf32>
    %c0_169 = arith.constant 0 : index
    %c0_170 = arith.constant 0 : index
    %c0_171 = arith.constant 0 : index
    %245 = vector.load %arg21[%c0_169, %c0_170, %c0_171] : memref<4x32x8xf32, #tpu.memory_space<vmem>>, vector<1x32x8xf32>
    %246 = vector.shape_cast %245 : vector<1x32x8xf32> to vector<32x8xf32>
    "tpu.trace_start"() <{level = 10 : i32, message = "ble,ed->bld"}> : () -> ()
    %cst_172 = arith.constant dense<0.000000e+00> : vector<2x8x8xf32>
    %247 = tpu.matmul %225, %246, %cst_172 {dimension_numbers = #tpu.dot_dimension_numbers<[2], [0], [0, 1], [1], [0, 0, 0, 1, 1, 1], [], []>} : vector<2x8x32xf32>, vector<32x8xf32>, vector<2x8x8xf32> -> vector<2x8x8xf32>
    "tpu.trace_stop"() : () -> ()
    %c0_173 = arith.constant 0 : index
    %c0_174 = arith.constant 0 : index
    %c0_175 = arith.constant 0 : index
    %248 = vector.load %arg22[%c0_173, %c0_174, %c0_175] : memref<4x1x8xf32, #tpu.memory_space<vmem>>, vector<1x1x8xf32>
    %249 = vector.shape_cast %248 : vector<1x1x8xf32> to vector<1x8xf32>
    %250 = vector.shape_cast %249 : vector<1x8xf32> to vector<1x1x8xf32>
    %251 = vector.broadcast %250 : vector<1x1x8xf32> to vector<2x8x8xf32>
    %252 = arith.addf %247, %251 : vector<2x8x8xf32>
    "tpu.trace_start"() <{level = 10 : i32, message = "bld,bmd->blm"}> : () -> ()
    %cst_176 = arith.constant dense<0.000000e+00> : vector<2x8x8xf32>
    %253 = tpu.matmul %236, %244, %cst_176 {dimension_numbers = #tpu.dot_dimension_numbers<[2], [2], [1], [1], [0, 0, 0, 1, 1, 1], [0], [0]>} : vector<2x8x8xf32>, vector<2x8x8xf32>, vector<2x8x8xf32> -> vector<2x8x8xf32>
    "tpu.trace_stop"() : () -> ()
    %cst_177 = arith.constant dense<0xFF800000> : vector<2x8xf32>
    %254 = vector.multi_reduction <maximumf>, %253, %cst_177 [2] : vector<2x8x8xf32> to vector<2x8xf32>
    %255 = vector.shape_cast %254 : vector<2x8xf32> to vector<2x8x1xf32>
    %256 = vector.broadcast %255 : vector<2x8x1xf32> to vector<2x8x8xf32>
    %257 = arith.subf %253, %256 : vector<2x8x8xf32>
    %258 = math.exp %257 : vector<2x8x8xf32>
    %cst_178 = arith.constant dense<0.000000e+00> : vector<2x8xf32>
    %259 = vector.multi_reduction <add>, %258, %cst_178 [2] : vector<2x8x8xf32> to vector<2x8xf32>
    %260 = vector.shape_cast %259 : vector<2x8xf32> to vector<2x8x1xf32>
    %261 = tpu.reciprocal %260 {approx = true} : vector<2x8x1xf32> -> vector<2x8x1xf32>
    %262 = vector.broadcast %261 : vector<2x8x1xf32> to vector<2x8x8xf32>
    %263 = arith.mulf %258, %262 : vector<2x8x8xf32>
    "tpu.trace_start"() <{level = 10 : i32, message = "blm,bmd->bld"}> : () -> ()
    %cst_179 = arith.constant dense<0.000000e+00> : vector<2x8x8xf32>
    %264 = tpu.matmul %263, %252, %cst_179 {dimension_numbers = #tpu.dot_dimension_numbers<[2], [1], [1], [2], [0, 0, 0, 1, 1, 2], [0], [0]>} : vector<2x8x8xf32>, vector<2x8x8xf32>, vector<2x8x8xf32> -> vector<2x8x8xf32>
    "tpu.trace_stop"() : () -> ()
    %c0_180 = arith.constant 0 : index
    %c0_181 = arith.constant 0 : index
    %c0_182 = arith.constant 0 : index
    %265 = vector.load %arg23[%c0_180, %c0_181, %c0_182] : memref<4x8x32xf32, #tpu.memory_space<vmem>>, vector<1x8x32xf32>
    %266 = vector.shape_cast %265 : vector<1x8x32xf32> to vector<8x32xf32>
    "tpu.trace_start"() <{level = 10 : i32, message = "bld,de->ble"}> : () -> ()
    %cst_183 = arith.constant dense<0.000000e+00> : vector<2x8x32xf32>
    %267 = tpu.matmul %264, %266, %cst_183 {dimension_numbers = #tpu.dot_dimension_numbers<[2], [0], [0, 1], [1], [0, 0, 0, 1, 1, 1], [], []>} : vector<2x8x8xf32>, vector<8x32xf32>, vector<2x8x32xf32> -> vector<2x8x32xf32>
    "tpu.trace_stop"() : () -> ()
    %268 = arith.addf %228, %267 : vector<2x8x32xf32>
    %c1_184 = arith.constant 1 : index
    %c0_185 = arith.constant 0 : index
    %c0_186 = arith.constant 0 : index
    %269 = vector.load %arg17[%c1_184, %c0_185, %c0_186] : memref<4x32x8xf32, #tpu.memory_space<vmem>>, vector<1x32x8xf32>
    %270 = vector.shape_cast %269 : vector<1x32x8xf32> to vector<32x8xf32>
    "tpu.trace_start"() <{level = 10 : i32, message = "ble,ed->bld"}> : () -> ()
    %cst_187 = arith.constant dense<0.000000e+00> : vector<2x8x8xf32>
    %271 = tpu.matmul %225, %270, %cst_187 {dimension_numbers = #tpu.dot_dimension_numbers<[2], [0], [0, 1], [1], [0, 0, 0, 1, 1, 1], [], []>} : vector<2x8x32xf32>, vector<32x8xf32>, vector<2x8x8xf32> -> vector<2x8x8xf32>
    "tpu.trace_stop"() : () -> ()
    %c1_188 = arith.constant 1 : index
    %c0_189 = arith.constant 0 : index
    %c0_190 = arith.constant 0 : index
    %272 = vector.load %arg18[%c1_188, %c0_189, %c0_190] : memref<4x1x8xf32, #tpu.memory_space<vmem>>, vector<1x1x8xf32>
    %273 = vector.shape_cast %272 : vector<1x1x8xf32> to vector<1x8xf32>
    %274 = vector.shape_cast %273 : vector<1x8xf32> to vector<1x1x8xf32>
    %275 = vector.broadcast %274 : vector<1x1x8xf32> to vector<2x8x8xf32>
    %276 = arith.addf %271, %275 : vector<2x8x8xf32>
    %c1_191 = arith.constant 1 : index
    %c0_192 = arith.constant 0 : index
    %c0_193 = arith.constant 0 : index
    %277 = vector.load %arg19[%c1_191, %c0_192, %c0_193] : memref<4x32x8xf32, #tpu.memory_space<vmem>>, vector<1x32x8xf32>
    %278 = vector.shape_cast %277 : vector<1x32x8xf32> to vector<32x8xf32>
    "tpu.trace_start"() <{level = 10 : i32, message = "ble,ed->bld"}> : () -> ()
    %cst_194 = arith.constant dense<0.000000e+00> : vector<2x8x8xf32>
    %279 = tpu.matmul %225, %278, %cst_194 {dimension_numbers = #tpu.dot_dimension_numbers<[2], [0], [0, 1], [1], [0, 0, 0, 1, 1, 1], [], []>} : vector<2x8x32xf32>, vector<32x8xf32>, vector<2x8x8xf32> -> vector<2x8x8xf32>
    "tpu.trace_stop"() : () -> ()
    %c1_195 = arith.constant 1 : index
    %c0_196 = arith.constant 0 : index
    %c0_197 = arith.constant 0 : index
    %280 = vector.load %arg20[%c1_195, %c0_196, %c0_197] : memref<4x1x8xf32, #tpu.memory_space<vmem>>, vector<1x1x8xf32>
    %281 = vector.shape_cast %280 : vector<1x1x8xf32> to vector<1x8xf32>
    %282 = vector.shape_cast %281 : vector<1x8xf32> to vector<1x1x8xf32>
    %283 = vector.broadcast %282 : vector<1x1x8xf32> to vector<2x8x8xf32>
    %284 = arith.addf %279, %283 : vector<2x8x8xf32>
    %c1_198 = arith.constant 1 : index
    %c0_199 = arith.constant 0 : index
    %c0_200 = arith.constant 0 : index
    %285 = vector.load %arg21[%c1_198, %c0_199, %c0_200] : memref<4x32x8xf32, #tpu.memory_space<vmem>>, vector<1x32x8xf32>
    %286 = vector.shape_cast %285 : vector<1x32x8xf32> to vector<32x8xf32>
    "tpu.trace_start"() <{level = 10 : i32, message = "ble,ed->bld"}> : () -> ()
    %cst_201 = arith.constant dense<0.000000e+00> : vector<2x8x8xf32>
    %287 = tpu.matmul %225, %286, %cst_201 {dimension_numbers = #tpu.dot_dimension_numbers<[2], [0], [0, 1], [1], [0, 0, 0, 1, 1, 1], [], []>} : vector<2x8x32xf32>, vector<32x8xf32>, vector<2x8x8xf32> -> vector<2x8x8xf32>
    "tpu.trace_stop"() : () -> ()
    %c1_202 = arith.constant 1 : index
    %c0_203 = arith.constant 0 : index
    %c0_204 = arith.constant 0 : index
    %288 = vector.load %arg22[%c1_202, %c0_203, %c0_204] : memref<4x1x8xf32, #tpu.memory_space<vmem>>, vector<1x1x8xf32>
    %289 = vector.shape_cast %288 : vector<1x1x8xf32> to vector<1x8xf32>
    %290 = vector.shape_cast %289 : vector<1x8xf32> to vector<1x1x8xf32>
    %291 = vector.broadcast %290 : vector<1x1x8xf32> to vector<2x8x8xf32>
    %292 = arith.addf %287, %291 : vector<2x8x8xf32>
    "tpu.trace_start"() <{level = 10 : i32, message = "bld,bmd->blm"}> : () -> ()
    %cst_205 = arith.constant dense<0.000000e+00> : vector<2x8x8xf32>
    %293 = tpu.matmul %276, %284, %cst_205 {dimension_numbers = #tpu.dot_dimension_numbers<[2], [2], [1], [1], [0, 0, 0, 1, 1, 1], [0], [0]>} : vector<2x8x8xf32>, vector<2x8x8xf32>, vector<2x8x8xf32> -> vector<2x8x8xf32>
    "tpu.trace_stop"() : () -> ()
    %cst_206 = arith.constant dense<0xFF800000> : vector<2x8xf32>
    %294 = vector.multi_reduction <maximumf>, %293, %cst_206 [2] : vector<2x8x8xf32> to vector<2x8xf32>
    %295 = vector.shape_cast %294 : vector<2x8xf32> to vector<2x8x1xf32>
    %296 = vector.broadcast %295 : vector<2x8x1xf32> to vector<2x8x8xf32>
    %297 = arith.subf %293, %296 : vector<2x8x8xf32>
    %298 = math.exp %297 : vector<2x8x8xf32>
    %cst_207 = arith.constant dense<0.000000e+00> : vector<2x8xf32>
    %299 = vector.multi_reduction <add>, %298, %cst_207 [2] : vector<2x8x8xf32> to vector<2x8xf32>
    %300 = vector.shape_cast %299 : vector<2x8xf32> to vector<2x8x1xf32>
    %301 = tpu.reciprocal %300 {approx = true} : vector<2x8x1xf32> -> vector<2x8x1xf32>
    %302 = vector.broadcast %301 : vector<2x8x1xf32> to vector<2x8x8xf32>
    %303 = arith.mulf %298, %302 : vector<2x8x8xf32>
    "tpu.trace_start"() <{level = 10 : i32, message = "blm,bmd->bld"}> : () -> ()
    %cst_208 = arith.constant dense<0.000000e+00> : vector<2x8x8xf32>
    %304 = tpu.matmul %303, %292, %cst_208 {dimension_numbers = #tpu.dot_dimension_numbers<[2], [1], [1], [2], [0, 0, 0, 1, 1, 2], [0], [0]>} : vector<2x8x8xf32>, vector<2x8x8xf32>, vector<2x8x8xf32> -> vector<2x8x8xf32>
    "tpu.trace_stop"() : () -> ()
    %c1_209 = arith.constant 1 : index
    %c0_210 = arith.constant 0 : index
    %c0_211 = arith.constant 0 : index
    %305 = vector.load %arg23[%c1_209, %c0_210, %c0_211] : memref<4x8x32xf32, #tpu.memory_space<vmem>>, vector<1x8x32xf32>
    %306 = vector.shape_cast %305 : vector<1x8x32xf32> to vector<8x32xf32>
    "tpu.trace_start"() <{level = 10 : i32, message = "bld,de->ble"}> : () -> ()
    %cst_212 = arith.constant dense<0.000000e+00> : vector<2x8x32xf32>
    %307 = tpu.matmul %304, %306, %cst_212 {dimension_numbers = #tpu.dot_dimension_numbers<[2], [0], [0, 1], [1], [0, 0, 0, 1, 1, 1], [], []>} : vector<2x8x8xf32>, vector<8x32xf32>, vector<2x8x32xf32> -> vector<2x8x32xf32>
    "tpu.trace_stop"() : () -> ()
    %308 = arith.addf %268, %307 : vector<2x8x32xf32>
    %c2_213 = arith.constant 2 : index
    %c0_214 = arith.constant 0 : index
    %c0_215 = arith.constant 0 : index
    %309 = vector.load %arg17[%c2_213, %c0_214, %c0_215] : memref<4x32x8xf32, #tpu.memory_space<vmem>>, vector<1x32x8xf32>
    %310 = vector.shape_cast %309 : vector<1x32x8xf32> to vector<32x8xf32>
    "tpu.trace_start"() <{level = 10 : i32, message = "ble,ed->bld"}> : () -> ()
    %cst_216 = arith.constant dense<0.000000e+00> : vector<2x8x8xf32>
    %311 = tpu.matmul %225, %310, %cst_216 {dimension_numbers = #tpu.dot_dimension_numbers<[2], [0], [0, 1], [1], [0, 0, 0, 1, 1, 1], [], []>} : vector<2x8x32xf32>, vector<32x8xf32>, vector<2x8x8xf32> -> vector<2x8x8xf32>
    "tpu.trace_stop"() : () -> ()
    %c2_217 = arith.constant 2 : index
    %c0_218 = arith.constant 0 : index
    %c0_219 = arith.constant 0 : index
    %312 = vector.load %arg18[%c2_217, %c0_218, %c0_219] : memref<4x1x8xf32, #tpu.memory_space<vmem>>, vector<1x1x8xf32>
    %313 = vector.shape_cast %312 : vector<1x1x8xf32> to vector<1x8xf32>
    %314 = vector.shape_cast %313 : vector<1x8xf32> to vector<1x1x8xf32>
    %315 = vector.broadcast %314 : vector<1x1x8xf32> to vector<2x8x8xf32>
    %316 = arith.addf %311, %315 : vector<2x8x8xf32>
    %c2_220 = arith.constant 2 : index
    %c0_221 = arith.constant 0 : index
    %c0_222 = arith.constant 0 : index
    %317 = vector.load %arg19[%c2_220, %c0_221, %c0_222] : memref<4x32x8xf32, #tpu.memory_space<vmem>>, vector<1x32x8xf32>
    %318 = vector.shape_cast %317 : vector<1x32x8xf32> to vector<32x8xf32>
    "tpu.trace_start"() <{level = 10 : i32, message = "ble,ed->bld"}> : () -> ()
    %cst_223 = arith.constant dense<0.000000e+00> : vector<2x8x8xf32>
    %319 = tpu.matmul %225, %318, %cst_223 {dimension_numbers = #tpu.dot_dimension_numbers<[2], [0], [0, 1], [1], [0, 0, 0, 1, 1, 1], [], []>} : vector<2x8x32xf32>, vector<32x8xf32>, vector<2x8x8xf32> -> vector<2x8x8xf32>
    "tpu.trace_stop"() : () -> ()
    %c2_224 = arith.constant 2 : index
    %c0_225 = arith.constant 0 : index
    %c0_226 = arith.constant 0 : index
    %320 = vector.load %arg20[%c2_224, %c0_225, %c0_226] : memref<4x1x8xf32, #tpu.memory_space<vmem>>, vector<1x1x8xf32>
    %321 = vector.shape_cast %320 : vector<1x1x8xf32> to vector<1x8xf32>
    %322 = vector.shape_cast %321 : vector<1x8xf32> to vector<1x1x8xf32>
    %323 = vector.broadcast %322 : vector<1x1x8xf32> to vector<2x8x8xf32>
    %324 = arith.addf %319, %323 : vector<2x8x8xf32>
    %c2_227 = arith.constant 2 : index
    %c0_228 = arith.constant 0 : index
    %c0_229 = arith.constant 0 : index
    %325 = vector.load %arg21[%c2_227, %c0_228, %c0_229] : memref<4x32x8xf32, #tpu.memory_space<vmem>>, vector<1x32x8xf32>
    %326 = vector.shape_cast %325 : vector<1x32x8xf32> to vector<32x8xf32>
    "tpu.trace_start"() <{level = 10 : i32, message = "ble,ed->bld"}> : () -> ()
    %cst_230 = arith.constant dense<0.000000e+00> : vector<2x8x8xf32>
    %327 = tpu.matmul %225, %326, %cst_230 {dimension_numbers = #tpu.dot_dimension_numbers<[2], [0], [0, 1], [1], [0, 0, 0, 1, 1, 1], [], []>} : vector<2x8x32xf32>, vector<32x8xf32>, vector<2x8x8xf32> -> vector<2x8x8xf32>
    "tpu.trace_stop"() : () -> ()
    %c2_231 = arith.constant 2 : index
    %c0_232 = arith.constant 0 : index
    %c0_233 = arith.constant 0 : index
    %328 = vector.load %arg22[%c2_231, %c0_232, %c0_233] : memref<4x1x8xf32, #tpu.memory_space<vmem>>, vector<1x1x8xf32>
    %329 = vector.shape_cast %328 : vector<1x1x8xf32> to vector<1x8xf32>
    %330 = vector.shape_cast %329 : vector<1x8xf32> to vector<1x1x8xf32>
    %331 = vector.broadcast %330 : vector<1x1x8xf32> to vector<2x8x8xf32>
    %332 = arith.addf %327, %331 : vector<2x8x8xf32>
    "tpu.trace_start"() <{level = 10 : i32, message = "bld,bmd->blm"}> : () -> ()
    %cst_234 = arith.constant dense<0.000000e+00> : vector<2x8x8xf32>
    %333 = tpu.matmul %316, %324, %cst_234 {dimension_numbers = #tpu.dot_dimension_numbers<[2], [2], [1], [1], [0, 0, 0, 1, 1, 1], [0], [0]>} : vector<2x8x8xf32>, vector<2x8x8xf32>, vector<2x8x8xf32> -> vector<2x8x8xf32>
    "tpu.trace_stop"() : () -> ()
    %cst_235 = arith.constant dense<0xFF800000> : vector<2x8xf32>
    %334 = vector.multi_reduction <maximumf>, %333, %cst_235 [2] : vector<2x8x8xf32> to vector<2x8xf32>
    %335 = vector.shape_cast %334 : vector<2x8xf32> to vector<2x8x1xf32>
    %336 = vector.broadcast %335 : vector<2x8x1xf32> to vector<2x8x8xf32>
    %337 = arith.subf %333, %336 : vector<2x8x8xf32>
    %338 = math.exp %337 : vector<2x8x8xf32>
    %cst_236 = arith.constant dense<0.000000e+00> : vector<2x8xf32>
    %339 = vector.multi_reduction <add>, %338, %cst_236 [2] : vector<2x8x8xf32> to vector<2x8xf32>
    %340 = vector.shape_cast %339 : vector<2x8xf32> to vector<2x8x1xf32>
    %341 = tpu.reciprocal %340 {approx = true} : vector<2x8x1xf32> -> vector<2x8x1xf32>
    %342 = vector.broadcast %341 : vector<2x8x1xf32> to vector<2x8x8xf32>
    %343 = arith.mulf %338, %342 : vector<2x8x8xf32>
    "tpu.trace_start"() <{level = 10 : i32, message = "blm,bmd->bld"}> : () -> ()
    %cst_237 = arith.constant dense<0.000000e+00> : vector<2x8x8xf32>
    %344 = tpu.matmul %343, %332, %cst_237 {dimension_numbers = #tpu.dot_dimension_numbers<[2], [1], [1], [2], [0, 0, 0, 1, 1, 2], [0], [0]>} : vector<2x8x8xf32>, vector<2x8x8xf32>, vector<2x8x8xf32> -> vector<2x8x8xf32>
    "tpu.trace_stop"() : () -> ()
    %c2_238 = arith.constant 2 : index
    %c0_239 = arith.constant 0 : index
    %c0_240 = arith.constant 0 : index
    %345 = vector.load %arg23[%c2_238, %c0_239, %c0_240] : memref<4x8x32xf32, #tpu.memory_space<vmem>>, vector<1x8x32xf32>
    %346 = vector.shape_cast %345 : vector<1x8x32xf32> to vector<8x32xf32>
    "tpu.trace_start"() <{level = 10 : i32, message = "bld,de->ble"}> : () -> ()
    %cst_241 = arith.constant dense<0.000000e+00> : vector<2x8x32xf32>
    %347 = tpu.matmul %344, %346, %cst_241 {dimension_numbers = #tpu.dot_dimension_numbers<[2], [0], [0, 1], [1], [0, 0, 0, 1, 1, 1], [], []>} : vector<2x8x8xf32>, vector<8x32xf32>, vector<2x8x32xf32> -> vector<2x8x32xf32>
    "tpu.trace_stop"() : () -> ()
    %348 = arith.addf %308, %347 : vector<2x8x32xf32>
    %c3_242 = arith.constant 3 : index
    %c0_243 = arith.constant 0 : index
    %c0_244 = arith.constant 0 : index
    %349 = vector.load %arg17[%c3_242, %c0_243, %c0_244] : memref<4x32x8xf32, #tpu.memory_space<vmem>>, vector<1x32x8xf32>
    %350 = vector.shape_cast %349 : vector<1x32x8xf32> to vector<32x8xf32>
    "tpu.trace_start"() <{level = 10 : i32, message = "ble,ed->bld"}> : () -> ()
    %cst_245 = arith.constant dense<0.000000e+00> : vector<2x8x8xf32>
    %351 = tpu.matmul %225, %350, %cst_245 {dimension_numbers = #tpu.dot_dimension_numbers<[2], [0], [0, 1], [1], [0, 0, 0, 1, 1, 1], [], []>} : vector<2x8x32xf32>, vector<32x8xf32>, vector<2x8x8xf32> -> vector<2x8x8xf32>
    "tpu.trace_stop"() : () -> ()
    %c3_246 = arith.constant 3 : index
    %c0_247 = arith.constant 0 : index
    %c0_248 = arith.constant 0 : index
    %352 = vector.load %arg18[%c3_246, %c0_247, %c0_248] : memref<4x1x8xf32, #tpu.memory_space<vmem>>, vector<1x1x8xf32>
    %353 = vector.shape_cast %352 : vector<1x1x8xf32> to vector<1x8xf32>
    %354 = vector.shape_cast %353 : vector<1x8xf32> to vector<1x1x8xf32>
    %355 = vector.broadcast %354 : vector<1x1x8xf32> to vector<2x8x8xf32>
    %356 = arith.addf %351, %355 : vector<2x8x8xf32>
    %c3_249 = arith.constant 3 : index
    %c0_250 = arith.constant 0 : index
    %c0_251 = arith.constant 0 : index
    %357 = vector.load %arg19[%c3_249, %c0_250, %c0_251] : memref<4x32x8xf32, #tpu.memory_space<vmem>>, vector<1x32x8xf32>
    %358 = vector.shape_cast %357 : vector<1x32x8xf32> to vector<32x8xf32>
    "tpu.trace_start"() <{level = 10 : i32, message = "ble,ed->bld"}> : () -> ()
    %cst_252 = arith.constant dense<0.000000e+00> : vector<2x8x8xf32>
    %359 = tpu.matmul %225, %358, %cst_252 {dimension_numbers = #tpu.dot_dimension_numbers<[2], [0], [0, 1], [1], [0, 0, 0, 1, 1, 1], [], []>} : vector<2x8x32xf32>, vector<32x8xf32>, vector<2x8x8xf32> -> vector<2x8x8xf32>
    "tpu.trace_stop"() : () -> ()
    %c3_253 = arith.constant 3 : index
    %c0_254 = arith.constant 0 : index
    %c0_255 = arith.constant 0 : index
    %360 = vector.load %arg20[%c3_253, %c0_254, %c0_255] : memref<4x1x8xf32, #tpu.memory_space<vmem>>, vector<1x1x8xf32>
    %361 = vector.shape_cast %360 : vector<1x1x8xf32> to vector<1x8xf32>
    %362 = vector.shape_cast %361 : vector<1x8xf32> to vector<1x1x8xf32>
    %363 = vector.broadcast %362 : vector<1x1x8xf32> to vector<2x8x8xf32>
    %364 = arith.addf %359, %363 : vector<2x8x8xf32>
    %c3_256 = arith.constant 3 : index
    %c0_257 = arith.constant 0 : index
    %c0_258 = arith.constant 0 : index
    %365 = vector.load %arg21[%c3_256, %c0_257, %c0_258] : memref<4x32x8xf32, #tpu.memory_space<vmem>>, vector<1x32x8xf32>
    %366 = vector.shape_cast %365 : vector<1x32x8xf32> to vector<32x8xf32>
    "tpu.trace_start"() <{level = 10 : i32, message = "ble,ed->bld"}> : () -> ()
    %cst_259 = arith.constant dense<0.000000e+00> : vector<2x8x8xf32>
    %367 = tpu.matmul %225, %366, %cst_259 {dimension_numbers = #tpu.dot_dimension_numbers<[2], [0], [0, 1], [1], [0, 0, 0, 1, 1, 1], [], []>} : vector<2x8x32xf32>, vector<32x8xf32>, vector<2x8x8xf32> -> vector<2x8x8xf32>
    "tpu.trace_stop"() : () -> ()
    %c3_260 = arith.constant 3 : index
    %c0_261 = arith.constant 0 : index
    %c0_262 = arith.constant 0 : index
    %368 = vector.load %arg22[%c3_260, %c0_261, %c0_262] : memref<4x1x8xf32, #tpu.memory_space<vmem>>, vector<1x1x8xf32>
    %369 = vector.shape_cast %368 : vector<1x1x8xf32> to vector<1x8xf32>
    %370 = vector.shape_cast %369 : vector<1x8xf32> to vector<1x1x8xf32>
    %371 = vector.broadcast %370 : vector<1x1x8xf32> to vector<2x8x8xf32>
    %372 = arith.addf %367, %371 : vector<2x8x8xf32>
    "tpu.trace_start"() <{level = 10 : i32, message = "bld,bmd->blm"}> : () -> ()
    %cst_263 = arith.constant dense<0.000000e+00> : vector<2x8x8xf32>
    %373 = tpu.matmul %356, %364, %cst_263 {dimension_numbers = #tpu.dot_dimension_numbers<[2], [2], [1], [1], [0, 0, 0, 1, 1, 1], [0], [0]>} : vector<2x8x8xf32>, vector<2x8x8xf32>, vector<2x8x8xf32> -> vector<2x8x8xf32>
    "tpu.trace_stop"() : () -> ()
    %cst_264 = arith.constant dense<0xFF800000> : vector<2x8xf32>
    %374 = vector.multi_reduction <maximumf>, %373, %cst_264 [2] : vector<2x8x8xf32> to vector<2x8xf32>
    %375 = vector.shape_cast %374 : vector<2x8xf32> to vector<2x8x1xf32>
    %376 = vector.broadcast %375 : vector<2x8x1xf32> to vector<2x8x8xf32>
    %377 = arith.subf %373, %376 : vector<2x8x8xf32>
    %378 = math.exp %377 : vector<2x8x8xf32>
    %cst_265 = arith.constant dense<0.000000e+00> : vector<2x8xf32>
    %379 = vector.multi_reduction <add>, %378, %cst_265 [2] : vector<2x8x8xf32> to vector<2x8xf32>
    %380 = vector.shape_cast %379 : vector<2x8xf32> to vector<2x8x1xf32>
    %381 = tpu.reciprocal %380 {approx = true} : vector<2x8x1xf32> -> vector<2x8x1xf32>
    %382 = vector.broadcast %381 : vector<2x8x1xf32> to vector<2x8x8xf32>
    %383 = arith.mulf %378, %382 : vector<2x8x8xf32>
    "tpu.trace_start"() <{level = 10 : i32, message = "blm,bmd->bld"}> : () -> ()
    %cst_266 = arith.constant dense<0.000000e+00> : vector<2x8x8xf32>
    %384 = tpu.matmul %383, %372, %cst_266 {dimension_numbers = #tpu.dot_dimension_numbers<[2], [1], [1], [2], [0, 0, 0, 1, 1, 2], [0], [0]>} : vector<2x8x8xf32>, vector<2x8x8xf32>, vector<2x8x8xf32> -> vector<2x8x8xf32>
    "tpu.trace_stop"() : () -> ()
    %c3_267 = arith.constant 3 : index
    %c0_268 = arith.constant 0 : index
    %c0_269 = arith.constant 0 : index
    %385 = vector.load %arg23[%c3_267, %c0_268, %c0_269] : memref<4x8x32xf32, #tpu.memory_space<vmem>>, vector<1x8x32xf32>
    %386 = vector.shape_cast %385 : vector<1x8x32xf32> to vector<8x32xf32>
    "tpu.trace_start"() <{level = 10 : i32, message = "bld,de->ble"}> : () -> ()
    %cst_270 = arith.constant dense<0.000000e+00> : vector<2x8x32xf32>
    %387 = tpu.matmul %384, %386, %cst_270 {dimension_numbers = #tpu.dot_dimension_numbers<[2], [0], [0, 1], [1], [0, 0, 0, 1, 1, 1], [], []>} : vector<2x8x8xf32>, vector<8x32xf32>, vector<2x8x32xf32> -> vector<2x8x32xf32>
    "tpu.trace_stop"() : () -> ()
    %388 = arith.addf %348, %387 : vector<2x8x32xf32>
    %389 = arith.addf %225, %388 : vector<2x8x32xf32>
    %c0_271 = arith.constant 0 : index
    %c0_272 = arith.constant 0 : index
    %c0_273 = arith.constant 0 : index
    %390 = vector.load %arg25[%c0_271, %c0_272, %c0_273] : memref<1x1x32xf32, #tpu.memory_space<vmem>>, vector<1x1x32xf32>
    %c0_274 = arith.constant 0 : index
    %c0_275 = arith.constant 0 : index
    %c0_276 = arith.constant 0 : index
    %391 = vector.load %arg26[%c0_274, %c0_275, %c0_276] : memref<1x1x32xf32, #tpu.memory_space<vmem>>, vector<1x1x32xf32>
    %cst_277 = arith.constant dense<0.000000e+00> : vector<2x8xf32>
    %392 = vector.multi_reduction <add>, %389, %cst_277 [2] : vector<2x8x32xf32> to vector<2x8xf32>
    %393 = vector.shape_cast %392 : vector<2x8xf32> to vector<2x8x1xf32>
    %cst_278 = arith.constant 3.200000e+01 : f32
    %394 = vector.broadcast %cst_278 : f32 to vector<2x8x1xf32>
    %395 = arith.divf %393, %394 : vector<2x8x1xf32>
    %396 = vector.broadcast %395 : vector<2x8x1xf32> to vector<2x8x32xf32>
    %397 = arith.subf %389, %396 : vector<2x8x32xf32>
    %398 = arith.mulf %397, %397 : vector<2x8x32xf32>
    %cst_279 = arith.constant dense<0.000000e+00> : vector<2x8xf32>
    %399 = vector.multi_reduction <add>, %398, %cst_279 [2] : vector<2x8x32xf32> to vector<2x8xf32>
    %400 = vector.shape_cast %399 : vector<2x8xf32> to vector<2x8x1xf32>
    %cst_280 = arith.constant 3.200000e+01 : f32
    %401 = vector.broadcast %cst_280 : f32 to vector<2x8x1xf32>
    %402 = arith.divf %400, %401 : vector<2x8x1xf32>
    %403 = vector.broadcast %395 : vector<2x8x1xf32> to vector<2x8x32xf32>
    %404 = arith.subf %389, %403 : vector<2x8x32xf32>
    %cst_281 = arith.constant 9.99999974E-6 : f32
    %405 = vector.broadcast %cst_281 : f32 to vector<2x8x1xf32>
    %406 = arith.addf %402, %405 : vector<2x8x1xf32>
    %407 = math.rsqrt %406 : vector<2x8x1xf32>
    %408 = vector.broadcast %407 : vector<2x8x1xf32> to vector<2x8x32xf32>
    %409 = arith.mulf %404, %408 : vector<2x8x32xf32>
    %410 = vector.broadcast %390 : vector<1x1x32xf32> to vector<2x8x32xf32>
    %411 = arith.mulf %409, %410 : vector<2x8x32xf32>
    %412 = vector.broadcast %391 : vector<1x1x32xf32> to vector<2x8x32xf32>
    %413 = arith.addf %411, %412 : vector<2x8x32xf32>
    %c0_282 = arith.constant 0 : index
    %c0_283 = arith.constant 0 : index
    %414 = vector.load %arg27[%c0_282, %c0_283] : memref<32x64xf32, #tpu.memory_space<vmem>>, vector<32x64xf32>
    "tpu.trace_start"() <{level = 10 : i32, message = "ble,ef->blf"}> : () -> ()
    %cst_284 = arith.constant dense<0.000000e+00> : vector<2x8x64xf32>
    %415 = tpu.matmul %413, %414, %cst_284 {dimension_numbers = #tpu.dot_dimension_numbers<[2], [0], [0, 1], [1], [0, 0, 0, 1, 1, 1], [], []>} : vector<2x8x32xf32>, vector<32x64xf32>, vector<2x8x64xf32> -> vector<2x8x64xf32>
    "tpu.trace_stop"() : () -> ()
    %c0_285 = arith.constant 0 : index
    %c0_286 = arith.constant 0 : index
    %c0_287 = arith.constant 0 : index
    %416 = vector.load %arg28[%c0_285, %c0_286, %c0_287] : memref<1x1x64xf32, #tpu.memory_space<vmem>>, vector<1x1x64xf32>
    %417 = vector.broadcast %416 : vector<1x1x64xf32> to vector<2x8x64xf32>
    %418 = arith.addf %415, %417 : vector<2x8x64xf32>
    %cst_288 = arith.constant 0.000000e+00 : f32
    %419 = vector.broadcast %cst_288 : f32 to vector<2x8x64xf32>
    %420 = arith.maximumf %418, %419 : vector<2x8x64xf32>
    %c0_289 = arith.constant 0 : index
    %c0_290 = arith.constant 0 : index
    %421 = vector.load %arg29[%c0_289, %c0_290] : memref<64x32xf32, #tpu.memory_space<vmem>>, vector<64x32xf32>
    "tpu.trace_start"() <{level = 10 : i32, message = "blf,fe->ble"}> : () -> ()
    %cst_291 = arith.constant dense<0.000000e+00> : vector<2x8x32xf32>
    %422 = tpu.matmul %420, %421, %cst_291 {dimension_numbers = #tpu.dot_dimension_numbers<[2], [0], [0, 1], [1], [0, 0, 0, 1, 1, 1], [], []>} : vector<2x8x64xf32>, vector<64x32xf32>, vector<2x8x32xf32> -> vector<2x8x32xf32>
    "tpu.trace_stop"() : () -> ()
    %c0_292 = arith.constant 0 : index
    %c0_293 = arith.constant 0 : index
    %c0_294 = arith.constant 0 : index
    %423 = vector.load %arg30[%c0_292, %c0_293, %c0_294] : memref<1x1x32xf32, #tpu.memory_space<vmem>>, vector<1x1x32xf32>
    %424 = vector.broadcast %423 : vector<1x1x32xf32> to vector<2x8x32xf32>
    %425 = arith.addf %422, %424 : vector<2x8x32xf32>
    %426 = arith.addf %413, %425 : vector<2x8x32xf32>
    %c0_295 = arith.constant 0 : index
    %c0_296 = arith.constant 0 : index
    %c0_297 = arith.constant 0 : index
    %427 = vector.load %arg31[%c0_295, %c0_296, %c0_297] : memref<1x1x32xf32, #tpu.memory_space<vmem>>, vector<1x1x32xf32>
    %c0_298 = arith.constant 0 : index
    %c0_299 = arith.constant 0 : index
    %c0_300 = arith.constant 0 : index
    %428 = vector.load %arg32[%c0_298, %c0_299, %c0_300] : memref<1x1x32xf32, #tpu.memory_space<vmem>>, vector<1x1x32xf32>
    %cst_301 = arith.constant dense<0.000000e+00> : vector<2x8xf32>
    %429 = vector.multi_reduction <add>, %426, %cst_301 [2] : vector<2x8x32xf32> to vector<2x8xf32>
    %430 = vector.shape_cast %429 : vector<2x8xf32> to vector<2x8x1xf32>
    %cst_302 = arith.constant 3.200000e+01 : f32
    %431 = vector.broadcast %cst_302 : f32 to vector<2x8x1xf32>
    %432 = arith.divf %430, %431 : vector<2x8x1xf32>
    %433 = vector.broadcast %432 : vector<2x8x1xf32> to vector<2x8x32xf32>
    %434 = arith.subf %426, %433 : vector<2x8x32xf32>
    %435 = arith.mulf %434, %434 : vector<2x8x32xf32>
    %cst_303 = arith.constant dense<0.000000e+00> : vector<2x8xf32>
    %436 = vector.multi_reduction <add>, %435, %cst_303 [2] : vector<2x8x32xf32> to vector<2x8xf32>
    %437 = vector.shape_cast %436 : vector<2x8xf32> to vector<2x8x1xf32>
    %cst_304 = arith.constant 3.200000e+01 : f32
    %438 = vector.broadcast %cst_304 : f32 to vector<2x8x1xf32>
    %439 = arith.divf %437, %438 : vector<2x8x1xf32>
    %440 = vector.broadcast %432 : vector<2x8x1xf32> to vector<2x8x32xf32>
    %441 = arith.subf %426, %440 : vector<2x8x32xf32>
    %cst_305 = arith.constant 9.99999974E-6 : f32
    %442 = vector.broadcast %cst_305 : f32 to vector<2x8x1xf32>
    %443 = arith.addf %439, %442 : vector<2x8x1xf32>
    %444 = math.rsqrt %443 : vector<2x8x1xf32>
    %445 = vector.broadcast %444 : vector<2x8x1xf32> to vector<2x8x32xf32>
    %446 = arith.mulf %441, %445 : vector<2x8x32xf32>
    %447 = vector.broadcast %427 : vector<1x1x32xf32> to vector<2x8x32xf32>
    %448 = arith.mulf %446, %447 : vector<2x8x32xf32>
    %449 = vector.broadcast %428 : vector<1x1x32xf32> to vector<2x8x32xf32>
    %450 = arith.addf %448, %449 : vector<2x8x32xf32>
    %c0_306 = arith.constant 0 : index
    %c0_307 = arith.constant 0 : index
    %451 = vector.load %arg34[%c0_306, %c0_307] : memref<1x256xf32, #tpu.memory_space<vmem>>, vector<1x256xf32>
    %452 = vector.shape_cast %451 : vector<1x256xf32> to vector<1x256xf32>
    %453 = vector.broadcast %452 : vector<1x256xf32> to vector<2x256xf32>
    %454 = vector.extract_strided_slice %450 {offsets = [0, 0, 0], sizes = [2, 1, 32], strides = [1, 1, 1]} : vector<2x8x32xf32> to vector<2x1x32xf32>
    %455 = vector.shape_cast %454 : vector<2x1x32xf32> to vector<2x32xf32>
    %c0_308 = arith.constant 0 : index
    %c0_309 = arith.constant 0 : index
    %c0_310 = arith.constant 0 : index
    %456 = vector.load %arg33[%c0_308, %c0_309, %c0_310] : memref<8x32x256xf32, #tpu.memory_space<vmem>>, vector<1x32x256xf32>
    %457 = vector.shape_cast %456 : vector<1x32x256xf32> to vector<32x256xf32>
    %cst_311 = arith.constant dense<0.000000e+00> : vector<2x256xf32>
    %458 = tpu.matmul %455, %457, %cst_311 {dimension_numbers = #tpu.dot_dimension_numbers<[1], [0], [0], [1], [0, 0, 1, 1], [], []>} : vector<2x32xf32>, vector<32x256xf32>, vector<2x256xf32> -> vector<2x256xf32>
    %459 = arith.addf %453, %458 : vector<2x256xf32>
    %460 = vector.extract_strided_slice %450 {offsets = [0, 1, 0], sizes = [2, 1, 32], strides = [1, 1, 1]} : vector<2x8x32xf32> to vector<2x1x32xf32>
    %461 = vector.shape_cast %460 : vector<2x1x32xf32> to vector<2x32xf32>
    %c1_312 = arith.constant 1 : index
    %c0_313 = arith.constant 0 : index
    %c0_314 = arith.constant 0 : index
    %462 = vector.load %arg33[%c1_312, %c0_313, %c0_314] : memref<8x32x256xf32, #tpu.memory_space<vmem>>, vector<1x32x256xf32>
    %463 = vector.shape_cast %462 : vector<1x32x256xf32> to vector<32x256xf32>
    %cst_315 = arith.constant dense<0.000000e+00> : vector<2x256xf32>
    %464 = tpu.matmul %461, %463, %cst_315 {dimension_numbers = #tpu.dot_dimension_numbers<[1], [0], [0], [1], [0, 0, 1, 1], [], []>} : vector<2x32xf32>, vector<32x256xf32>, vector<2x256xf32> -> vector<2x256xf32>
    %465 = arith.addf %459, %464 : vector<2x256xf32>
    %466 = vector.extract_strided_slice %450 {offsets = [0, 2, 0], sizes = [2, 1, 32], strides = [1, 1, 1]} : vector<2x8x32xf32> to vector<2x1x32xf32>
    %467 = vector.shape_cast %466 : vector<2x1x32xf32> to vector<2x32xf32>
    %c2_316 = arith.constant 2 : index
    %c0_317 = arith.constant 0 : index
    %c0_318 = arith.constant 0 : index
    %468 = vector.load %arg33[%c2_316, %c0_317, %c0_318] : memref<8x32x256xf32, #tpu.memory_space<vmem>>, vector<1x32x256xf32>
    %469 = vector.shape_cast %468 : vector<1x32x256xf32> to vector<32x256xf32>
    %cst_319 = arith.constant dense<0.000000e+00> : vector<2x256xf32>
    %470 = tpu.matmul %467, %469, %cst_319 {dimension_numbers = #tpu.dot_dimension_numbers<[1], [0], [0], [1], [0, 0, 1, 1], [], []>} : vector<2x32xf32>, vector<32x256xf32>, vector<2x256xf32> -> vector<2x256xf32>
    %471 = arith.addf %465, %470 : vector<2x256xf32>
    %472 = vector.extract_strided_slice %450 {offsets = [0, 3, 0], sizes = [2, 1, 32], strides = [1, 1, 1]} : vector<2x8x32xf32> to vector<2x1x32xf32>
    %473 = vector.shape_cast %472 : vector<2x1x32xf32> to vector<2x32xf32>
    %c3_320 = arith.constant 3 : index
    %c0_321 = arith.constant 0 : index
    %c0_322 = arith.constant 0 : index
    %474 = vector.load %arg33[%c3_320, %c0_321, %c0_322] : memref<8x32x256xf32, #tpu.memory_space<vmem>>, vector<1x32x256xf32>
    %475 = vector.shape_cast %474 : vector<1x32x256xf32> to vector<32x256xf32>
    %cst_323 = arith.constant dense<0.000000e+00> : vector<2x256xf32>
    %476 = tpu.matmul %473, %475, %cst_323 {dimension_numbers = #tpu.dot_dimension_numbers<[1], [0], [0], [1], [0, 0, 1, 1], [], []>} : vector<2x32xf32>, vector<32x256xf32>, vector<2x256xf32> -> vector<2x256xf32>
    %477 = arith.addf %471, %476 : vector<2x256xf32>
    %478 = vector.extract_strided_slice %450 {offsets = [0, 4, 0], sizes = [2, 1, 32], strides = [1, 1, 1]} : vector<2x8x32xf32> to vector<2x1x32xf32>
    %479 = vector.shape_cast %478 : vector<2x1x32xf32> to vector<2x32xf32>
    %c4 = arith.constant 4 : index
    %c0_324 = arith.constant 0 : index
    %c0_325 = arith.constant 0 : index
    %480 = vector.load %arg33[%c4, %c0_324, %c0_325] : memref<8x32x256xf32, #tpu.memory_space<vmem>>, vector<1x32x256xf32>
    %481 = vector.shape_cast %480 : vector<1x32x256xf32> to vector<32x256xf32>
    %cst_326 = arith.constant dense<0.000000e+00> : vector<2x256xf32>
    %482 = tpu.matmul %479, %481, %cst_326 {dimension_numbers = #tpu.dot_dimension_numbers<[1], [0], [0], [1], [0, 0, 1, 1], [], []>} : vector<2x32xf32>, vector<32x256xf32>, vector<2x256xf32> -> vector<2x256xf32>
    %483 = arith.addf %477, %482 : vector<2x256xf32>
    %484 = vector.extract_strided_slice %450 {offsets = [0, 5, 0], sizes = [2, 1, 32], strides = [1, 1, 1]} : vector<2x8x32xf32> to vector<2x1x32xf32>
    %485 = vector.shape_cast %484 : vector<2x1x32xf32> to vector<2x32xf32>
    %c5 = arith.constant 5 : index
    %c0_327 = arith.constant 0 : index
    %c0_328 = arith.constant 0 : index
    %486 = vector.load %arg33[%c5, %c0_327, %c0_328] : memref<8x32x256xf32, #tpu.memory_space<vmem>>, vector<1x32x256xf32>
    %487 = vector.shape_cast %486 : vector<1x32x256xf32> to vector<32x256xf32>
    %cst_329 = arith.constant dense<0.000000e+00> : vector<2x256xf32>
    %488 = tpu.matmul %485, %487, %cst_329 {dimension_numbers = #tpu.dot_dimension_numbers<[1], [0], [0], [1], [0, 0, 1, 1], [], []>} : vector<2x32xf32>, vector<32x256xf32>, vector<2x256xf32> -> vector<2x256xf32>
    %489 = arith.addf %483, %488 : vector<2x256xf32>
    %490 = vector.extract_strided_slice %450 {offsets = [0, 6, 0], sizes = [2, 1, 32], strides = [1, 1, 1]} : vector<2x8x32xf32> to vector<2x1x32xf32>
    %491 = vector.shape_cast %490 : vector<2x1x32xf32> to vector<2x32xf32>
    %c6 = arith.constant 6 : index
    %c0_330 = arith.constant 0 : index
    %c0_331 = arith.constant 0 : index
    %492 = vector.load %arg33[%c6, %c0_330, %c0_331] : memref<8x32x256xf32, #tpu.memory_space<vmem>>, vector<1x32x256xf32>
    %493 = vector.shape_cast %492 : vector<1x32x256xf32> to vector<32x256xf32>
    %cst_332 = arith.constant dense<0.000000e+00> : vector<2x256xf32>
    %494 = tpu.matmul %491, %493, %cst_332 {dimension_numbers = #tpu.dot_dimension_numbers<[1], [0], [0], [1], [0, 0, 1, 1], [], []>} : vector<2x32xf32>, vector<32x256xf32>, vector<2x256xf32> -> vector<2x256xf32>
    %495 = arith.addf %489, %494 : vector<2x256xf32>
    %496 = vector.extract_strided_slice %450 {offsets = [0, 7, 0], sizes = [2, 1, 32], strides = [1, 1, 1]} : vector<2x8x32xf32> to vector<2x1x32xf32>
    %497 = vector.shape_cast %496 : vector<2x1x32xf32> to vector<2x32xf32>
    %c7 = arith.constant 7 : index
    %c0_333 = arith.constant 0 : index
    %c0_334 = arith.constant 0 : index
    %498 = vector.load %arg33[%c7, %c0_333, %c0_334] : memref<8x32x256xf32, #tpu.memory_space<vmem>>, vector<1x32x256xf32>
    %499 = vector.shape_cast %498 : vector<1x32x256xf32> to vector<32x256xf32>
    %cst_335 = arith.constant dense<0.000000e+00> : vector<2x256xf32>
    %500 = tpu.matmul %497, %499, %cst_335 {dimension_numbers = #tpu.dot_dimension_numbers<[1], [0], [0], [1], [0, 0, 1, 1], [], []>} : vector<2x32xf32>, vector<32x256xf32>, vector<2x256xf32> -> vector<2x256xf32>
    %501 = arith.addf %495, %500 : vector<2x256xf32>
    %cst_336 = arith.constant 0.000000e+00 : f32
    %502 = vector.broadcast %cst_336 : f32 to vector<2x256xf32>
    %503 = arith.maximumf %501, %502 : vector<2x256xf32>
    %c0_337 = arith.constant 0 : index
    %c0_338 = arith.constant 0 : index
    %504 = vector.load %arg35[%c0_337, %c0_338] : memref<256x128xf32, #tpu.memory_space<vmem>>, vector<256x128xf32>
    %cst_339 = arith.constant dense<0.000000e+00> : vector<2x128xf32>
    %505 = tpu.matmul %503, %504, %cst_339 {dimension_numbers = #tpu.dot_dimension_numbers<[1], [0], [0], [1], [0, 0, 1, 1], [], []>} : vector<2x256xf32>, vector<256x128xf32>, vector<2x128xf32> -> vector<2x128xf32>
    %c0_340 = arith.constant 0 : index
    %c0_341 = arith.constant 0 : index
    %506 = vector.load %arg36[%c0_340, %c0_341] : memref<1x128xf32, #tpu.memory_space<vmem>>, vector<1x128xf32>
    %507 = vector.broadcast %506 : vector<1x128xf32> to vector<2x128xf32>
    %508 = arith.addf %505, %507 : vector<2x128xf32>
    %cst_342 = arith.constant 0.000000e+00 : f32
    %509 = vector.broadcast %cst_342 : f32 to vector<2x128xf32>
    %510 = arith.maximumf %508, %509 : vector<2x128xf32>
    %c0_343 = arith.constant 0 : index
    %c0_344 = arith.constant 0 : index
    %511 = vector.load %arg37[%c0_343, %c0_344] : memref<128x128xf32, #tpu.memory_space<vmem>>, vector<128x128xf32>
    %cst_345 = arith.constant dense<0.000000e+00> : vector<2x128xf32>
    %512 = tpu.matmul %510, %511, %cst_345 {dimension_numbers = #tpu.dot_dimension_numbers<[1], [0], [0], [1], [0, 0, 1, 1], [], []>} : vector<2x128xf32>, vector<128x128xf32>, vector<2x128xf32> -> vector<2x128xf32>
    %c0_346 = arith.constant 0 : index
    %c0_347 = arith.constant 0 : index
    %513 = vector.load %arg38[%c0_346, %c0_347] : memref<1x128xf32, #tpu.memory_space<vmem>>, vector<1x128xf32>
    %514 = vector.broadcast %513 : vector<1x128xf32> to vector<2x128xf32>
    %515 = arith.addf %512, %514 : vector<2x128xf32>
    %c0_348 = arith.constant 0 : index
    %c0_349 = arith.constant 0 : index
    %516 = vector.load %arg39[%c0_348, %c0_349] : memref<2x128xf32, #tpu.memory_space<vmem>>, vector<2x128xf32>
    tpu.vector_store %arg39[%c0_348, %c0_349], %515 {strides = array<i32>} : memref<2x128xf32, #tpu.memory_space<vmem>>, vector<2x128xf32>,
    return
  }
}

</mosaic_0001>

<llo_original>
// kernel: tpu_custom_call.1
$region0: #{tpu_custom_call.1}
  #allocation0 [shape = 'u32[]', space=smem, size = 0x4, offset = 0x4, fixed_abs, tag = 'smem constant byte address 0x4 - core index']
  #allocation1 [shape = 'u32[72,128]{1,0:T(1,128)}', space=vmem, size = 0x9000, scoped, tag = 'internal scratch']
  %s0 = inlined_call_operand.smem [shape: u32[40], index: -1, kind: input, shape index: {}]
  %s1 = sld [smem:[%s0]]
  %s2 = scalar_lea.smem %s0, 1
  %s3 = sld [smem:[%s2]]
  %s4 = scalar_lea.smem %s0, 2
  %s5 = sld [smem:[%s4]]
  %s6 = scalar_lea.smem %s0, 3
  %s7 = sld [smem:[%s6]]
  %s8 = scalar_lea.smem %s0, 4
  %s9 = sld [smem:[%s8]]
  %s10 = scalar_lea.smem %s0, 5
  %s11 = sld [smem:[%s10]]
  %s12 = scalar_lea.smem %s0, 6
  %s13 = sld [smem:[%s12]]
  %s14 = scalar_lea.smem %s0, 7
  %s15 = sld [smem:[%s14]]
  %s16 = scalar_lea.smem %s0, 8
  %s17 = sld [smem:[%s16]]
  %s18 = scalar_lea.smem %s0, 9
  %s19 = sld [smem:[%s18]]
  %s20 = scalar_lea.smem %s0, 10
  %s21 = sld [smem:[%s20]]
  %s22 = scalar_lea.smem %s0, 11
  %s23 = sld [smem:[%s22]]
  %s24 = scalar_lea.smem %s0, 12
  %s25 = sld [smem:[%s24]]
  %s26 = scalar_lea.smem %s0, 13
  %s27 = sld [smem:[%s26]]
  %s28 = scalar_lea.smem %s0, 14
  %s29 = sld [smem:[%s28]]
  %s30 = scalar_lea.smem %s0, 15
  %s31 = sld [smem:[%s30]]
  %s32 = scalar_lea.smem %s0, 16
  %s33 = sld [smem:[%s32]]
  %s34 = scalar_lea.smem %s0, 17
  %s35 = sld [smem:[%s34]]
  %s36 = scalar_lea.smem %s0, 18
  %s37 = sld [smem:[%s36]]
  %s38 = scalar_lea.smem %s0, 19
  %s39 = sld [smem:[%s38]]
  %s40 = scalar_lea.smem %s0, 20
  %s41 = sld [smem:[%s40]]
  %s42 = scalar_lea.smem %s0, 21
  %s43 = sld [smem:[%s42]]
  %s44 = scalar_lea.smem %s0, 22
  %s45 = sld [smem:[%s44]]
  %s46 = scalar_lea.smem %s0, 23
  %s47 = sld [smem:[%s46]]
  %s48 = scalar_lea.smem %s0, 24
  %s49 = sld [smem:[%s48]]
  %s50 = scalar_lea.smem %s0, 25
  %s51 = sld [smem:[%s50]]
  %s52 = scalar_lea.smem %s0, 26
  %s53 = sld [smem:[%s52]]
  %s54 = scalar_lea.smem %s0, 27
  %s55 = sld [smem:[%s54]]
  %s56 = scalar_lea.smem %s0, 28
  %s57 = sld [smem:[%s56]]
  %s58 = scalar_lea.smem %s0, 29
  %s59 = sld [smem:[%s58]]
  %s60 = scalar_lea.smem %s0, 30
  %s61 = sld [smem:[%s60]]
  %s62 = scalar_lea.smem %s0, 31
  %s63 = sld [smem:[%s62]]
  %s64 = scalar_lea.smem %s0, 32
  %s65 = sld [smem:[%s64]]
  %s66 = scalar_lea.smem %s0, 33
  %s67 = sld [smem:[%s66]]
  %s68 = scalar_lea.smem %s0, 34
  %s69 = sld [smem:[%s68]]
  %s70 = scalar_lea.smem %s0, 35
  %s71 = sld [smem:[%s70]]
  %s72 = scalar_lea.smem %s0, 36
  %s73 = sld [smem:[%s72]]
  %s74 = scalar_lea.smem %s0, 37
  %s75 = sld [smem:[%s74]]
  %s76 = scalar_lea.smem %s0, 38
  %s77 = sld [smem:[%s76]]
  %s78 = scalar_lea.smem %s0, 39
  %s79 = sld [smem:[%s78]]
  %s80 = sld [smem:[#allocation0]]
  $region170: #{tpu_custom_call.1} parent=0
    _
  %s82 = ssub.s32 1, %s80
  %s83 = scalar_select 0, %s82, %s80
  $region1: #{tpu_custom_call.1} parent=0
    #allocation2 [shape = 'u8[262144]{0}', space=vmem, size = 0x40000, scoped, tag = 'input window, operand 33, single buffered']
    #allocation3 [shape = 's32[1]{0}', space=sflag, size = 0x4, scoped, tag = 'scoped memory for tpu_custom_call.1']
    #allocation4 [shape = 's32[1]{0}', space=sflag, size = 0x4, scoped, tag = 'scoped memory for tpu_custom_call.1']
    #allocation5 [shape = 'u8[1024]{0}', space=vmem, size = 0x400, scoped, tag = 'output window, operand 0, single buffered']
    %84 = vsyncpa [#allocation3], 0
    %85 = vsyncpa [#allocation4], 0
    // Predicated region
    $region2: #{tpu_custom_call.1} parent=1 // pred_check
      _
    $region3: #{tpu_custom_call.1} parent=1 // pred_check_branch
      %87 = sbr.rel (0) target = $region5
    $region4: #{tpu_custom_call.1} parent=1 // pred_region
      _
    $region5: #{tpu_custom_call.1} parent=1 // pred_fallthru
      _
    // Predicated region
    $region6: #{tpu_custom_call.1} parent=1 // pred_check
      _
    $region7: #{tpu_custom_call.1} parent=1 // pred_check_branch
      %89 = sbr.rel (0) target = $region9
    $region8: #{tpu_custom_call.1} parent=1 // pred_region
      _
    $region9: #{tpu_custom_call.1} parent=1 // pred_fallthru
      _
    // Predicated region
    $region10: #{tpu_custom_call.1} parent=1 // pred_check
      _
    $region11: #{tpu_custom_call.1} parent=1 // pred_check_branch
      %91 = sbr.rel (0) target = $region13
    $region12: #{tpu_custom_call.1} parent=1 // pred_region
      _
    $region13: #{tpu_custom_call.1} parent=1 // pred_fallthru
      _
    // Predicated region
    $region14: #{tpu_custom_call.1} parent=1 // pred_check
      _
    $region15: #{tpu_custom_call.1} parent=1 // pred_check_branch
      %93 = sbr.rel (0) target = $region17
    $region16: #{tpu_custom_call.1} parent=1 // pred_region
      _
    $region17: #{tpu_custom_call.1} parent=1 // pred_fallthru
      _
    // Predicated region
    $region18: #{tpu_custom_call.1} parent=1 // pred_check
      _
    $region19: #{tpu_custom_call.1} parent=1 // pred_check_branch
      %95 = sbr.rel (0) target = $region21
    $region20: #{tpu_custom_call.1} parent=1 // pred_region
      _
    $region21: #{tpu_custom_call.1} parent=1 // pred_fallthru
      _
    // Predicated region
    $region22: #{tpu_custom_call.1} parent=1 // pred_check
      _
    $region23: #{tpu_custom_call.1} parent=1 // pred_check_branch
      %97 = sbr.rel (0) target = $region25
    $region24: #{tpu_custom_call.1} parent=1 // pred_region
      _
    $region25: #{tpu_custom_call.1} parent=1 // pred_fallthru
      _
    // Predicated region
    $region26: #{tpu_custom_call.1} parent=1 // pred_check
      _
    $region27: #{tpu_custom_call.1} parent=1 // pred_check_branch
      %99 = sbr.rel (0) target = $region29
    $region28: #{tpu_custom_call.1} parent=1 // pred_region
      _
    $region29: #{tpu_custom_call.1} parent=1 // pred_fallthru
      _
    // Predicated region
    $region30: #{tpu_custom_call.1} parent=1 // pred_check
      _
    $region31: #{tpu_custom_call.1} parent=1 // pred_check_branch
      %101 = sbr.rel (0) target = $region33
    $region32: #{tpu_custom_call.1} parent=1 // pred_region
      _
    $region33: #{tpu_custom_call.1} parent=1 // pred_fallthru
      _
    // Predicated region
    $region34: #{tpu_custom_call.1} parent=1 // pred_check
      _
    $region35: #{tpu_custom_call.1} parent=1 // pred_check_branch
      %103 = sbr.rel (0) target = $region37
    $region36: #{tpu_custom_call.1} parent=1 // pred_region
      _
    $region37: #{tpu_custom_call.1} parent=1 // pred_fallthru
      _
    // Predicated region
    $region38: #{tpu_custom_call.1} parent=1 // pred_check
      _
    $region39: #{tpu_custom_call.1} parent=1 // pred_check_branch
      %105 = sbr.rel (0) target = $region41
    $region40: #{tpu_custom_call.1} parent=1 // pred_region
      _
    $region41: #{tpu_custom_call.1} parent=1 // pred_fallthru
      _
    // Predicated region
    $region42: #{tpu_custom_call.1} parent=1 // pred_check
      _
    $region43: #{tpu_custom_call.1} parent=1 // pred_check_branch
      %107 = sbr.rel (0) target = $region45
    $region44: #{tpu_custom_call.1} parent=1 // pred_region
      _
    $region45: #{tpu_custom_call.1} parent=1 // pred_fallthru
      _
    // Predicated region
    $region46: #{tpu_custom_call.1} parent=1 // pred_check
      _
    $region47: #{tpu_custom_call.1} parent=1 // pred_check_branch
      %109 = sbr.rel (0) target = $region49
    $region48: #{tpu_custom_call.1} parent=1 // pred_region
      _
    $region49: #{tpu_custom_call.1} parent=1 // pred_fallthru
      _
    // Predicated region
    $region50: #{tpu_custom_call.1} parent=1 // pred_check
      _
    $region51: #{tpu_custom_call.1} parent=1 // pred_check_branch
      %111 = sbr.rel (0) target = $region53
    $region52: #{tpu_custom_call.1} parent=1 // pred_region
      _
    $region53: #{tpu_custom_call.1} parent=1 // pred_fallthru
      _
    // Predicated region
    $region54: #{tpu_custom_call.1} parent=1 // pred_check
      _
    $region55: #{tpu_custom_call.1} parent=1 // pred_check_branch
      %113 = sbr.rel (0) target = $region57
    $region56: #{tpu_custom_call.1} parent=1 // pred_region
      _
    $region57: #{tpu_custom_call.1} parent=1 // pred_fallthru
      _
    // Predicated region
    $region58: #{tpu_custom_call.1} parent=1 // pred_check
      _
    $region59: #{tpu_custom_call.1} parent=1 // pred_check_branch
      %115 = sbr.rel (0) target = $region61
    $region60: #{tpu_custom_call.1} parent=1 // pred_region
      _
    $region61: #{tpu_custom_call.1} parent=1 // pred_fallthru
      _
    // Predicated region
    $region62: #{tpu_custom_call.1} parent=1 // pred_check
      _
    $region63: #{tpu_custom_call.1} parent=1 // pred_check_branch
      %117 = sbr.rel (0) target = $region65
    $region64: #{tpu_custom_call.1} parent=1 // pred_region
      _
    $region65: #{tpu_custom_call.1} parent=1 // pred_fallthru
      _
    // Predicated region
    $region66: #{tpu_custom_call.1} parent=1 // pred_check
      _
    $region67: #{tpu_custom_call.1} parent=1 // pred_check_branch
      %119 = sbr.rel (0) target = $region69
    $region68: #{tpu_custom_call.1} parent=1 // pred_region
      _
    $region69: #{tpu_custom_call.1} parent=1 // pred_fallthru
      _
    // Predicated region
    $region70: #{tpu_custom_call.1} parent=1 // pred_check
      _
    $region71: #{tpu_custom_call.1} parent=1 // pred_check_branch
      %121 = sbr.rel (0) target = $region73
    $region72: #{tpu_custom_call.1} parent=1 // pred_region
      _
    $region73: #{tpu_custom_call.1} parent=1 // pred_fallthru
      _
    // Predicated region
    $region74: #{tpu_custom_call.1} parent=1 // pred_check
      _
    $region75: #{tpu_custom_call.1} parent=1 // pred_check_branch
      %123 = sbr.rel (0) target = $region77
    $region76: #{tpu_custom_call.1} parent=1 // pred_region
      _
    $region77: #{tpu_custom_call.1} parent=1 // pred_fallthru
      _
    // Predicated region
    $region78: #{tpu_custom_call.1} parent=1 // pred_check
      _
    $region79: #{tpu_custom_call.1} parent=1 // pred_check_branch
      %125 = sbr.rel (0) target = $region81
    $region80: #{tpu_custom_call.1} parent=1 // pred_region
      _
    $region81: #{tpu_custom_call.1} parent=1 // pred_fallthru
      _
    // Predicated region
    $region82: #{tpu_custom_call.1} parent=1 // pred_check
      _
    $region83: #{tpu_custom_call.1} parent=1 // pred_check_branch
      %127 = sbr.rel (0) target = $region85
    $region84: #{tpu_custom_call.1} parent=1 // pred_region
      _
    $region85: #{tpu_custom_call.1} parent=1 // pred_fallthru
      _
    // Predicated region
    $region86: #{tpu_custom_call.1} parent=1 // pred_check
      _
    $region87: #{tpu_custom_call.1} parent=1 // pred_check_branch
      %129 = sbr.rel (0) target = $region89
    $region88: #{tpu_custom_call.1} parent=1 // pred_region
      _
    $region89: #{tpu_custom_call.1} parent=1 // pred_fallthru
      _
    // Predicated region
    $region90: #{tpu_custom_call.1} parent=1 // pred_check
      _
    $region91: #{tpu_custom_call.1} parent=1 // pred_check_branch
      %131 = sbr.rel (0) target = $region93
    $region92: #{tpu_custom_call.1} parent=1 // pred_region
      _
    $region93: #{tpu_custom_call.1} parent=1 // pred_fallthru
      _
    // Predicated region
    $region94: #{tpu_custom_call.1} parent=1 // pred_check
      _
    $region95: #{tpu_custom_call.1} parent=1 // pred_check_branch
      %133 = sbr.rel (0) target = $region97
    $region96: #{tpu_custom_call.1} parent=1 // pred_region
      _
    $region97: #{tpu_custom_call.1} parent=1 // pred_fallthru
      _
    // Predicated region
    $region98: #{tpu_custom_call.1} parent=1 // pred_check
      _
    $region99: #{tpu_custom_call.1} parent=1 // pred_check_branch
      %135 = sbr.rel (0) target = $region101
    $region100: #{tpu_custom_call.1} parent=1 // pred_region
      _
    $region101: #{tpu_custom_call.1} parent=1 // pred_fallthru
      _
    // Predicated region
    $region102: #{tpu_custom_call.1} parent=1 // pred_check
      _
    $region103: #{tpu_custom_call.1} parent=1 // pred_check_branch
      %137 = sbr.rel (0) target = $region105
    $region104: #{tpu_custom_call.1} parent=1 // pred_region
      _
    $region105: #{tpu_custom_call.1} parent=1 // pred_fallthru
      _
    // Predicated region
    $region106: #{tpu_custom_call.1} parent=1 // pred_check
      _
    $region107: #{tpu_custom_call.1} parent=1 // pred_check_branch
      %139 = sbr.rel (0) target = $region109
    $region108: #{tpu_custom_call.1} parent=1 // pred_region
      _
    $region109: #{tpu_custom_call.1} parent=1 // pred_fallthru
      _
    // Predicated region
    $region110: #{tpu_custom_call.1} parent=1 // pred_check
      _
    $region111: #{tpu_custom_call.1} parent=1 // pred_check_branch
      %141 = sbr.rel (0) target = $region113
    $region112: #{tpu_custom_call.1} parent=1 // pred_region
      _
    $region113: #{tpu_custom_call.1} parent=1 // pred_fallthru
      _
    // Predicated region
    $region114: #{tpu_custom_call.1} parent=1 // pred_check
      _
    $region115: #{tpu_custom_call.1} parent=1 // pred_check_branch
      %143 = sbr.rel (0) target = $region117
    $region116: #{tpu_custom_call.1} parent=1 // pred_region
      _
    $region117: #{tpu_custom_call.1} parent=1 // pred_fallthru
      _
    // Predicated region
    $region118: #{tpu_custom_call.1} parent=1 // pred_check
      _
    $region119: #{tpu_custom_call.1} parent=1 // pred_check_branch
      %145 = sbr.rel (0) target = $region121
    $region120: #{tpu_custom_call.1} parent=1 // pred_region
      _
    $region121: #{tpu_custom_call.1} parent=1 // pred_fallthru
      _
    // Predicated region
    $region122: #{tpu_custom_call.1} parent=1 // pred_check
      _
    $region123: #{tpu_custom_call.1} parent=1 // pred_check_branch
      %147 = sbr.rel (0) target = $region125
    $region124: #{tpu_custom_call.1} parent=1 // pred_region
      _
    $region125: #{tpu_custom_call.1} parent=1 // pred_fallthru
      _
    // Predicated region
    $region126: #{tpu_custom_call.1} parent=1 // pred_check
      _
    $region127: #{tpu_custom_call.1} parent=1 // pred_check_branch
      %149 = sbr.rel (0) target = $region129
    $region128: #{tpu_custom_call.1} parent=1 // pred_region
      _
    $region129: #{tpu_custom_call.1} parent=1 // pred_fallthru
      _
    // Predicated region
    $region130: #{tpu_custom_call.1} parent=1 // pred_check
      _
    $region131: #{tpu_custom_call.1} parent=1 // pred_check_branch
      %151 = sbr.rel (0) target = $region133
    $region132: #{tpu_custom_call.1} parent=1 // pred_region
      _
    $region133: #{tpu_custom_call.1} parent=1 // pred_fallthru
      _
    // Predicated region
    $region134: #{tpu_custom_call.1} parent=1 // pred_check
      _
    $region135: #{tpu_custom_call.1} parent=1 // pred_check_branch
      %153 = sbr.rel (0) target = $region137
    $region136: #{tpu_custom_call.1} parent=1 // pred_region
      %155 = vsyncadd [#allocation3], 0
      %s156 = sshll.u32 %s67, 4
      %s157 = int_to_ptr.hbm [resolvable:$true] %s156
      %s158 = sshll.u32 [#allocation2], 4
      %s159 = int_to_ptr.vmem [resolvable:$true] %s158
      %164 = dma.hbm_to_vmem [thread:$0]  %s157, 8192, %s159, [#allocation3], 256, 256, 16
    $region137: #{tpu_custom_call.1} parent=1 // pred_fallthru
      _
    // Predicated region
    $region138: #{tpu_custom_call.1} parent=1 // pred_check
      _
    $region139: #{tpu_custom_call.1} parent=1 // pred_check_branch
      %166 = sbr.rel (0) target = $region141
    $region140: #{tpu_custom_call.1} parent=1 // pred_region
      _
    $region141: #{tpu_custom_call.1} parent=1 // pred_fallthru
      _
    // Predicated region
    $region142: #{tpu_custom_call.1} parent=1 // pred_check
      _
    $region143: #{tpu_custom_call.1} parent=1 // pred_check_branch
      %168 = sbr.rel (0) target = $region145
    $region144: #{tpu_custom_call.1} parent=1 // pred_region
      _
    $region145: #{tpu_custom_call.1} parent=1 // pred_fallthru
      _
    // Predicated region
    $region146: #{tpu_custom_call.1} parent=1 // pred_check
      _
    $region147: #{tpu_custom_call.1} parent=1 // pred_check_branch
      %170 = sbr.rel (0) target = $region149
    $region148: #{tpu_custom_call.1} parent=1 // pred_region
      _
    $region149: #{tpu_custom_call.1} parent=1 // pred_fallthru
      _
    // Predicated region
    $region150: #{tpu_custom_call.1} parent=1 // pred_check
      _
    $region151: #{tpu_custom_call.1} parent=1 // pred_check_branch
      %172 = sbr.rel (0) target = $region153
    $region152: #{tpu_custom_call.1} parent=1 // pred_region
      _
    $region153: #{tpu_custom_call.1} parent=1 // pred_fallthru
      _
    // Predicated region
    $region154: #{tpu_custom_call.1} parent=1 // pred_check
      _
    $region155: #{tpu_custom_call.1} parent=1 // pred_check_branch
      %174 = sbr.rel (0) target = $region157
    $region156: #{tpu_custom_call.1} parent=1 // pred_region
      _
    $region157: #{tpu_custom_call.1} parent=1 // pred_fallthru
      _
    // Predicated region
    $region158: #{tpu_custom_call.1} parent=1 // pred_check
      _
    $region159: #{tpu_custom_call.1} parent=1 // pred_check_branch
      %176 = sbr.rel (0) target = $region161
    $region160: #{tpu_custom_call.1} parent=1 // pred_region
      %178 = dma.done [#allocation3], 8192
    $region161: #{tpu_custom_call.1} parent=1 // pred_fallthru
      _
    %v179 = vld [vmem:[%s1] sm:$0xff]
    %v180 = vld [vmem:[%s1 + $0x8] sm:$0xff]
    %v181 = vld [vmem:[%s17] sm:$0x1]
    %v183 = vperm.slane %v181, 0
    %v185 = vld [vmem:[%s3] sm:$0xff]
    %v186 = vld [vmem:[%s3 + $0x8] sm:$0xff]
    %v187 = vld [vmem:[%s3 + $0x10] sm:$0xff]
    %v188 = vld [vmem:[%s3 + $0x18] sm:$0xff]
    %v189 = vld [vmem:[%s5] sm:$0x1]
    %v191 = vperm.slane %v189, 0
    %vm193 = vcmask 261120
    %v195 = vsel %vm193, %v179, 0
    %v198 = vsel %vm193, %v180, 0
    %200 = vmatpush.msra.mxu0 0.0
    %201 = vmatpush.msra.mxu0 0.0
    %202 = vmatpush.msra.mxu0 0.0
    %203 = vmatpush.msra.mxu0 0.0
    %204 = vmatpush.msra.mxu0 0.0
    %205 = vmatpush.msra.mxu0 0.0
    %206 = vmatpush.msra.mxu0 0.0
    %207 = vmatpush.msra.mxu0 0.0
    %208 = vmatpush.msra.mxu0 0.0
    %209 = vmatpush.msra.mxu0 0.0
    %210 = vmatpush.msra.mxu0 0.0
    %211 = vmatpush.msra.mxu0 0.0
    %212 = vmatpush.msra.mxu0 %v188
    %213 = vmatpush.msra.mxu0 %v187
    %214 = vmatpush.msra.mxu0 %v186
    %215 = vmatpush.msra.mxu0 %v185
    %216 = vmatmul.f32.gmra.mxu0 %v195
    %v217 = vpop.f32.mrf.mxu0
    %v218 = vadd.f32 %v191, %v217
    %219 = vmatmul.f32.gmra.mxu0 %v198
    %v220 = vpop.f32.mrf.mxu0
    %v221 = vadd.f32 %v191, %v220
    %222 = vdwg.mxu0
    %v223 = vld [vmem:[%s7] sm:$0xff]
    %v224 = vld [vmem:[%s7 + $0x8] sm:$0xff]
    %v225 = vld [vmem:[%s7 + $0x10] sm:$0xff]
    %v226 = vld [vmem:[%s7 + $0x18] sm:$0xff]
    %v227 = vld [vmem:[%s9] sm:$0x1]
    %v229 = vperm.slane %v227, 0
    %231 = vmatpush.msra.mxu0 0.0
    %232 = vmatpush.msra.mxu0 0.0
    %233 = vmatpush.msra.mxu0 0.0
    %234 = vmatpush.msra.mxu0 0.0
    %235 = vmatpush.msra.mxu0 0.0
    %236 = vmatpush.msra.mxu0 0.0
    %237 = vmatpush.msra.mxu0 0.0
    %238 = vmatpush.msra.mxu0 0.0
    %239 = vmatpush.msra.mxu0 0.0
    %240 = vmatpush.msra.mxu0 0.0
    %241 = vmatpush.msra.mxu0 0.0
    %242 = vmatpush.msra.mxu0 0.0
    %243 = vmatpush.msra.mxu0 %v226
    %244 = vmatpush.msra.mxu0 %v225
    %245 = vmatpush.msra.mxu0 %v224
    %246 = vmatpush.msra.mxu0 %v223
    %247 = vmatmul.f32.gmra.mxu0 %v195
    %v248 = vpop.f32.mrf.mxu0
    %v249 = vadd.f32 %v229, %v248
    %250 = vmatmul.f32.gmra.mxu0 %v198
    %v251 = vpop.f32.mrf.mxu0
    %v252 = vadd.f32 %v229, %v251
    %253 = vdwg.mxu0
    %v254 = vld [vmem:[%s11] sm:$0xff]
    %v255 = vld [vmem:[%s11 + $0x8] sm:$0xff]
    %v256 = vld [vmem:[%s11 + $0x10] sm:$0xff]
    %v257 = vld [vmem:[%s11 + $0x18] sm:$0xff]
    %v258 = vld [vmem:[%s13] sm:$0x1]
    %v260 = vperm.slane %v258, 0
    %262 = vmatpush.msra.mxu0 0.0
    %263 = vmatpush.msra.mxu0 0.0
    %264 = vmatpush.msra.mxu0 0.0
    %265 = vmatpush.msra.mxu0 0.0
    %266 = vmatpush.msra.mxu0 0.0
    %267 = vmatpush.msra.mxu0 0.0
    %268 = vmatpush.msra.mxu0 0.0
    %269 = vmatpush.msra.mxu0 0.0
    %270 = vmatpush.msra.mxu0 0.0
    %271 = vmatpush.msra.mxu0 0.0
    %272 = vmatpush.msra.mxu0 0.0
    %273 = vmatpush.msra.mxu0 0.0
    %274 = vmatpush.msra.mxu0 %v257
    %275 = vmatpush.msra.mxu0 %v256
    %276 = vmatpush.msra.mxu0 %v255
    %277 = vmatpush.msra.mxu0 %v254
    %278 = vmatmul.f32.gmra.mxu0 %v195
    %v279 = vpop.f32.mrf.mxu0
    %v280 = vadd.f32 %v260, %v279
    %281 = vmatmul.f32.gmra.mxu0 %v198
    %v282 = vpop.f32.mrf.mxu0
    %v283 = vadd.f32 %v260, %v282
    %284 = vdwg.mxu0
    %vm285 = vcmask 64512
    %v287 = vsel %vm285, %v218, 0
    %v290 = vsel %vm285, %v249, 0
    %292 = vmatpush.xpose.msra.mxu0 0.0
    %293 = vmatpush.xpose.msra.mxu0 0.0
    %294 = vmatpush.xpose.msra.mxu0 0.0
    %295 = vmatpush.xpose.msra.mxu0 0.0
    %296 = vmatpush.xpose.msra.mxu0 0.0
    %297 = vmatpush.xpose.msra.mxu0 0.0
    %298 = vmatpush.xpose.msra.mxu0 0.0
    %299 = vmatpush.xpose.msra.mxu0 0.0
    %300 = vmatpush.xpose.msra.mxu0 0.0
    %301 = vmatpush.xpose.msra.mxu0 0.0
    %302 = vmatpush.xpose.msra.mxu0 0.0
    %303 = vmatpush.xpose.msra.mxu0 0.0
    %304 = vmatpush.xpose.msra.mxu0 0.0
    %305 = vmatpush.xpose.msra.mxu0 0.0
    %306 = vmatpush.xpose.msra.mxu0 0.0
    %307 = vmatpush.xpose.msra.mxu0 %v290
    %308 = vmatmul.f32.gmra.mxu0 %v287
    %v309 = vpop.f32.mrf.mxu0
    %v310 = vadd.f32 0.0, %v309
    %311 = vdwg.mxu0
    %v313 = vsel %vm285, %v221, 0
    %v316 = vsel %vm285, %v252, 0
    %318 = vmatpush.xpose.msra.mxu0 0.0
    %319 = vmatpush.xpose.msra.mxu0 0.0
    %320 = vmatpush.xpose.msra.mxu0 0.0
    %321 = vmatpush.xpose.msra.mxu0 0.0
    %322 = vmatpush.xpose.msra.mxu0 0.0
    %323 = vmatpush.xpose.msra.mxu0 0.0
    %324 = vmatpush.xpose.msra.mxu0 0.0
    %325 = vmatpush.xpose.msra.mxu0 0.0
    %326 = vmatpush.xpose.msra.mxu0 0.0
    %327 = vmatpush.xpose.msra.mxu0 0.0
    %328 = vmatpush.xpose.msra.mxu0 0.0
    %329 = vmatpush.xpose.msra.mxu0 0.0
    %330 = vmatpush.xpose.msra.mxu0 0.0
    %331 = vmatpush.xpose.msra.mxu0 0.0
    %332 = vmatpush.xpose.msra.mxu0 0.0
    %333 = vmatpush.xpose.msra.mxu0 %v316
    %334 = vmatmul.f32.gmra.mxu0 %v313
    %v335 = vpop.f32.mrf.mxu0
    %v336 = vadd.f32 0.0, %v335
    %337 = vdwg.mxu0
    %v338 = vsel %vm285, %v310, -inf
    %339 = vmax.xlane.f32.xlu0 %v338
    %v340 = vpop.xlane.xlu0 %339
    %v341 = vsel %vm285, %v336, -inf
    %342 = vmax.xlane.f32.xlu0 %v341
    %v343 = vpop.xlane.xlu0 %342
    %v344 = vsub.f32 %v310, %v340
    %v345 = vsub.f32 %v336, %v343
    %v346 = vmul.f32 %v344, 1.442695
    %v347 = vpow.pop %v346
    %v348 = vmul.f32 %v345, 1.442695
    %v349 = vpow.pop %v348
    %v350 = vsel %vm285, %v347, 0.0
    %351 = vadd.xlane.f32.xlu0 %v350
    %v352 = vpop.xlane.xlu0 %351
    %v353 = vsel %vm285, %v349, 0.0
    %354 = vadd.xlane.f32.xlu0 %v353
    %v355 = vpop.xlane.xlu0 %354
    %v356 = vrcp.pop %v352
    %v357 = vrcp.pop %v355
    %v358 = vmul.f32 %v347, %v356
    %v359 = vmul.f32 %v349, %v357
    %v361 = vsel %vm285, %v358, 0
    %363 = vmatpush.msra.mxu0 0.0
    %364 = vmatpush.msra.mxu0 0.0
    %365 = vmatpush.msra.mxu0 0.0
    %366 = vmatpush.msra.mxu0 0.0
    %367 = vmatpush.msra.mxu0 0.0
    %368 = vmatpush.msra.mxu0 0.0
    %369 = vmatpush.msra.mxu0 0.0
    %370 = vmatpush.msra.mxu0 0.0
    %371 = vmatpush.msra.mxu0 0.0
    %372 = vmatpush.msra.mxu0 0.0
    %373 = vmatpush.msra.mxu0 0.0
    %374 = vmatpush.msra.mxu0 0.0
    %375 = vmatpush.msra.mxu0 0.0
    %376 = vmatpush.msra.mxu0 0.0
    %377 = vmatpush.msra.mxu0 0.0
    %378 = vmatpush.msra.mxu0 %v280
    %379 = vmatmul.f32.gmra.mxu0 %v361
    %v380 = vpop.f32.mrf.mxu0
    %v381 = vadd.f32 0.0, %v380
    %382 = vdwg.mxu0
    %v384 = vsel %vm285, %v359, 0
    %386 = vmatpush.msra.mxu0 0.0
    %387 = vmatpush.msra.mxu0 0.0
    %388 = vmatpush.msra.mxu0 0.0
    %389 = vmatpush.msra.mxu0 0.0
    %390 = vmatpush.msra.mxu0 0.0
    %391 = vmatpush.msra.mxu0 0.0
    %392 = vmatpush.msra.mxu0 0.0
    %393 = vmatpush.msra.mxu0 0.0
    %394 = vmatpush.msra.mxu0 0.0
    %395 = vmatpush.msra.mxu0 0.0
    %396 = vmatpush.msra.mxu0 0.0
    %397 = vmatpush.msra.mxu0 0.0
    %398 = vmatpush.msra.mxu0 0.0
    %399 = vmatpush.msra.mxu0 0.0
    %400 = vmatpush.msra.mxu0 0.0
    %401 = vmatpush.msra.mxu0 %v283
    %402 = vmatmul.f32.gmra.mxu0 %v384
    %v403 = vpop.f32.mrf.mxu0
    %v404 = vadd.f32 0.0, %v403
    %405 = vdwg.mxu0
    %v406 = vld [vmem:[%s15] sm:$0xff]
    %v408 = vsel %vm285, %v381, 0
    %v411 = vsel %vm285, %v404, 0
    %413 = vmatpush.msra.mxu0 0.0
    %414 = vmatpush.msra.mxu0 0.0
    %415 = vmatpush.msra.mxu0 0.0
    %416 = vmatpush.msra.mxu0 0.0
    %417 = vmatpush.msra.mxu0 0.0
    %418 = vmatpush.msra.mxu0 0.0
    %419 = vmatpush.msra.mxu0 0.0
    %420 = vmatpush.msra.mxu0 0.0
    %421 = vmatpush.msra.mxu0 0.0
    %422 = vmatpush.msra.mxu0 0.0
    %423 = vmatpush.msra.mxu0 0.0
    %424 = vmatpush.msra.mxu0 0.0
    %425 = vmatpush.msra.mxu0 0.0
    %426 = vmatpush.msra.mxu0 0.0
    %427 = vmatpush.msra.mxu0 0.0
    %428 = vmatpush.msra.mxu0 %v406
    %429 = vmatmul.f32.gmra.mxu0 %v408
    %v430 = vpop.f32.mrf.mxu0
    %v431 = vadd.f32 0.0, %v430
    %432 = vmatmul.f32.gmra.mxu0 %v411
    %v433 = vpop.f32.mrf.mxu0
    %v434 = vadd.f32 0.0, %v433
    %435 = vdwg.mxu0
    %v436 = vadd.f32 %v183, %v431
    %v437 = vadd.f32 %v183, %v434
    %s438 = scalar_lea.vmem %s3, 32
    %v439 = vld [vmem:[%s438] sm:$0xff]
    %v440 = vld [vmem:[%s438 + $0x8] sm:$0xff]
    %v441 = vld [vmem:[%s438 + $0x10] sm:$0xff]
    %v442 = vld [vmem:[%s438 + $0x18] sm:$0xff]
    %s443 = scalar_lea.vmem %s5, 1
    %v444 = vld [vmem:[%s443] sm:$0x1]
    %v446 = vperm.slane %v444, 0
    %448 = vmatpush.msra.mxu0 0.0
    %449 = vmatpush.msra.mxu0 0.0
    %450 = vmatpush.msra.mxu0 0.0
    %451 = vmatpush.msra.mxu0 0.0
    %452 = vmatpush.msra.mxu0 0.0
    %453 = vmatpush.msra.mxu0 0.0
    %454 = vmatpush.msra.mxu0 0.0
    %455 = vmatpush.msra.mxu0 0.0
    %456 = vmatpush.msra.mxu0 0.0
    %457 = vmatpush.msra.mxu0 0.0
    %458 = vmatpush.msra.mxu0 0.0
    %459 = vmatpush.msra.mxu0 0.0
    %460 = vmatpush.msra.mxu0 %v442
    %461 = vmatpush.msra.mxu0 %v441
    %462 = vmatpush.msra.mxu0 %v440
    %463 = vmatpush.msra.mxu0 %v439
    %464 = vmatmul.f32.gmra.mxu0 %v195
    %v465 = vpop.f32.mrf.mxu0
    %v466 = vadd.f32 %v446, %v465
    %467 = vmatmul.f32.gmra.mxu0 %v198
    %v468 = vpop.f32.mrf.mxu0
    %v469 = vadd.f32 %v446, %v468
    %470 = vdwg.mxu0
    %s471 = scalar_lea.vmem %s7, 32
    %v472 = vld [vmem:[%s471] sm:$0xff]
    %v473 = vld [vmem:[%s471 + $0x8] sm:$0xff]
    %v474 = vld [vmem:[%s471 + $0x10] sm:$0xff]
    %v475 = vld [vmem:[%s471 + $0x18] sm:$0xff]
    %s476 = scalar_lea.vmem %s9, 1
    %v477 = vld [vmem:[%s476] sm:$0x1]
    %v479 = vperm.slane %v477, 0
    %481 = vmatpush.msra.mxu0 0.0
    %482 = vmatpush.msra.mxu0 0.0
    %483 = vmatpush.msra.mxu0 0.0
    %484 = vmatpush.msra.mxu0 0.0
    %485 = vmatpush.msra.mxu0 0.0
    %486 = vmatpush.msra.mxu0 0.0
    %487 = vmatpush.msra.mxu0 0.0
    %488 = vmatpush.msra.mxu0 0.0
    %489 = vmatpush.msra.mxu0 0.0
    %490 = vmatpush.msra.mxu0 0.0
    %491 = vmatpush.msra.mxu0 0.0
    %492 = vmatpush.msra.mxu0 0.0
    %493 = vmatpush.msra.mxu0 %v475
    %494 = vmatpush.msra.mxu0 %v474
    %495 = vmatpush.msra.mxu0 %v473
    %496 = vmatpush.msra.mxu0 %v472
    %497 = vmatmul.f32.gmra.mxu0 %v195
    %v498 = vpop.f32.mrf.mxu0
    %v499 = vadd.f32 %v479, %v498
    %500 = vmatmul.f32.gmra.mxu0 %v198
    %v501 = vpop.f32.mrf.mxu0
    %v502 = vadd.f32 %v479, %v501
    %503 = vdwg.mxu0
    %s504 = scalar_lea.vmem %s11, 32
    %v505 = vld [vmem:[%s504] sm:$0xff]
    %v506 = vld [vmem:[%s504 + $0x8] sm:$0xff]
    %v507 = vld [vmem:[%s504 + $0x10] sm:$0xff]
    %v508 = vld [vmem:[%s504 + $0x18] sm:$0xff]
    %s509 = scalar_lea.vmem %s13, 1
    %v510 = vld [vmem:[%s509] sm:$0x1]
    %v512 = vperm.slane %v510, 0
    %514 = vmatpush.msra.mxu0 0.0
    %515 = vmatpush.msra.mxu0 0.0
    %516 = vmatpush.msra.mxu0 0.0
    %517 = vmatpush.msra.mxu0 0.0
    %518 = vmatpush.msra.mxu0 0.0
    %519 = vmatpush.msra.mxu0 0.0
    %520 = vmatpush.msra.mxu0 0.0
    %521 = vmatpush.msra.mxu0 0.0
    %522 = vmatpush.msra.mxu0 0.0
    %523 = vmatpush.msra.mxu0 0.0
    %524 = vmatpush.msra.mxu0 0.0
    %525 = vmatpush.msra.mxu0 0.0
    %526 = vmatpush.msra.mxu0 %v508
    %527 = vmatpush.msra.mxu0 %v507
    %528 = vmatpush.msra.mxu0 %v506
    %529 = vmatpush.msra.mxu0 %v505
    %530 = vmatmul.f32.gmra.mxu0 %v195
    %v531 = vpop.f32.mrf.mxu0
    %v532 = vadd.f32 %v512, %v531
    %533 = vmatmul.f32.gmra.mxu0 %v198
    %v534 = vpop.f32.mrf.mxu0
    %v535 = vadd.f32 %v512, %v534
    %536 = vdwg.mxu0
    %v538 = vsel %vm285, %v466, 0
    %v541 = vsel %vm285, %v499, 0
    %543 = vmatpush.xpose.msra.mxu0 0.0
    %544 = vmatpush.xpose.msra.mxu0 0.0
    %545 = vmatpush.xpose.msra.mxu0 0.0
    %546 = vmatpush.xpose.msra.mxu0 0.0
    %547 = vmatpush.xpose.msra.mxu0 0.0
    %548 = vmatpush.xpose.msra.mxu0 0.0
    %549 = vmatpush.xpose.msra.mxu0 0.0
    %550 = vmatpush.xpose.msra.mxu0 0.0
    %551 = vmatpush.xpose.msra.mxu0 0.0
    %552 = vmatpush.xpose.msra.mxu0 0.0
    %553 = vmatpush.xpose.msra.mxu0 0.0
    %554 = vmatpush.xpose.msra.mxu0 0.0
    %555 = vmatpush.xpose.msra.mxu0 0.0
    %556 = vmatpush.xpose.msra.mxu0 0.0
    %557 = vmatpush.xpose.msra.mxu0 0.0
    %558 = vmatpush.xpose.msra.mxu0 %v541
    %559 = vmatmul.f32.gmra.mxu0 %v538
    %v560 = vpop.f32.mrf.mxu0
    %v561 = vadd.f32 0.0, %v560
    %562 = vdwg.mxu0
    %v564 = vsel %vm285, %v469, 0
    %v567 = vsel %vm285, %v502, 0
    %569 = vmatpush.xpose.msra.mxu0 0.0
    %570 = vmatpush.xpose.msra.mxu0 0.0
    %571 = vmatpush.xpose.msra.mxu0 0.0
    %572 = vmatpush.xpose.msra.mxu0 0.0
    %573 = vmatpush.xpose.msra.mxu0 0.0
    %574 = vmatpush.xpose.msra.mxu0 0.0
    %575 = vmatpush.xpose.msra.mxu0 0.0
    %576 = vmatpush.xpose.msra.mxu0 0.0
    %577 = vmatpush.xpose.msra.mxu0 0.0
    %578 = vmatpush.xpose.msra.mxu0 0.0
    %579 = vmatpush.xpose.msra.mxu0 0.0
    %580 = vmatpush.xpose.msra.mxu0 0.0
    %581 = vmatpush.xpose.msra.mxu0 0.0
    %582 = vmatpush.xpose.msra.mxu0 0.0
    %583 = vmatpush.xpose.msra.mxu0 0.0
    %584 = vmatpush.xpose.msra.mxu0 %v567
    %585 = vmatmul.f32.gmra.mxu0 %v564
    %v586 = vpop.f32.mrf.mxu0
    %v587 = vadd.f32 0.0, %v586
    %588 = vdwg.mxu0
    %v589 = vsel %vm285, %v561, -inf
    %590 = vmax.xlane.f32.xlu0 %v589
    %v591 = vpop.xlane.xlu0 %590
    %v592 = vsel %vm285, %v587, -inf
    %593 = vmax.xlane.f32.xlu0 %v592
    %v594 = vpop.xlane.xlu0 %593
    %v595 = vsub.f32 %v561, %v591
    %v596 = vsub.f32 %v587, %v594
    %v597 = vmul.f32 %v595, 1.442695
    %v598 = vpow.pop %v597
    %v599 = vmul.f32 %v596, 1.442695
    %v600 = vpow.pop %v599
    %v601 = vsel %vm285, %v598, 0.0
    %602 = vadd.xlane.f32.xlu0 %v601
    %v603 = vpop.xlane.xlu0 %602
    %v604 = vsel %vm285, %v600, 0.0
    %605 = vadd.xlane.f32.xlu0 %v604
    %v606 = vpop.xlane.xlu0 %605
    %v607 = vrcp.pop %v603
    %v608 = vrcp.pop %v606
    %v609 = vmul.f32 %v598, %v607
    %v610 = vmul.f32 %v600, %v608
    %v612 = vsel %vm285, %v609, 0
    %614 = vmatpush.msra.mxu0 0.0
    %615 = vmatpush.msra.mxu0 0.0
    %616 = vmatpush.msra.mxu0 0.0
    %617 = vmatpush.msra.mxu0 0.0
    %618 = vmatpush.msra.mxu0 0.0
    %619 = vmatpush.msra.mxu0 0.0
    %620 = vmatpush.msra.mxu0 0.0
    %621 = vmatpush.msra.mxu0 0.0
    %622 = vmatpush.msra.mxu0 0.0
    %623 = vmatpush.msra.mxu0 0.0
    %624 = vmatpush.msra.mxu0 0.0
    %625 = vmatpush.msra.mxu0 0.0
    %626 = vmatpush.msra.mxu0 0.0
    %627 = vmatpush.msra.mxu0 0.0
    %628 = vmatpush.msra.mxu0 0.0
    %629 = vmatpush.msra.mxu0 %v532
    %630 = vmatmul.f32.gmra.mxu0 %v612
    %v631 = vpop.f32.mrf.mxu0
    %v632 = vadd.f32 0.0, %v631
    %633 = vdwg.mxu0
    %v635 = vsel %vm285, %v610, 0
    %637 = vmatpush.msra.mxu0 0.0
    %638 = vmatpush.msra.mxu0 0.0
    %639 = vmatpush.msra.mxu0 0.0
    %640 = vmatpush.msra.mxu0 0.0
    %641 = vmatpush.msra.mxu0 0.0
    %642 = vmatpush.msra.mxu0 0.0
    %643 = vmatpush.msra.mxu0 0.0
    %644 = vmatpush.msra.mxu0 0.0
    %645 = vmatpush.msra.mxu0 0.0
    %646 = vmatpush.msra.mxu0 0.0
    %647 = vmatpush.msra.mxu0 0.0
    %648 = vmatpush.msra.mxu0 0.0
    %649 = vmatpush.msra.mxu0 0.0
    %650 = vmatpush.msra.mxu0 0.0
    %651 = vmatpush.msra.mxu0 0.0
    %652 = vmatpush.msra.mxu0 %v535
    %653 = vmatmul.f32.gmra.mxu0 %v635
    %v654 = vpop.f32.mrf.mxu0
    %v655 = vadd.f32 0.0, %v654
    %656 = vdwg.mxu0
    %s657 = scalar_lea.vmem %s15, 8
    %v658 = vld [vmem:[%s657] sm:$0xff]
    %v660 = vsel %vm285, %v632, 0
    %v663 = vsel %vm285, %v655, 0
    %665 = vmatpush.msra.mxu0 0.0
    %666 = vmatpush.msra.mxu0 0.0
    %667 = vmatpush.msra.mxu0 0.0
    %668 = vmatpush.msra.mxu0 0.0
    %669 = vmatpush.msra.mxu0 0.0
    %670 = vmatpush.msra.mxu0 0.0
    %671 = vmatpush.msra.mxu0 0.0
    %672 = vmatpush.msra.mxu0 0.0
    %673 = vmatpush.msra.mxu0 0.0
    %674 = vmatpush.msra.mxu0 0.0
    %675 = vmatpush.msra.mxu0 0.0
    %676 = vmatpush.msra.mxu0 0.0
    %677 = vmatpush.msra.mxu0 0.0
    %678 = vmatpush.msra.mxu0 0.0
    %679 = vmatpush.msra.mxu0 0.0
    %680 = vmatpush.msra.mxu0 %v658
    %681 = vmatmul.f32.gmra.mxu0 %v660
    %v682 = vpop.f32.mrf.mxu0
    %v683 = vadd.f32 0.0, %v682
    %684 = vmatmul.f32.gmra.mxu0 %v663
    %v685 = vpop.f32.mrf.mxu0
    %v686 = vadd.f32 0.0, %v685
    %687 = vdwg.mxu0
    %v688 = vadd.f32 %v436, %v683
    %v689 = vadd.f32 %v437, %v686
    %s690 = scalar_lea.vmem %s3, 64
    %v691 = vld [vmem:[%s690] sm:$0xff]
    %v692 = vld [vmem:[%s690 + $0x8] sm:$0xff]
    %v693 = vld [vmem:[%s690 + $0x10] sm:$0xff]
    %v694 = vld [vmem:[%s690 + $0x18] sm:$0xff]
    %s695 = scalar_lea.vmem %s5, 2
    %v696 = vld [vmem:[%s695] sm:$0x1]
    %v698 = vperm.slane %v696, 0
    %700 = vmatpush.msra.mxu0 0.0
    %701 = vmatpush.msra.mxu0 0.0
    %702 = vmatpush.msra.mxu0 0.0
    %703 = vmatpush.msra.mxu0 0.0
    %704 = vmatpush.msra.mxu0 0.0
    %705 = vmatpush.msra.mxu0 0.0
    %706 = vmatpush.msra.mxu0 0.0
    %707 = vmatpush.msra.mxu0 0.0
    %708 = vmatpush.msra.mxu0 0.0
    %709 = vmatpush.msra.mxu0 0.0
    %710 = vmatpush.msra.mxu0 0.0
    %711 = vmatpush.msra.mxu0 0.0
    %712 = vmatpush.msra.mxu0 %v694
    %713 = vmatpush.msra.mxu0 %v693
    %714 = vmatpush.msra.mxu0 %v692
    %715 = vmatpush.msra.mxu0 %v691
    %716 = vmatmul.f32.gmra.mxu0 %v195
    %v717 = vpop.f32.mrf.mxu0
    %v718 = vadd.f32 %v698, %v717
    %719 = vmatmul.f32.gmra.mxu0 %v198
    %v720 = vpop.f32.mrf.mxu0
    %v721 = vadd.f32 %v698, %v720
    %722 = vdwg.mxu0
    %s723 = scalar_lea.vmem %s7, 64
    %v724 = vld [vmem:[%s723] sm:$0xff]
    %v725 = vld [vmem:[%s723 + $0x8] sm:$0xff]
    %v726 = vld [vmem:[%s723 + $0x10] sm:$0xff]
    %v727 = vld [vmem:[%s723 + $0x18] sm:$0xff]
    %s728 = scalar_lea.vmem %s9, 2
    %v729 = vld [vmem:[%s728] sm:$0x1]
    %v731 = vperm.slane %v729, 0
    %733 = vmatpush.msra.mxu0 0.0
    %734 = vmatpush.msra.mxu0 0.0
    %735 = vmatpush.msra.mxu0 0.0
    %736 = vmatpush.msra.mxu0 0.0
    %737 = vmatpush.msra.mxu0 0.0
    %738 = vmatpush.msra.mxu0 0.0
    %739 = vmatpush.msra.mxu0 0.0
    %740 = vmatpush.msra.mxu0 0.0
    %741 = vmatpush.msra.mxu0 0.0
    %742 = vmatpush.msra.mxu0 0.0
    %743 = vmatpush.msra.mxu0 0.0
    %744 = vmatpush.msra.mxu0 0.0
    %745 = vmatpush.msra.mxu0 %v727
    %746 = vmatpush.msra.mxu0 %v726
    %747 = vmatpush.msra.mxu0 %v725
    %748 = vmatpush.msra.mxu0 %v724
    %749 = vmatmul.f32.gmra.mxu0 %v195
    %v750 = vpop.f32.mrf.mxu0
    %v751 = vadd.f32 %v731, %v750
    %752 = vmatmul.f32.gmra.mxu0 %v198
    %v753 = vpop.f32.mrf.mxu0
    %v754 = vadd.f32 %v731, %v753
    %755 = vdwg.mxu0
    %s756 = scalar_lea.vmem %s11, 64
    %v757 = vld [vmem:[%s756] sm:$0xff]
    %v758 = vld [vmem:[%s756 + $0x8] sm:$0xff]
    %v759 = vld [vmem:[%s756 + $0x10] sm:$0xff]
    %v760 = vld [vmem:[%s756 + $0x18] sm:$0xff]
    %s761 = scalar_lea.vmem %s13, 2
    %v762 = vld [vmem:[%s761] sm:$0x1]
    %v764 = vperm.slane %v762, 0
    %766 = vmatpush.msra.mxu0 0.0
    %767 = vmatpush.msra.mxu0 0.0
    %768 = vmatpush.msra.mxu0 0.0
    %769 = vmatpush.msra.mxu0 0.0
    %770 = vmatpush.msra.mxu0 0.0
    %771 = vmatpush.msra.mxu0 0.0
    %772 = vmatpush.msra.mxu0 0.0
    %773 = vmatpush.msra.mxu0 0.0
    %774 = vmatpush.msra.mxu0 0.0
    %775 = vmatpush.msra.mxu0 0.0
    %776 = vmatpush.msra.mxu0 0.0
    %777 = vmatpush.msra.mxu0 0.0
    %778 = vmatpush.msra.mxu0 %v760
    %779 = vmatpush.msra.mxu0 %v759
    %780 = vmatpush.msra.mxu0 %v758
    %781 = vmatpush.msra.mxu0 %v757
    %782 = vmatmul.f32.gmra.mxu0 %v195
    %v783 = vpop.f32.mrf.mxu0
    %v784 = vadd.f32 %v764, %v783
    %785 = vmatmul.f32.gmra.mxu0 %v198
    %v786 = vpop.f32.mrf.mxu0
    %v787 = vadd.f32 %v764, %v786
    %788 = vdwg.mxu0
    %v790 = vsel %vm285, %v718, 0
    %v793 = vsel %vm285, %v751, 0
    %795 = vmatpush.xpose.msra.mxu0 0.0
    %796 = vmatpush.xpose.msra.mxu0 0.0
    %797 = vmatpush.xpose.msra.mxu0 0.0
    %798 = vmatpush.xpose.msra.mxu0 0.0
    %799 = vmatpush.xpose.msra.mxu0 0.0
    %800 = vmatpush.xpose.msra.mxu0 0.0
    %801 = vmatpush.xpose.msra.mxu0 0.0
    %802 = vmatpush.xpose.msra.mxu0 0.0
    %803 = vmatpush.xpose.msra.mxu0 0.0
    %804 = vmatpush.xpose.msra.mxu0 0.0
    %805 = vmatpush.xpose.msra.mxu0 0.0
    %806 = vmatpush.xpose.msra.mxu0 0.0
    %807 = vmatpush.xpose.msra.mxu0 0.0
    %808 = vmatpush.xpose.msra.mxu0 0.0
    %809 = vmatpush.xpose.msra.mxu0 0.0
    %810 = vmatpush.xpose.msra.mxu0 %v793
    %811 = vmatmul.f32.gmra.mxu0 %v790
    %v812 = vpop.f32.mrf.mxu0
    %v813 = vadd.f32 0.0, %v812
    %814 = vdwg.mxu0
    %v816 = vsel %vm285, %v721, 0
    %v819 = vsel %vm285, %v754, 0
    %821 = vmatpush.xpose.msra.mxu0 0.0
    %822 = vmatpush.xpose.msra.mxu0 0.0
    %823 = vmatpush.xpose.msra.mxu0 0.0
    %824 = vmatpush.xpose.msra.mxu0 0.0
    %825 = vmatpush.xpose.msra.mxu0 0.0
    %826 = vmatpush.xpose.msra.mxu0 0.0
    %827 = vmatpush.xpose.msra.mxu0 0.0
    %828 = vmatpush.xpose.msra.mxu0 0.0
    %829 = vmatpush.xpose.msra.mxu0 0.0
    %830 = vmatpush.xpose.msra.mxu0 0.0
    %831 = vmatpush.xpose.msra.mxu0 0.0
    %832 = vmatpush.xpose.msra.mxu0 0.0
    %833 = vmatpush.xpose.msra.mxu0 0.0
    %834 = vmatpush.xpose.msra.mxu0 0.0
    %835 = vmatpush.xpose.msra.mxu0 0.0
    %836 = vmatpush.xpose.msra.mxu0 %v819
    %837 = vmatmul.f32.gmra.mxu0 %v816
    %v838 = vpop.f32.mrf.mxu0
    %v839 = vadd.f32 0.0, %v838
    %840 = vdwg.mxu0
    %v841 = vsel %vm285, %v813, -inf
    %842 = vmax.xlane.f32.xlu0 %v841
    %v843 = vpop.xlane.xlu0 %842
    %v844 = vsel %vm285, %v839, -inf
    %845 = vmax.xlane.f32.xlu0 %v844
    %v846 = vpop.xlane.xlu0 %845
    %v847 = vsub.f32 %v813, %v843
    %v848 = vsub.f32 %v839, %v846
    %v849 = vmul.f32 %v847, 1.442695
    %v850 = vpow.pop %v849
    %v851 = vmul.f32 %v848, 1.442695
    %v852 = vpow.pop %v851
    %v853 = vsel %vm285, %v850, 0.0
    %854 = vadd.xlane.f32.xlu0 %v853
    %v855 = vpop.xlane.xlu0 %854
    %v856 = vsel %vm285, %v852, 0.0
    %857 = vadd.xlane.f32.xlu0 %v856
    %v858 = vpop.xlane.xlu0 %857
    %v859 = vrcp.pop %v855
    %v860 = vrcp.pop %v858
    %v861 = vmul.f32 %v850, %v859
    %v862 = vmul.f32 %v852, %v860
    %v864 = vsel %vm285, %v861, 0
    %866 = vmatpush.msra.mxu0 0.0
    %867 = vmatpush.msra.mxu0 0.0
    %868 = vmatpush.msra.mxu0 0.0
    %869 = vmatpush.msra.mxu0 0.0
    %870 = vmatpush.msra.mxu0 0.0
    %871 = vmatpush.msra.mxu0 0.0
    %872 = vmatpush.msra.mxu0 0.0
    %873 = vmatpush.msra.mxu0 0.0
    %874 = vmatpush.msra.mxu0 0.0
    %875 = vmatpush.msra.mxu0 0.0
    %876 = vmatpush.msra.mxu0 0.0
    %877 = vmatpush.msra.mxu0 0.0
    %878 = vmatpush.msra.mxu0 0.0
    %879 = vmatpush.msra.mxu0 0.0
    %880 = vmatpush.msra.mxu0 0.0
    %881 = vmatpush.msra.mxu0 %v784
    %882 = vmatmul.f32.gmra.mxu0 %v864
    %v883 = vpop.f32.mrf.mxu0
    %v884 = vadd.f32 0.0, %v883
    %885 = vdwg.mxu0
    %v887 = vsel %vm285, %v862, 0
    %889 = vmatpush.msra.mxu0 0.0
    %890 = vmatpush.msra.mxu0 0.0
    %891 = vmatpush.msra.mxu0 0.0
    %892 = vmatpush.msra.mxu0 0.0
    %893 = vmatpush.msra.mxu0 0.0
    %894 = vmatpush.msra.mxu0 0.0
    %895 = vmatpush.msra.mxu0 0.0
    %896 = vmatpush.msra.mxu0 0.0
    %897 = vmatpush.msra.mxu0 0.0
    %898 = vmatpush.msra.mxu0 0.0
    %899 = vmatpush.msra.mxu0 0.0
    %900 = vmatpush.msra.mxu0 0.0
    %901 = vmatpush.msra.mxu0 0.0
    %902 = vmatpush.msra.mxu0 0.0
    %903 = vmatpush.msra.mxu0 0.0
    %904 = vmatpush.msra.mxu0 %v787
    %905 = vmatmul.f32.gmra.mxu0 %v887
    %v906 = vpop.f32.mrf.mxu0
    %v907 = vadd.f32 0.0, %v906
    %908 = vdwg.mxu0
    %s909 = scalar_lea.vmem %s15, 16
    %v910 = vld [vmem:[%s909] sm:$0xff]
    %v912 = vsel %vm285, %v884, 0
    %v915 = vsel %vm285, %v907, 0
    %917 = vmatpush.msra.mxu0 0.0
    %918 = vmatpush.msra.mxu0 0.0
    %919 = vmatpush.msra.mxu0 0.0
    %920 = vmatpush.msra.mxu0 0.0
    %921 = vmatpush.msra.mxu0 0.0
    %922 = vmatpush.msra.mxu0 0.0
    %923 = vmatpush.msra.mxu0 0.0
    %924 = vmatpush.msra.mxu0 0.0
    %925 = vmatpush.msra.mxu0 0.0
    %926 = vmatpush.msra.mxu0 0.0
    %927 = vmatpush.msra.mxu0 0.0
    %928 = vmatpush.msra.mxu0 0.0
    %929 = vmatpush.msra.mxu0 0.0
    %930 = vmatpush.msra.mxu0 0.0
    %931 = vmatpush.msra.mxu0 0.0
    %932 = vmatpush.msra.mxu0 %v910
    %933 = vmatmul.f32.gmra.mxu0 %v912
    %v934 = vpop.f32.mrf.mxu0
    %v935 = vadd.f32 0.0, %v934
    %936 = vmatmul.f32.gmra.mxu0 %v915
    %v937 = vpop.f32.mrf.mxu0
    %v938 = vadd.f32 0.0, %v937
    %939 = vdwg.mxu0
    %v940 = vadd.f32 %v688, %v935
    %v941 = vadd.f32 %v689, %v938
    %s942 = scalar_lea.vmem %s3, 96
    %v943 = vld [vmem:[%s942] sm:$0xff]
    %v944 = vld [vmem:[%s942 + $0x8] sm:$0xff]
    %v945 = vld [vmem:[%s942 + $0x10] sm:$0xff]
    %v946 = vld [vmem:[%s942 + $0x18] sm:$0xff]
    %s947 = scalar_lea.vmem %s5, 3
    %v948 = vld [vmem:[%s947] sm:$0x1]
    %v950 = vperm.slane %v948, 0
    %952 = vmatpush.msra.mxu0 0.0
    %953 = vmatpush.msra.mxu0 0.0
    %954 = vmatpush.msra.mxu0 0.0
    %955 = vmatpush.msra.mxu0 0.0
    %956 = vmatpush.msra.mxu0 0.0
    %957 = vmatpush.msra.mxu0 0.0
    %958 = vmatpush.msra.mxu0 0.0
    %959 = vmatpush.msra.mxu0 0.0
    %960 = vmatpush.msra.mxu0 0.0
    %961 = vmatpush.msra.mxu0 0.0
    %962 = vmatpush.msra.mxu0 0.0
    %963 = vmatpush.msra.mxu0 0.0
    %964 = vmatpush.msra.mxu0 %v946
    %965 = vmatpush.msra.mxu0 %v945
    %966 = vmatpush.msra.mxu0 %v944
    %967 = vmatpush.msra.mxu0 %v943
    %968 = vmatmul.f32.gmra.mxu0 %v195
    %v969 = vpop.f32.mrf.mxu0
    %v970 = vadd.f32 %v950, %v969
    %971 = vmatmul.f32.gmra.mxu0 %v198
    %v972 = vpop.f32.mrf.mxu0
    %v973 = vadd.f32 %v950, %v972
    %974 = vdwg.mxu0
    %s975 = scalar_lea.vmem %s7, 96
    %v976 = vld [vmem:[%s975] sm:$0xff]
    %v977 = vld [vmem:[%s975 + $0x8] sm:$0xff]
    %v978 = vld [vmem:[%s975 + $0x10] sm:$0xff]
    %v979 = vld [vmem:[%s975 + $0x18] sm:$0xff]
    %s980 = scalar_lea.vmem %s9, 3
    %v981 = vld [vmem:[%s980] sm:$0x1]
    %v983 = vperm.slane %v981, 0
    %985 = vmatpush.msra.mxu0 0.0
    %986 = vmatpush.msra.mxu0 0.0
    %987 = vmatpush.msra.mxu0 0.0
    %988 = vmatpush.msra.mxu0 0.0
    %989 = vmatpush.msra.mxu0 0.0
    %990 = vmatpush.msra.mxu0 0.0
    %991 = vmatpush.msra.mxu0 0.0
    %992 = vmatpush.msra.mxu0 0.0
    %993 = vmatpush.msra.mxu0 0.0
    %994 = vmatpush.msra.mxu0 0.0
    %995 = vmatpush.msra.mxu0 0.0
    %996 = vmatpush.msra.mxu0 0.0
    %997 = vmatpush.msra.mxu0 %v979
    %998 = vmatpush.msra.mxu0 %v978
    %999 = vmatpush.msra.mxu0 %v977
    %1000 = vmatpush.msra.mxu0 %v976
    %1001 = vmatmul.f32.gmra.mxu0 %v195
    %v1002 = vpop.f32.mrf.mxu0
    %v1003 = vadd.f32 %v983, %v1002
    %1004 = vmatmul.f32.gmra.mxu0 %v198
    %v1005 = vpop.f32.mrf.mxu0
    %v1006 = vadd.f32 %v983, %v1005
    %1007 = vdwg.mxu0
    %s1008 = scalar_lea.vmem %s11, 96
    %v1009 = vld [vmem:[%s1008] sm:$0xff]
    %v1010 = vld [vmem:[%s1008 + $0x8] sm:$0xff]
    %v1011 = vld [vmem:[%s1008 + $0x10] sm:$0xff]
    %v1012 = vld [vmem:[%s1008 + $0x18] sm:$0xff]
    %s1013 = scalar_lea.vmem %s13, 3
    %v1014 = vld [vmem:[%s1013] sm:$0x1]
    %v1016 = vperm.slane %v1014, 0
    %1018 = vmatpush.msra.mxu0 0.0
    %1019 = vmatpush.msra.mxu0 0.0
    %1020 = vmatpush.msra.mxu0 0.0
    %1021 = vmatpush.msra.mxu0 0.0
    %1022 = vmatpush.msra.mxu0 0.0
    %1023 = vmatpush.msra.mxu0 0.0
    %1024 = vmatpush.msra.mxu0 0.0
    %1025 = vmatpush.msra.mxu0 0.0
    %1026 = vmatpush.msra.mxu0 0.0
    %1027 = vmatpush.msra.mxu0 0.0
    %1028 = vmatpush.msra.mxu0 0.0
    %1029 = vmatpush.msra.mxu0 0.0
    %1030 = vmatpush.msra.mxu0 %v1012
    %1031 = vmatpush.msra.mxu0 %v1011
    %1032 = vmatpush.msra.mxu0 %v1010
    %1033 = vmatpush.msra.mxu0 %v1009
    %1034 = vmatmul.f32.gmra.mxu0 %v195
    %v1035 = vpop.f32.mrf.mxu0
    %v1036 = vadd.f32 %v1016, %v1035
    %1037 = vmatmul.f32.gmra.mxu0 %v198
    %v1038 = vpop.f32.mrf.mxu0
    %v1039 = vadd.f32 %v1016, %v1038
    %1040 = vdwg.mxu0
    %v1042 = vsel %vm285, %v970, 0
    %v1045 = vsel %vm285, %v1003, 0
    %1047 = vmatpush.xpose.msra.mxu0 0.0
    %1048 = vmatpush.xpose.msra.mxu0 0.0
    %1049 = vmatpush.xpose.msra.mxu0 0.0
    %1050 = vmatpush.xpose.msra.mxu0 0.0
    %1051 = vmatpush.xpose.msra.mxu0 0.0
    %1052 = vmatpush.xpose.msra.mxu0 0.0
    %1053 = vmatpush.xpose.msra.mxu0 0.0
    %1054 = vmatpush.xpose.msra.mxu0 0.0
    %1055 = vmatpush.xpose.msra.mxu0 0.0
    %1056 = vmatpush.xpose.msra.mxu0 0.0
    %1057 = vmatpush.xpose.msra.mxu0 0.0
    %1058 = vmatpush.xpose.msra.mxu0 0.0
    %1059 = vmatpush.xpose.msra.mxu0 0.0
    %1060 = vmatpush.xpose.msra.mxu0 0.0
    %1061 = vmatpush.xpose.msra.mxu0 0.0
    %1062 = vmatpush.xpose.msra.mxu0 %v1045
    %1063 = vmatmul.f32.gmra.mxu0 %v1042
    %v1064 = vpop.f32.mrf.mxu0
    %v1065 = vadd.f32 0.0, %v1064
    %1066 = vdwg.mxu0
    %v1068 = vsel %vm285, %v973, 0
    %v1071 = vsel %vm285, %v1006, 0
    %1073 = vmatpush.xpose.msra.mxu0 0.0
    %1074 = vmatpush.xpose.msra.mxu0 0.0
    %1075 = vmatpush.xpose.msra.mxu0 0.0
    %1076 = vmatpush.xpose.msra.mxu0 0.0
    %1077 = vmatpush.xpose.msra.mxu0 0.0
    %1078 = vmatpush.xpose.msra.mxu0 0.0
    %1079 = vmatpush.xpose.msra.mxu0 0.0
    %1080 = vmatpush.xpose.msra.mxu0 0.0
    %1081 = vmatpush.xpose.msra.mxu0 0.0
    %1082 = vmatpush.xpose.msra.mxu0 0.0
    %1083 = vmatpush.xpose.msra.mxu0 0.0
    %1084 = vmatpush.xpose.msra.mxu0 0.0
    %1085 = vmatpush.xpose.msra.mxu0 0.0
    %1086 = vmatpush.xpose.msra.mxu0 0.0
    %1087 = vmatpush.xpose.msra.mxu0 0.0
    %1088 = vmatpush.xpose.msra.mxu0 %v1071
    %1089 = vmatmul.f32.gmra.mxu0 %v1068
    %v1090 = vpop.f32.mrf.mxu0
    %v1091 = vadd.f32 0.0, %v1090
    %1092 = vdwg.mxu0
    %v1093 = vsel %vm285, %v1065, -inf
    %1094 = vmax.xlane.f32.xlu0 %v1093
    %v1095 = vpop.xlane.xlu0 %1094
    %v1096 = vsel %vm285, %v1091, -inf
    %1097 = vmax.xlane.f32.xlu0 %v1096
    %v1098 = vpop.xlane.xlu0 %1097
    %v1099 = vsub.f32 %v1065, %v1095
    %v1100 = vsub.f32 %v1091, %v1098
    %v1101 = vmul.f32 %v1099, 1.442695
    %v1102 = vpow.pop %v1101
    %v1103 = vmul.f32 %v1100, 1.442695
    %v1104 = vpow.pop %v1103
    %v1105 = vsel %vm285, %v1102, 0.0
    %1106 = vadd.xlane.f32.xlu0 %v1105
    %v1107 = vpop.xlane.xlu0 %1106
    %v1108 = vsel %vm285, %v1104, 0.0
    %1109 = vadd.xlane.f32.xlu0 %v1108
    %v1110 = vpop.xlane.xlu0 %1109
    %v1111 = vrcp.pop %v1107
    %v1112 = vrcp.pop %v1110
    %v1113 = vmul.f32 %v1102, %v1111
    %v1114 = vmul.f32 %v1104, %v1112
    %v1116 = vsel %vm285, %v1113, 0
    %1118 = vmatpush.msra.mxu0 0.0
    %1119 = vmatpush.msra.mxu0 0.0
    %1120 = vmatpush.msra.mxu0 0.0
    %1121 = vmatpush.msra.mxu0 0.0
    %1122 = vmatpush.msra.mxu0 0.0
    %1123 = vmatpush.msra.mxu0 0.0
    %1124 = vmatpush.msra.mxu0 0.0
    %1125 = vmatpush.msra.mxu0 0.0
    %1126 = vmatpush.msra.mxu0 0.0
    %1127 = vmatpush.msra.mxu0 0.0
    %1128 = vmatpush.msra.mxu0 0.0
    %1129 = vmatpush.msra.mxu0 0.0
    %1130 = vmatpush.msra.mxu0 0.0
    %1131 = vmatpush.msra.mxu0 0.0
    %1132 = vmatpush.msra.mxu0 0.0
    %1133 = vmatpush.msra.mxu0 %v1036
    %1134 = vmatmul.f32.gmra.mxu0 %v1116
    %v1135 = vpop.f32.mrf.mxu0
    %v1136 = vadd.f32 0.0, %v1135
    %1137 = vdwg.mxu0
    %v1139 = vsel %vm285, %v1114, 0
    %1141 = vmatpush.msra.mxu0 0.0
    %1142 = vmatpush.msra.mxu0 0.0
    %1143 = vmatpush.msra.mxu0 0.0
    %1144 = vmatpush.msra.mxu0 0.0
    %1145 = vmatpush.msra.mxu0 0.0
    %1146 = vmatpush.msra.mxu0 0.0
    %1147 = vmatpush.msra.mxu0 0.0
    %1148 = vmatpush.msra.mxu0 0.0
    %1149 = vmatpush.msra.mxu0 0.0
    %1150 = vmatpush.msra.mxu0 0.0
    %1151 = vmatpush.msra.mxu0 0.0
    %1152 = vmatpush.msra.mxu0 0.0
    %1153 = vmatpush.msra.mxu0 0.0
    %1154 = vmatpush.msra.mxu0 0.0
    %1155 = vmatpush.msra.mxu0 0.0
    %1156 = vmatpush.msra.mxu0 %v1039
    %1157 = vmatmul.f32.gmra.mxu0 %v1139
    %v1158 = vpop.f32.mrf.mxu0
    %v1159 = vadd.f32 0.0, %v1158
    %1160 = vdwg.mxu0
    %s1161 = scalar_lea.vmem %s15, 24
    %v1162 = vld [vmem:[%s1161] sm:$0xff]
    %v1164 = vsel %vm285, %v1136, 0
    %v1167 = vsel %vm285, %v1159, 0
    %1169 = vmatpush.msra.mxu0 0.0
    %1170 = vmatpush.msra.mxu0 0.0
    %1171 = vmatpush.msra.mxu0 0.0
    %1172 = vmatpush.msra.mxu0 0.0
    %1173 = vmatpush.msra.mxu0 0.0
    %1174 = vmatpush.msra.mxu0 0.0
    %1175 = vmatpush.msra.mxu0 0.0
    %1176 = vmatpush.msra.mxu0 0.0
    %1177 = vmatpush.msra.mxu0 0.0
    %1178 = vmatpush.msra.mxu0 0.0
    %1179 = vmatpush.msra.mxu0 0.0
    %1180 = vmatpush.msra.mxu0 0.0
    %1181 = vmatpush.msra.mxu0 0.0
    %1182 = vmatpush.msra.mxu0 0.0
    %1183 = vmatpush.msra.mxu0 0.0
    %1184 = vmatpush.msra.mxu0 %v1162
    %1185 = vmatmul.f32.gmra.mxu0 %v1164
    %v1186 = vpop.f32.mrf.mxu0
    %v1187 = vadd.f32 0.0, %v1186
    %1188 = vmatmul.f32.gmra.mxu0 %v1167
    %v1189 = vpop.f32.mrf.mxu0
    %v1190 = vadd.f32 0.0, %v1189
    %1191 = vdwg.mxu0
    %v1192 = vadd.f32 %v940, %v1187
    %v1193 = vadd.f32 %v941, %v1190
    %v1194 = vadd.f32 %v179, %v1192
    %v1195 = vadd.f32 %v180, %v1193
    %v1196 = vld [vmem:[%s19] sm:$0x1]
    %v1197 = vld [vmem:[%s21] sm:$0x1]
    %v1198 = vsel %vm193, %v1194, 0.0
    %1199 = vadd.xlane.f32.xlu0 %v1198
    %v1200 = vpop.xlane.xlu0 %1199
    %v1201 = vsel %vm193, %v1195, 0.0
    %1202 = vadd.xlane.f32.xlu0 %v1201
    %v1203 = vpop.xlane.xlu0 %1202
    %v1204 = vrcp.pop 32.0
    %v1205 = vmul.f32 32.0, %v1204
    %v1206 = vsub.f32 1.0, %v1205
    %v1207 = vmul.f32 %v1204, %v1206
    %v1208 = vadd.f32 %v1204, %v1207
    %vm1209 = vweird.f32 %v1204
    %v1210 = vsel %vm1209, %v1204, %v1208
    %v1211 = vmul.f32 %v1200, %v1210
    %v1212 = vmul.f32 %v1203, %v1210
    %v1213 = vsub.f32 %v1194, %v1211
    %v1214 = vsub.f32 %v1195, %v1212
    %v1215 = vmul.f32 %v1213, %v1213
    %v1216 = vmul.f32 %v1214, %v1214
    %v1217 = vsel %vm193, %v1215, 0.0
    %1218 = vadd.xlane.f32.xlu0 %v1217
    %v1219 = vpop.xlane.xlu0 %1218
    %v1220 = vsel %vm193, %v1216, 0.0
    %1221 = vadd.xlane.f32.xlu0 %v1220
    %v1222 = vpop.xlane.xlu0 %1221
    %v1223 = vmul.f32 %v1219, %v1210
    %v1224 = vmul.f32 %v1222, %v1210
    %v1225 = vadd.f32 %v1223, 1e-05
    %v1226 = vadd.f32 %v1224, 1e-05
    %v1227 = vrsqrt.pop %v1225
    %v1228 = vmul.f32 %v1227, %v1225
    %v1229 = vmul.f32 %v1228, %v1227
    %v1230 = vmul.f32 0.5, %v1229
    %v1231 = vsub.f32 1.5, %v1230
    %v1232 = vmul.f32 %v1227, %v1231
    %vm1233 = vweird.f32 %v1225
    %vm1234 = vweird.f32 %v1227
    %vm1235 = vmor %vm1233, %vm1234
    %v1236 = vsel %vm1235, %v1227, %v1232
    %v1237 = vrsqrt.pop %v1226
    %v1238 = vmul.f32 %v1237, %v1226
    %v1239 = vmul.f32 %v1238, %v1237
    %v1240 = vmul.f32 0.5, %v1239
    %v1241 = vsub.f32 1.5, %v1240
    %v1242 = vmul.f32 %v1237, %v1241
    %vm1243 = vweird.f32 %v1226
    %vm1244 = vweird.f32 %v1237
    %vm1245 = vmor %vm1243, %vm1244
    %v1246 = vsel %vm1245, %v1237, %v1242
    %v1247 = vmul.f32 %v1213, %v1236
    %v1248 = vmul.f32 %v1214, %v1246
    %v1250 = vperm.slane %v1196, 0
    %v1252 = vmul.f32 %v1247, %v1250
    %v1253 = vmul.f32 %v1248, %v1250
    %v1255 = vperm.slane %v1197, 0
    %v1257 = vadd.f32 %v1252, %v1255
    %v1258 = vadd.f32 %v1253, %v1255
    %v1259 = vld [vmem:[%s23] sm:$0xff]
    %v1260 = vld [vmem:[%s23 + $0x8] sm:$0xff]
    %v1261 = vld [vmem:[%s23 + $0x10] sm:$0xff]
    %v1262 = vld [vmem:[%s23 + $0x18] sm:$0xff]
    %v1263 = vld [vmem:[%s25] sm:$0x1]
    %v1265 = vperm.slane %v1263, 0
    %v1268 = vsel %vm193, %v1257, 0
    %v1271 = vsel %vm193, %v1258, 0
    %1273 = vmatpush.msra.mxu0 0.0
    %1274 = vmatpush.msra.mxu0 0.0
    %1275 = vmatpush.msra.mxu0 0.0
    %1276 = vmatpush.msra.mxu0 0.0
    %1277 = vmatpush.msra.mxu0 0.0
    %1278 = vmatpush.msra.mxu0 0.0
    %1279 = vmatpush.msra.mxu0 0.0
    %1280 = vmatpush.msra.mxu0 0.0
    %1281 = vmatpush.msra.mxu0 0.0
    %1282 = vmatpush.msra.mxu0 0.0
    %1283 = vmatpush.msra.mxu0 0.0
    %1284 = vmatpush.msra.mxu0 0.0
    %1285 = vmatpush.msra.mxu0 %v1262
    %1286 = vmatpush.msra.mxu0 %v1261
    %1287 = vmatpush.msra.mxu0 %v1260
    %1288 = vmatpush.msra.mxu0 %v1259
    %1289 = vmatmul.f32.gmra.mxu0 %v1268
    %v1290 = vpop.f32.mrf.mxu0
    %v1291 = vadd.f32 %v1265, %v1290
    %1292 = vmatmul.f32.gmra.mxu0 %v1271
    %v1293 = vpop.f32.mrf.mxu0
    %v1294 = vadd.f32 %v1265, %v1293
    %1295 = vdwg.mxu0
    %v1296 = vmax.f32 %v1291, 0.0
    %v1297 = vmax.f32 %v1294, 0.0
    %v1298 = vld [vmem:[%s27] sm:$0xff]
    %v1299 = vld [vmem:[%s27 + $0x8] sm:$0xff]
    %v1300 = vld [vmem:[%s27 + $0x10] sm:$0xff]
    %v1301 = vld [vmem:[%s27 + $0x18] sm:$0xff]
    %v1302 = vld [vmem:[%s27 + $0x20] sm:$0xff]
    %v1303 = vld [vmem:[%s27 + $0x28] sm:$0xff]
    %v1304 = vld [vmem:[%s27 + $0x30] sm:$0xff]
    %v1305 = vld [vmem:[%s27 + $0x38] sm:$0xff]
    %v1306 = vld [vmem:[%s29] sm:$0x1]
    %v1308 = vperm.slane %v1306, 0
    %vm1310 = vcmask 523264
    %v1312 = vsel %vm1310, %v1296, 0
    %v1315 = vsel %vm1310, %v1297, 0
    %1317 = vmatpush.msra.mxu0 0.0
    %1318 = vmatpush.msra.mxu0 0.0
    %1319 = vmatpush.msra.mxu0 0.0
    %1320 = vmatpush.msra.mxu0 0.0
    %1321 = vmatpush.msra.mxu0 0.0
    %1322 = vmatpush.msra.mxu0 0.0
    %1323 = vmatpush.msra.mxu0 0.0
    %1324 = vmatpush.msra.mxu0 0.0
    %1325 = vmatpush.msra.mxu0 %v1305
    %1326 = vmatpush.msra.mxu0 %v1304
    %1327 = vmatpush.msra.mxu0 %v1303
    %1328 = vmatpush.msra.mxu0 %v1302
    %1329 = vmatpush.msra.mxu0 %v1301
    %1330 = vmatpush.msra.mxu0 %v1300
    %1331 = vmatpush.msra.mxu0 %v1299
    %1332 = vmatpush.msra.mxu0 %v1298
    %1333 = vmatmul.f32.gmra.mxu0 %v1312
    %v1334 = vpop.f32.mrf.mxu0
    %v1335 = vadd.f32 %v1308, %v1334
    %1336 = vmatmul.f32.gmra.mxu0 %v1315
    %v1337 = vpop.f32.mrf.mxu0
    %v1338 = vadd.f32 %v1308, %v1337
    %1339 = vdwg.mxu0
    %v1340 = vadd.f32 %v1257, %v1335
    %v1341 = vadd.f32 %v1258, %v1338
    %v1342 = vld [vmem:[%s31] sm:$0x1]
    %v1343 = vld [vmem:[%s33] sm:$0x1]
    %v1344 = vsel %vm193, %v1340, 0.0
    %1345 = vadd.xlane.f32.xlu0 %v1344
    %v1346 = vpop.xlane.xlu0 %1345
    %v1347 = vsel %vm193, %v1341, 0.0
    %1348 = vadd.xlane.f32.xlu0 %v1347
    %v1349 = vpop.xlane.xlu0 %1348
    %v1350 = vmul.f32 %v1346, %v1210
    %v1351 = vmul.f32 %v1349, %v1210
    %v1352 = vsub.f32 %v1340, %v1350
    %v1353 = vsub.f32 %v1341, %v1351
    %v1354 = vmul.f32 %v1352, %v1352
    %v1355 = vmul.f32 %v1353, %v1353
    %v1356 = vsel %vm193, %v1354, 0.0
    %1357 = vadd.xlane.f32.xlu0 %v1356
    %v1358 = vpop.xlane.xlu0 %1357
    %v1359 = vsel %vm193, %v1355, 0.0
    %1360 = vadd.xlane.f32.xlu0 %v1359
    %v1361 = vpop.xlane.xlu0 %1360
    %v1362 = vmul.f32 %v1358, %v1210
    %v1363 = vmul.f32 %v1361, %v1210
    %v1364 = vadd.f32 %v1362, 1e-05
    %v1365 = vadd.f32 %v1363, 1e-05
    %v1366 = vrsqrt.pop %v1364
    %v1367 = vmul.f32 %v1366, %v1364
    %v1368 = vmul.f32 %v1367, %v1366
    %v1369 = vmul.f32 0.5, %v1368
    %v1370 = vsub.f32 1.5, %v1369
    %v1371 = vmul.f32 %v1366, %v1370
    %vm1372 = vweird.f32 %v1364
    %vm1373 = vweird.f32 %v1366
    %vm1374 = vmor %vm1372, %vm1373
    %v1375 = vsel %vm1374, %v1366, %v1371
    %v1376 = vrsqrt.pop %v1365
    %v1377 = vmul.f32 %v1376, %v1365
    %v1378 = vmul.f32 %v1377, %v1376
    %v1379 = vmul.f32 0.5, %v1378
    %v1380 = vsub.f32 1.5, %v1379
    %v1381 = vmul.f32 %v1376, %v1380
    %vm1382 = vweird.f32 %v1365
    %vm1383 = vweird.f32 %v1376
    %vm1384 = vmor %vm1382, %vm1383
    %v1385 = vsel %vm1384, %v1376, %v1381
    %v1386 = vmul.f32 %v1352, %v1375
    %v1387 = vmul.f32 %v1353, %v1385
    %v1389 = vperm.slane %v1342, 0
    %v1391 = vmul.f32 %v1386, %v1389
    %v1392 = vmul.f32 %v1387, %v1389
    %v1394 = vperm.slane %v1343, 0
    %v1396 = vadd.f32 %v1391, %v1394
    %v1397 = vadd.f32 %v1392, %v1394
    %v1398 = vld [vmem:[%s49] sm:$0x1]
    %v1400 = vperm.slane %v1398, 0
    %v1402 = vld [vmem:[%s35] sm:$0xff]
    %v1403 = vld [vmem:[%s35 + $0x8] sm:$0xff]
    %v1404 = vld [vmem:[%s35 + $0x10] sm:$0xff]
    %v1405 = vld [vmem:[%s35 + $0x18] sm:$0xff]
    %v1406 = vld [vmem:[%s37] sm:$0x1]
    %v1408 = vperm.slane %v1406, 0
    %v1411 = vsel %vm193, %v1396, 0
    %v1414 = vsel %vm193, %v1397, 0
    %1416 = vmatpush.msra.mxu0 0.0
    %1417 = vmatpush.msra.mxu0 0.0
    %1418 = vmatpush.msra.mxu0 0.0
    %1419 = vmatpush.msra.mxu0 0.0
    %1420 = vmatpush.msra.mxu0 0.0
    %1421 = vmatpush.msra.mxu0 0.0
    %1422 = vmatpush.msra.mxu0 0.0
    %1423 = vmatpush.msra.mxu0 0.0
    %1424 = vmatpush.msra.mxu0 0.0
    %1425 = vmatpush.msra.mxu0 0.0
    %1426 = vmatpush.msra.mxu0 0.0
    %1427 = vmatpush.msra.mxu0 0.0
    %1428 = vmatpush.msra.mxu0 %v1405
    %1429 = vmatpush.msra.mxu0 %v1404
    %1430 = vmatpush.msra.mxu0 %v1403
    %1431 = vmatpush.msra.mxu0 %v1402
    %1432 = vmatmul.f32.gmra.mxu0 %v1411
    %v1433 = vpop.f32.mrf.mxu0
    %v1434 = vadd.f32 %v1408, %v1433
    %1435 = vmatmul.f32.gmra.mxu0 %v1414
    %v1436 = vpop.f32.mrf.mxu0
    %v1437 = vadd.f32 %v1408, %v1436
    %1438 = vdwg.mxu0
    %v1439 = vld [vmem:[%s39] sm:$0xff]
    %v1440 = vld [vmem:[%s39 + $0x8] sm:$0xff]
    %v1441 = vld [vmem:[%s39 + $0x10] sm:$0xff]
    %v1442 = vld [vmem:[%s39 + $0x18] sm:$0xff]
    %v1443 = vld [vmem:[%s41] sm:$0x1]
    %v1445 = vperm.slane %v1443, 0
    %1447 = vmatpush.msra.mxu0 0.0
    %1448 = vmatpush.msra.mxu0 0.0
    %1449 = vmatpush.msra.mxu0 0.0
    %1450 = vmatpush.msra.mxu0 0.0
    %1451 = vmatpush.msra.mxu0 0.0
    %1452 = vmatpush.msra.mxu0 0.0
    %1453 = vmatpush.msra.mxu0 0.0
    %1454 = vmatpush.msra.mxu0 0.0
    %1455 = vmatpush.msra.mxu0 0.0
    %1456 = vmatpush.msra.mxu0 0.0
    %1457 = vmatpush.msra.mxu0 0.0
    %1458 = vmatpush.msra.mxu0 0.0
    %1459 = vmatpush.msra.mxu0 %v1442
    %1460 = vmatpush.msra.mxu0 %v1441
    %1461 = vmatpush.msra.mxu0 %v1440
    %1462 = vmatpush.msra.mxu0 %v1439
    %1463 = vmatmul.f32.gmra.mxu0 %v1411
    %v1464 = vpop.f32.mrf.mxu0
    %v1465 = vadd.f32 %v1445, %v1464
    %1466 = vmatmul.f32.gmra.mxu0 %v1414
    %v1467 = vpop.f32.mrf.mxu0
    %v1468 = vadd.f32 %v1445, %v1467
    %1469 = vdwg.mxu0
    %v1470 = vld [vmem:[%s43] sm:$0xff]
    %v1471 = vld [vmem:[%s43 + $0x8] sm:$0xff]
    %v1472 = vld [vmem:[%s43 + $0x10] sm:$0xff]
    %v1473 = vld [vmem:[%s43 + $0x18] sm:$0xff]
    %v1474 = vld [vmem:[%s45] sm:$0x1]
    %v1476 = vperm.slane %v1474, 0
    %1478 = vmatpush.msra.mxu0 0.0
    %1479 = vmatpush.msra.mxu0 0.0
    %1480 = vmatpush.msra.mxu0 0.0
    %1481 = vmatpush.msra.mxu0 0.0
    %1482 = vmatpush.msra.mxu0 0.0
    %1483 = vmatpush.msra.mxu0 0.0
    %1484 = vmatpush.msra.mxu0 0.0
    %1485 = vmatpush.msra.mxu0 0.0
    %1486 = vmatpush.msra.mxu0 0.0
    %1487 = vmatpush.msra.mxu0 0.0
    %1488 = vmatpush.msra.mxu0 0.0
    %1489 = vmatpush.msra.mxu0 0.0
    %1490 = vmatpush.msra.mxu0 %v1473
    %1491 = vmatpush.msra.mxu0 %v1472
    %1492 = vmatpush.msra.mxu0 %v1471
    %1493 = vmatpush.msra.mxu0 %v1470
    %1494 = vmatmul.f32.gmra.mxu0 %v1411
    %v1495 = vpop.f32.mrf.mxu0
    %v1496 = vadd.f32 %v1476, %v1495
    %1497 = vmatmul.f32.gmra.mxu0 %v1414
    %v1498 = vpop.f32.mrf.mxu0
    %v1499 = vadd.f32 %v1476, %v1498
    %1500 = vdwg.mxu0
    %v1502 = vsel %vm285, %v1434, 0
    %v1505 = vsel %vm285, %v1465, 0
    %1507 = vmatpush.xpose.msra.mxu0 0.0
    %1508 = vmatpush.xpose.msra.mxu0 0.0
    %1509 = vmatpush.xpose.msra.mxu0 0.0
    %1510 = vmatpush.xpose.msra.mxu0 0.0
    %1511 = vmatpush.xpose.msra.mxu0 0.0
    %1512 = vmatpush.xpose.msra.mxu0 0.0
    %1513 = vmatpush.xpose.msra.mxu0 0.0
    %1514 = vmatpush.xpose.msra.mxu0 0.0
    %1515 = vmatpush.xpose.msra.mxu0 0.0
    %1516 = vmatpush.xpose.msra.mxu0 0.0
    %1517 = vmatpush.xpose.msra.mxu0 0.0
    %1518 = vmatpush.xpose.msra.mxu0 0.0
    %1519 = vmatpush.xpose.msra.mxu0 0.0
    %1520 = vmatpush.xpose.msra.mxu0 0.0
    %1521 = vmatpush.xpose.msra.mxu0 0.0
    %1522 = vmatpush.xpose.msra.mxu0 %v1505
    %1523 = vmatmul.f32.gmra.mxu0 %v1502
    %v1524 = vpop.f32.mrf.mxu0
    %v1525 = vadd.f32 0.0, %v1524
    %1526 = vdwg.mxu0
    %v1528 = vsel %vm285, %v1437, 0
    %v1531 = vsel %vm285, %v1468, 0
    %1533 = vmatpush.xpose.msra.mxu0 0.0
    %1534 = vmatpush.xpose.msra.mxu0 0.0
    %1535 = vmatpush.xpose.msra.mxu0 0.0
    %1536 = vmatpush.xpose.msra.mxu0 0.0
    %1537 = vmatpush.xpose.msra.mxu0 0.0
    %1538 = vmatpush.xpose.msra.mxu0 0.0
    %1539 = vmatpush.xpose.msra.mxu0 0.0
    %1540 = vmatpush.xpose.msra.mxu0 0.0
    %1541 = vmatpush.xpose.msra.mxu0 0.0
    %1542 = vmatpush.xpose.msra.mxu0 0.0
    %1543 = vmatpush.xpose.msra.mxu0 0.0
    %1544 = vmatpush.xpose.msra.mxu0 0.0
    %1545 = vmatpush.xpose.msra.mxu0 0.0
    %1546 = vmatpush.xpose.msra.mxu0 0.0
    %1547 = vmatpush.xpose.msra.mxu0 0.0
    %1548 = vmatpush.xpose.msra.mxu0 %v1531
    %1549 = vmatmul.f32.gmra.mxu0 %v1528
    %v1550 = vpop.f32.mrf.mxu0
    %v1551 = vadd.f32 0.0, %v1550
    %1552 = vdwg.mxu0
    %v1553 = vsel %vm285, %v1525, -inf
    %1554 = vmax.xlane.f32.xlu0 %v1553
    %v1555 = vpop.xlane.xlu0 %1554
    %v1556 = vsel %vm285, %v1551, -inf
    %1557 = vmax.xlane.f32.xlu0 %v1556
    %v1558 = vpop.xlane.xlu0 %1557
    %v1559 = vsub.f32 %v1525, %v1555
    %v1560 = vsub.f32 %v1551, %v1558
    %v1561 = vmul.f32 %v1559, 1.442695
    %v1562 = vpow.pop %v1561
    %v1563 = vmul.f32 %v1560, 1.442695
    %v1564 = vpow.pop %v1563
    %v1565 = vsel %vm285, %v1562, 0.0
    %1566 = vadd.xlane.f32.xlu0 %v1565
    %v1567 = vpop.xlane.xlu0 %1566
    %v1568 = vsel %vm285, %v1564, 0.0
    %1569 = vadd.xlane.f32.xlu0 %v1568
    %v1570 = vpop.xlane.xlu0 %1569
    %v1571 = vrcp.pop %v1567
    %v1572 = vrcp.pop %v1570
    %v1573 = vmul.f32 %v1562, %v1571
    %v1574 = vmul.f32 %v1564, %v1572
    %v1576 = vsel %vm285, %v1573, 0
    %1578 = vmatpush.msra.mxu0 0.0
    %1579 = vmatpush.msra.mxu0 0.0
    %1580 = vmatpush.msra.mxu0 0.0
    %1581 = vmatpush.msra.mxu0 0.0
    %1582 = vmatpush.msra.mxu0 0.0
    %1583 = vmatpush.msra.mxu0 0.0
    %1584 = vmatpush.msra.mxu0 0.0
    %1585 = vmatpush.msra.mxu0 0.0
    %1586 = vmatpush.msra.mxu0 0.0
    %1587 = vmatpush.msra.mxu0 0.0
    %1588 = vmatpush.msra.mxu0 0.0
    %1589 = vmatpush.msra.mxu0 0.0
    %1590 = vmatpush.msra.mxu0 0.0
    %1591 = vmatpush.msra.mxu0 0.0
    %1592 = vmatpush.msra.mxu0 0.0
    %1593 = vmatpush.msra.mxu0 %v1496
    %1594 = vmatmul.f32.gmra.mxu0 %v1576
    %v1595 = vpop.f32.mrf.mxu0
    %v1596 = vadd.f32 0.0, %v1595
    %1597 = vdwg.mxu0
    %v1599 = vsel %vm285, %v1574, 0
    %1601 = vmatpush.msra.mxu0 0.0
    %1602 = vmatpush.msra.mxu0 0.0
    %1603 = vmatpush.msra.mxu0 0.0
    %1604 = vmatpush.msra.mxu0 0.0
    %1605 = vmatpush.msra.mxu0 0.0
    %1606 = vmatpush.msra.mxu0 0.0
    %1607 = vmatpush.msra.mxu0 0.0
    %1608 = vmatpush.msra.mxu0 0.0
    %1609 = vmatpush.msra.mxu0 0.0
    %1610 = vmatpush.msra.mxu0 0.0
    %1611 = vmatpush.msra.mxu0 0.0
    %1612 = vmatpush.msra.mxu0 0.0
    %1613 = vmatpush.msra.mxu0 0.0
    %1614 = vmatpush.msra.mxu0 0.0
    %1615 = vmatpush.msra.mxu0 0.0
    %1616 = vmatpush.msra.mxu0 %v1499
    %1617 = vmatmul.f32.gmra.mxu0 %v1599
    %v1618 = vpop.f32.mrf.mxu0
    %v1619 = vadd.f32 0.0, %v1618
    %1620 = vdwg.mxu0
    %v1621 = vld [vmem:[%s47] sm:$0xff]
    %v1623 = vsel %vm285, %v1596, 0
    %v1626 = vsel %vm285, %v1619, 0
    %1628 = vmatpush.msra.mxu0 0.0
    %1629 = vmatpush.msra.mxu0 0.0
    %1630 = vmatpush.msra.mxu0 0.0
    %1631 = vmatpush.msra.mxu0 0.0
    %1632 = vmatpush.msra.mxu0 0.0
    %1633 = vmatpush.msra.mxu0 0.0
    %1634 = vmatpush.msra.mxu0 0.0
    %1635 = vmatpush.msra.mxu0 0.0
    %1636 = vmatpush.msra.mxu0 0.0
    %1637 = vmatpush.msra.mxu0 0.0
    %1638 = vmatpush.msra.mxu0 0.0
    %1639 = vmatpush.msra.mxu0 0.0
    %1640 = vmatpush.msra.mxu0 0.0
    %1641 = vmatpush.msra.mxu0 0.0
    %1642 = vmatpush.msra.mxu0 0.0
    %1643 = vmatpush.msra.mxu0 %v1621
    %1644 = vmatmul.f32.gmra.mxu0 %v1623
    %v1645 = vpop.f32.mrf.mxu0
    %v1646 = vadd.f32 0.0, %v1645
    %1647 = vmatmul.f32.gmra.mxu0 %v1626
    %v1648 = vpop.f32.mrf.mxu0
    %v1649 = vadd.f32 0.0, %v1648
    %1650 = vdwg.mxu0
    %v1651 = vadd.f32 %v1400, %v1646
    %v1652 = vadd.f32 %v1400, %v1649
    %s1653 = scalar_lea.vmem %s35, 32
    %v1654 = vld [vmem:[%s1653] sm:$0xff]
    %v1655 = vld [vmem:[%s1653 + $0x8] sm:$0xff]
    %v1656 = vld [vmem:[%s1653 + $0x10] sm:$0xff]
    %v1657 = vld [vmem:[%s1653 + $0x18] sm:$0xff]
    %s1658 = scalar_lea.vmem %s37, 1
    %v1659 = vld [vmem:[%s1658] sm:$0x1]
    %v1661 = vperm.slane %v1659, 0
    %1663 = vmatpush.msra.mxu0 0.0
    %1664 = vmatpush.msra.mxu0 0.0
    %1665 = vmatpush.msra.mxu0 0.0
    %1666 = vmatpush.msra.mxu0 0.0
    %1667 = vmatpush.msra.mxu0 0.0
    %1668 = vmatpush.msra.mxu0 0.0
    %1669 = vmatpush.msra.mxu0 0.0
    %1670 = vmatpush.msra.mxu0 0.0
    %1671 = vmatpush.msra.mxu0 0.0
    %1672 = vmatpush.msra.mxu0 0.0
    %1673 = vmatpush.msra.mxu0 0.0
    %1674 = vmatpush.msra.mxu0 0.0
    %1675 = vmatpush.msra.mxu0 %v1657
    %1676 = vmatpush.msra.mxu0 %v1656
    %1677 = vmatpush.msra.mxu0 %v1655
    %1678 = vmatpush.msra.mxu0 %v1654
    %1679 = vmatmul.f32.gmra.mxu0 %v1411
    %v1680 = vpop.f32.mrf.mxu0
    %v1681 = vadd.f32 %v1661, %v1680
    %1682 = vmatmul.f32.gmra.mxu0 %v1414
    %v1683 = vpop.f32.mrf.mxu0
    %v1684 = vadd.f32 %v1661, %v1683
    %1685 = vdwg.mxu0
    %s1686 = scalar_lea.vmem %s39, 32
    %v1687 = vld [vmem:[%s1686] sm:$0xff]
    %v1688 = vld [vmem:[%s1686 + $0x8] sm:$0xff]
    %v1689 = vld [vmem:[%s1686 + $0x10] sm:$0xff]
    %v1690 = vld [vmem:[%s1686 + $0x18] sm:$0xff]
    %s1691 = scalar_lea.vmem %s41, 1
    %v1692 = vld [vmem:[%s1691] sm:$0x1]
    %v1694 = vperm.slane %v1692, 0
    %1696 = vmatpush.msra.mxu0 0.0
    %1697 = vmatpush.msra.mxu0 0.0
    %1698 = vmatpush.msra.mxu0 0.0
    %1699 = vmatpush.msra.mxu0 0.0
    %1700 = vmatpush.msra.mxu0 0.0
    %1701 = vmatpush.msra.mxu0 0.0
    %1702 = vmatpush.msra.mxu0 0.0
    %1703 = vmatpush.msra.mxu0 0.0
    %1704 = vmatpush.msra.mxu0 0.0
    %1705 = vmatpush.msra.mxu0 0.0
    %1706 = vmatpush.msra.mxu0 0.0
    %1707 = vmatpush.msra.mxu0 0.0
    %1708 = vmatpush.msra.mxu0 %v1690
    %1709 = vmatpush.msra.mxu0 %v1689
    %1710 = vmatpush.msra.mxu0 %v1688
    %1711 = vmatpush.msra.mxu0 %v1687
    %1712 = vmatmul.f32.gmra.mxu0 %v1411
    %v1713 = vpop.f32.mrf.mxu0
    %v1714 = vadd.f32 %v1694, %v1713
    %1715 = vmatmul.f32.gmra.mxu0 %v1414
    %v1716 = vpop.f32.mrf.mxu0
    %v1717 = vadd.f32 %v1694, %v1716
    %1718 = vdwg.mxu0
    %s1719 = scalar_lea.vmem %s43, 32
    %v1720 = vld [vmem:[%s1719] sm:$0xff]
    %v1721 = vld [vmem:[%s1719 + $0x8] sm:$0xff]
    %v1722 = vld [vmem:[%s1719 + $0x10] sm:$0xff]
    %v1723 = vld [vmem:[%s1719 + $0x18] sm:$0xff]
    %s1724 = scalar_lea.vmem %s45, 1
    %v1725 = vld [vmem:[%s1724] sm:$0x1]
    %v1727 = vperm.slane %v1725, 0
    %1729 = vmatpush.msra.mxu0 0.0
    %1730 = vmatpush.msra.mxu0 0.0
    %1731 = vmatpush.msra.mxu0 0.0
    %1732 = vmatpush.msra.mxu0 0.0
    %1733 = vmatpush.msra.mxu0 0.0
    %1734 = vmatpush.msra.mxu0 0.0
    %1735 = vmatpush.msra.mxu0 0.0
    %1736 = vmatpush.msra.mxu0 0.0
    %1737 = vmatpush.msra.mxu0 0.0
    %1738 = vmatpush.msra.mxu0 0.0
    %1739 = vmatpush.msra.mxu0 0.0
    %1740 = vmatpush.msra.mxu0 0.0
    %1741 = vmatpush.msra.mxu0 %v1723
    %1742 = vmatpush.msra.mxu0 %v1722
    %1743 = vmatpush.msra.mxu0 %v1721
    %1744 = vmatpush.msra.mxu0 %v1720
    %1745 = vmatmul.f32.gmra.mxu0 %v1411
    %v1746 = vpop.f32.mrf.mxu0
    %v1747 = vadd.f32 %v1727, %v1746
    %1748 = vmatmul.f32.gmra.mxu0 %v1414
    %v1749 = vpop.f32.mrf.mxu0
    %v1750 = vadd.f32 %v1727, %v1749
    %1751 = vdwg.mxu0
    %v1753 = vsel %vm285, %v1681, 0
    %v1756 = vsel %vm285, %v1714, 0
    %1758 = vmatpush.xpose.msra.mxu0 0.0
    %1759 = vmatpush.xpose.msra.mxu0 0.0
    %1760 = vmatpush.xpose.msra.mxu0 0.0
    %1761 = vmatpush.xpose.msra.mxu0 0.0
    %1762 = vmatpush.xpose.msra.mxu0 0.0
    %1763 = vmatpush.xpose.msra.mxu0 0.0
    %1764 = vmatpush.xpose.msra.mxu0 0.0
    %1765 = vmatpush.xpose.msra.mxu0 0.0
    %1766 = vmatpush.xpose.msra.mxu0 0.0
    %1767 = vmatpush.xpose.msra.mxu0 0.0
    %1768 = vmatpush.xpose.msra.mxu0 0.0
    %1769 = vmatpush.xpose.msra.mxu0 0.0
    %1770 = vmatpush.xpose.msra.mxu0 0.0
    %1771 = vmatpush.xpose.msra.mxu0 0.0
    %1772 = vmatpush.xpose.msra.mxu0 0.0
    %1773 = vmatpush.xpose.msra.mxu0 %v1756
    %1774 = vmatmul.f32.gmra.mxu0 %v1753
    %v1775 = vpop.f32.mrf.mxu0
    %v1776 = vadd.f32 0.0, %v1775
    %1777 = vdwg.mxu0
    %v1779 = vsel %vm285, %v1684, 0
    %v1782 = vsel %vm285, %v1717, 0
    %1784 = vmatpush.xpose.msra.mxu0 0.0
    %1785 = vmatpush.xpose.msra.mxu0 0.0
    %1786 = vmatpush.xpose.msra.mxu0 0.0
    %1787 = vmatpush.xpose.msra.mxu0 0.0
    %1788 = vmatpush.xpose.msra.mxu0 0.0
    %1789 = vmatpush.xpose.msra.mxu0 0.0
    %1790 = vmatpush.xpose.msra.mxu0 0.0
    %1791 = vmatpush.xpose.msra.mxu0 0.0
    %1792 = vmatpush.xpose.msra.mxu0 0.0
    %1793 = vmatpush.xpose.msra.mxu0 0.0
    %1794 = vmatpush.xpose.msra.mxu0 0.0
    %1795 = vmatpush.xpose.msra.mxu0 0.0
    %1796 = vmatpush.xpose.msra.mxu0 0.0
    %1797 = vmatpush.xpose.msra.mxu0 0.0
    %1798 = vmatpush.xpose.msra.mxu0 0.0
    %1799 = vmatpush.xpose.msra.mxu0 %v1782
    %1800 = vmatmul.f32.gmra.mxu0 %v1779
    %v1801 = vpop.f32.mrf.mxu0
    %v1802 = vadd.f32 0.0, %v1801
    %1803 = vdwg.mxu0
    %v1804 = vsel %vm285, %v1776, -inf
    %1805 = vmax.xlane.f32.xlu0 %v1804
    %v1806 = vpop.xlane.xlu0 %1805
    %v1807 = vsel %vm285, %v1802, -inf
    %1808 = vmax.xlane.f32.xlu0 %v1807
    %v1809 = vpop.xlane.xlu0 %1808
    %v1810 = vsub.f32 %v1776, %v1806
    %v1811 = vsub.f32 %v1802, %v1809
    %v1812 = vmul.f32 %v1810, 1.442695
    %v1813 = vpow.pop %v1812
    %v1814 = vmul.f32 %v1811, 1.442695
    %v1815 = vpow.pop %v1814
    %v1816 = vsel %vm285, %v1813, 0.0
    %1817 = vadd.xlane.f32.xlu0 %v1816
    %v1818 = vpop.xlane.xlu0 %1817
    %v1819 = vsel %vm285, %v1815, 0.0
    %1820 = vadd.xlane.f32.xlu0 %v1819
    %v1821 = vpop.xlane.xlu0 %1820
    %v1822 = vrcp.pop %v1818
    %v1823 = vrcp.pop %v1821
    %v1824 = vmul.f32 %v1813, %v1822
    %v1825 = vmul.f32 %v1815, %v1823
    %v1827 = vsel %vm285, %v1824, 0
    %1829 = vmatpush.msra.mxu0 0.0
    %1830 = vmatpush.msra.mxu0 0.0
    %1831 = vmatpush.msra.mxu0 0.0
    %1832 = vmatpush.msra.mxu0 0.0
    %1833 = vmatpush.msra.mxu0 0.0
    %1834 = vmatpush.msra.mxu0 0.0
    %1835 = vmatpush.msra.mxu0 0.0
    %1836 = vmatpush.msra.mxu0 0.0
    %1837 = vmatpush.msra.mxu0 0.0
    %1838 = vmatpush.msra.mxu0 0.0
    %1839 = vmatpush.msra.mxu0 0.0
    %1840 = vmatpush.msra.mxu0 0.0
    %1841 = vmatpush.msra.mxu0 0.0
    %1842 = vmatpush.msra.mxu0 0.0
    %1843 = vmatpush.msra.mxu0 0.0
    %1844 = vmatpush.msra.mxu0 %v1747
    %1845 = vmatmul.f32.gmra.mxu0 %v1827
    %v1846 = vpop.f32.mrf.mxu0
    %v1847 = vadd.f32 0.0, %v1846
    %1848 = vdwg.mxu0
    %v1850 = vsel %vm285, %v1825, 0
    %1852 = vmatpush.msra.mxu0 0.0
    %1853 = vmatpush.msra.mxu0 0.0
    %1854 = vmatpush.msra.mxu0 0.0
    %1855 = vmatpush.msra.mxu0 0.0
    %1856 = vmatpush.msra.mxu0 0.0
    %1857 = vmatpush.msra.mxu0 0.0
    %1858 = vmatpush.msra.mxu0 0.0
    %1859 = vmatpush.msra.mxu0 0.0
    %1860 = vmatpush.msra.mxu0 0.0
    %1861 = vmatpush.msra.mxu0 0.0
    %1862 = vmatpush.msra.mxu0 0.0
    %1863 = vmatpush.msra.mxu0 0.0
    %1864 = vmatpush.msra.mxu0 0.0
    %1865 = vmatpush.msra.mxu0 0.0
    %1866 = vmatpush.msra.mxu0 0.0
    %1867 = vmatpush.msra.mxu0 %v1750
    %1868 = vmatmul.f32.gmra.mxu0 %v1850
    %v1869 = vpop.f32.mrf.mxu0
    %v1870 = vadd.f32 0.0, %v1869
    %1871 = vdwg.mxu0
    %s1872 = scalar_lea.vmem %s47, 8
    %v1873 = vld [vmem:[%s1872] sm:$0xff]
    %v1875 = vsel %vm285, %v1847, 0
    %v1878 = vsel %vm285, %v1870, 0
    %1880 = vmatpush.msra.mxu0 0.0
    %1881 = vmatpush.msra.mxu0 0.0
    %1882 = vmatpush.msra.mxu0 0.0
    %1883 = vmatpush.msra.mxu0 0.0
    %1884 = vmatpush.msra.mxu0 0.0
    %1885 = vmatpush.msra.mxu0 0.0
    %1886 = vmatpush.msra.mxu0 0.0
    %1887 = vmatpush.msra.mxu0 0.0
    %1888 = vmatpush.msra.mxu0 0.0
    %1889 = vmatpush.msra.mxu0 0.0
    %1890 = vmatpush.msra.mxu0 0.0
    %1891 = vmatpush.msra.mxu0 0.0
    %1892 = vmatpush.msra.mxu0 0.0
    %1893 = vmatpush.msra.mxu0 0.0
    %1894 = vmatpush.msra.mxu0 0.0
    %1895 = vmatpush.msra.mxu0 %v1873
    %1896 = vmatmul.f32.gmra.mxu0 %v1875
    %v1897 = vpop.f32.mrf.mxu0
    %v1898 = vadd.f32 0.0, %v1897
    %1899 = vmatmul.f32.gmra.mxu0 %v1878
    %v1900 = vpop.f32.mrf.mxu0
    %v1901 = vadd.f32 0.0, %v1900
    %1902 = vdwg.mxu0
    %v1903 = vadd.f32 %v1651, %v1898
    %v1904 = vadd.f32 %v1652, %v1901
    %s1905 = scalar_lea.vmem %s35, 64
    %v1906 = vld [vmem:[%s1905] sm:$0xff]
    %v1907 = vld [vmem:[%s1905 + $0x8] sm:$0xff]
    %v1908 = vld [vmem:[%s1905 + $0x10] sm:$0xff]
    %v1909 = vld [vmem:[%s1905 + $0x18] sm:$0xff]
    %s1910 = scalar_lea.vmem %s37, 2
    %v1911 = vld [vmem:[%s1910] sm:$0x1]
    %v1913 = vperm.slane %v1911, 0
    %1915 = vmatpush.msra.mxu0 0.0
    %1916 = vmatpush.msra.mxu0 0.0
    %1917 = vmatpush.msra.mxu0 0.0
    %1918 = vmatpush.msra.mxu0 0.0
    %1919 = vmatpush.msra.mxu0 0.0
    %1920 = vmatpush.msra.mxu0 0.0
    %1921 = vmatpush.msra.mxu0 0.0
    %1922 = vmatpush.msra.mxu0 0.0
    %1923 = vmatpush.msra.mxu0 0.0
    %1924 = vmatpush.msra.mxu0 0.0
    %1925 = vmatpush.msra.mxu0 0.0
    %1926 = vmatpush.msra.mxu0 0.0
    %1927 = vmatpush.msra.mxu0 %v1909
    %1928 = vmatpush.msra.mxu0 %v1908
    %1929 = vmatpush.msra.mxu0 %v1907
    %1930 = vmatpush.msra.mxu0 %v1906
    %1931 = vmatmul.f32.gmra.mxu0 %v1411
    %v1932 = vpop.f32.mrf.mxu0
    %v1933 = vadd.f32 %v1913, %v1932
    %1934 = vmatmul.f32.gmra.mxu0 %v1414
    %v1935 = vpop.f32.mrf.mxu0
    %v1936 = vadd.f32 %v1913, %v1935
    %1937 = vdwg.mxu0
    %s1938 = scalar_lea.vmem %s39, 64
    %v1939 = vld [vmem:[%s1938] sm:$0xff]
    %v1940 = vld [vmem:[%s1938 + $0x8] sm:$0xff]
    %v1941 = vld [vmem:[%s1938 + $0x10] sm:$0xff]
    %v1942 = vld [vmem:[%s1938 + $0x18] sm:$0xff]
    %s1943 = scalar_lea.vmem %s41, 2
    %v1944 = vld [vmem:[%s1943] sm:$0x1]
    %v1946 = vperm.slane %v1944, 0
    %1948 = vmatpush.msra.mxu0 0.0
    %1949 = vmatpush.msra.mxu0 0.0
    %1950 = vmatpush.msra.mxu0 0.0
    %1951 = vmatpush.msra.mxu0 0.0
    %1952 = vmatpush.msra.mxu0 0.0
    %1953 = vmatpush.msra.mxu0 0.0
    %1954 = vmatpush.msra.mxu0 0.0
    %1955 = vmatpush.msra.mxu0 0.0
    %1956 = vmatpush.msra.mxu0 0.0
    %1957 = vmatpush.msra.mxu0 0.0
    %1958 = vmatpush.msra.mxu0 0.0
    %1959 = vmatpush.msra.mxu0 0.0
    %1960 = vmatpush.msra.mxu0 %v1942
    %1961 = vmatpush.msra.mxu0 %v1941
    %1962 = vmatpush.msra.mxu0 %v1940
    %1963 = vmatpush.msra.mxu0 %v1939
    %1964 = vmatmul.f32.gmra.mxu0 %v1411
    %v1965 = vpop.f32.mrf.mxu0
    %v1966 = vadd.f32 %v1946, %v1965
    %1967 = vmatmul.f32.gmra.mxu0 %v1414
    %v1968 = vpop.f32.mrf.mxu0
    %v1969 = vadd.f32 %v1946, %v1968
    %1970 = vdwg.mxu0
    %s1971 = scalar_lea.vmem %s43, 64
    %v1972 = vld [vmem:[%s1971] sm:$0xff]
    %v1973 = vld [vmem:[%s1971 + $0x8] sm:$0xff]
    %v1974 = vld [vmem:[%s1971 + $0x10] sm:$0xff]
    %v1975 = vld [vmem:[%s1971 + $0x18] sm:$0xff]
    %s1976 = scalar_lea.vmem %s45, 2
    %v1977 = vld [vmem:[%s1976] sm:$0x1]
    %v1979 = vperm.slane %v1977, 0
    %1981 = vmatpush.msra.mxu0 0.0
    %1982 = vmatpush.msra.mxu0 0.0
    %1983 = vmatpush.msra.mxu0 0.0
    %1984 = vmatpush.msra.mxu0 0.0
    %1985 = vmatpush.msra.mxu0 0.0
    %1986 = vmatpush.msra.mxu0 0.0
    %1987 = vmatpush.msra.mxu0 0.0
    %1988 = vmatpush.msra.mxu0 0.0
    %1989 = vmatpush.msra.mxu0 0.0
    %1990 = vmatpush.msra.mxu0 0.0
    %1991 = vmatpush.msra.mxu0 0.0
    %1992 = vmatpush.msra.mxu0 0.0
    %1993 = vmatpush.msra.mxu0 %v1975
    %1994 = vmatpush.msra.mxu0 %v1974
    %1995 = vmatpush.msra.mxu0 %v1973
    %1996 = vmatpush.msra.mxu0 %v1972
    %1997 = vmatmul.f32.gmra.mxu0 %v1411
    %v1998 = vpop.f32.mrf.mxu0
    %v1999 = vadd.f32 %v1979, %v1998
    %2000 = vmatmul.f32.gmra.mxu0 %v1414
    %v2001 = vpop.f32.mrf.mxu0
    %v2002 = vadd.f32 %v1979, %v2001
    %2003 = vdwg.mxu0
    %v2005 = vsel %vm285, %v1933, 0
    %v2008 = vsel %vm285, %v1966, 0
    %2010 = vmatpush.xpose.msra.mxu0 0.0
    %2011 = vmatpush.xpose.msra.mxu0 0.0
    %2012 = vmatpush.xpose.msra.mxu0 0.0
    %2013 = vmatpush.xpose.msra.mxu0 0.0
    %2014 = vmatpush.xpose.msra.mxu0 0.0
    %2015 = vmatpush.xpose.msra.mxu0 0.0
    %2016 = vmatpush.xpose.msra.mxu0 0.0
    %2017 = vmatpush.xpose.msra.mxu0 0.0
    %2018 = vmatpush.xpose.msra.mxu0 0.0
    %2019 = vmatpush.xpose.msra.mxu0 0.0
    %2020 = vmatpush.xpose.msra.mxu0 0.0
    %2021 = vmatpush.xpose.msra.mxu0 0.0
    %2022 = vmatpush.xpose.msra.mxu0 0.0
    %2023 = vmatpush.xpose.msra.mxu0 0.0
    %2024 = vmatpush.xpose.msra.mxu0 0.0
    %2025 = vmatpush.xpose.msra.mxu0 %v2008
    %2026 = vmatmul.f32.gmra.mxu0 %v2005
    %v2027 = vpop.f32.mrf.mxu0
    %v2028 = vadd.f32 0.0, %v2027
    %2029 = vdwg.mxu0
    %v2031 = vsel %vm285, %v1936, 0
    %v2034 = vsel %vm285, %v1969, 0
    %2036 = vmatpush.xpose.msra.mxu0 0.0
    %2037 = vmatpush.xpose.msra.mxu0 0.0
    %2038 = vmatpush.xpose.msra.mxu0 0.0
    %2039 = vmatpush.xpose.msra.mxu0 0.0
    %2040 = vmatpush.xpose.msra.mxu0 0.0
    %2041 = vmatpush.xpose.msra.mxu0 0.0
    %2042 = vmatpush.xpose.msra.mxu0 0.0
    %2043 = vmatpush.xpose.msra.mxu0 0.0
    %2044 = vmatpush.xpose.msra.mxu0 0.0
    %2045 = vmatpush.xpose.msra.mxu0 0.0
    %2046 = vmatpush.xpose.msra.mxu0 0.0
    %2047 = vmatpush.xpose.msra.mxu0 0.0
    %2048 = vmatpush.xpose.msra.mxu0 0.0
    %2049 = vmatpush.xpose.msra.mxu0 0.0
    %2050 = vmatpush.xpose.msra.mxu0 0.0
    %2051 = vmatpush.xpose.msra.mxu0 %v2034
    %2052 = vmatmul.f32.gmra.mxu0 %v2031
    %v2053 = vpop.f32.mrf.mxu0
    %v2054 = vadd.f32 0.0, %v2053
    %2055 = vdwg.mxu0
    %v2056 = vsel %vm285, %v2028, -inf
    %2057 = vmax.xlane.f32.xlu0 %v2056
    %v2058 = vpop.xlane.xlu0 %2057
    %v2059 = vsel %vm285, %v2054, -inf
    %2060 = vmax.xlane.f32.xlu0 %v2059
    %v2061 = vpop.xlane.xlu0 %2060
    %v2062 = vsub.f32 %v2028, %v2058
    %v2063 = vsub.f32 %v2054, %v2061
    %v2064 = vmul.f32 %v2062, 1.442695
    %v2065 = vpow.pop %v2064
    %v2066 = vmul.f32 %v2063, 1.442695
    %v2067 = vpow.pop %v2066
    %v2068 = vsel %vm285, %v2065, 0.0
    %2069 = vadd.xlane.f32.xlu0 %v2068
    %v2070 = vpop.xlane.xlu0 %2069
    %v2071 = vsel %vm285, %v2067, 0.0
    %2072 = vadd.xlane.f32.xlu0 %v2071
    %v2073 = vpop.xlane.xlu0 %2072
    %v2074 = vrcp.pop %v2070
    %v2075 = vrcp.pop %v2073
    %v2076 = vmul.f32 %v2065, %v2074
    %v2077 = vmul.f32 %v2067, %v2075
    %v2079 = vsel %vm285, %v2076, 0
    %2081 = vmatpush.msra.mxu0 0.0
    %2082 = vmatpush.msra.mxu0 0.0
    %2083 = vmatpush.msra.mxu0 0.0
    %2084 = vmatpush.msra.mxu0 0.0
    %2085 = vmatpush.msra.mxu0 0.0
    %2086 = vmatpush.msra.mxu0 0.0
    %2087 = vmatpush.msra.mxu0 0.0
    %2088 = vmatpush.msra.mxu0 0.0
    %2089 = vmatpush.msra.mxu0 0.0
    %2090 = vmatpush.msra.mxu0 0.0
    %2091 = vmatpush.msra.mxu0 0.0
    %2092 = vmatpush.msra.mxu0 0.0
    %2093 = vmatpush.msra.mxu0 0.0
    %2094 = vmatpush.msra.mxu0 0.0
    %2095 = vmatpush.msra.mxu0 0.0
    %2096 = vmatpush.msra.mxu0 %v1999
    %2097 = vmatmul.f32.gmra.mxu0 %v2079
    %v2098 = vpop.f32.mrf.mxu0
    %v2099 = vadd.f32 0.0, %v2098
    %2100 = vdwg.mxu0
    %v2102 = vsel %vm285, %v2077, 0
    %2104 = vmatpush.msra.mxu0 0.0
    %2105 = vmatpush.msra.mxu0 0.0
    %2106 = vmatpush.msra.mxu0 0.0
    %2107 = vmatpush.msra.mxu0 0.0
    %2108 = vmatpush.msra.mxu0 0.0
    %2109 = vmatpush.msra.mxu0 0.0
    %2110 = vmatpush.msra.mxu0 0.0
    %2111 = vmatpush.msra.mxu0 0.0
    %2112 = vmatpush.msra.mxu0 0.0
    %2113 = vmatpush.msra.mxu0 0.0
    %2114 = vmatpush.msra.mxu0 0.0
    %2115 = vmatpush.msra.mxu0 0.0
    %2116 = vmatpush.msra.mxu0 0.0
    %2117 = vmatpush.msra.mxu0 0.0
    %2118 = vmatpush.msra.mxu0 0.0
    %2119 = vmatpush.msra.mxu0 %v2002
    %2120 = vmatmul.f32.gmra.mxu0 %v2102
    %v2121 = vpop.f32.mrf.mxu0
    %v2122 = vadd.f32 0.0, %v2121
    %2123 = vdwg.mxu0
    %s2124 = scalar_lea.vmem %s47, 16
    %v2125 = vld [vmem:[%s2124] sm:$0xff]
    %v2127 = vsel %vm285, %v2099, 0
    %v2130 = vsel %vm285, %v2122, 0
    %2132 = vmatpush.msra.mxu0 0.0
    %2133 = vmatpush.msra.mxu0 0.0
    %2134 = vmatpush.msra.mxu0 0.0
    %2135 = vmatpush.msra.mxu0 0.0
    %2136 = vmatpush.msra.mxu0 0.0
    %2137 = vmatpush.msra.mxu0 0.0
    %2138 = vmatpush.msra.mxu0 0.0
    %2139 = vmatpush.msra.mxu0 0.0
    %2140 = vmatpush.msra.mxu0 0.0
    %2141 = vmatpush.msra.mxu0 0.0
    %2142 = vmatpush.msra.mxu0 0.0
    %2143 = vmatpush.msra.mxu0 0.0
    %2144 = vmatpush.msra.mxu0 0.0
    %2145 = vmatpush.msra.mxu0 0.0
    %2146 = vmatpush.msra.mxu0 0.0
    %2147 = vmatpush.msra.mxu0 %v2125
    %2148 = vmatmul.f32.gmra.mxu0 %v2127
    %v2149 = vpop.f32.mrf.mxu0
    %v2150 = vadd.f32 0.0, %v2149
    %2151 = vmatmul.f32.gmra.mxu0 %v2130
    %v2152 = vpop.f32.mrf.mxu0
    %v2153 = vadd.f32 0.0, %v2152
    %2154 = vdwg.mxu0
    %v2155 = vadd.f32 %v1903, %v2150
    %v2156 = vadd.f32 %v1904, %v2153
    %s2157 = scalar_lea.vmem %s35, 96
    %v2158 = vld [vmem:[%s2157] sm:$0xff]
    %v2159 = vld [vmem:[%s2157 + $0x8] sm:$0xff]
    %v2160 = vld [vmem:[%s2157 + $0x10] sm:$0xff]
    %v2161 = vld [vmem:[%s2157 + $0x18] sm:$0xff]
    %s2162 = scalar_lea.vmem %s37, 3
    %v2163 = vld [vmem:[%s2162] sm:$0x1]
    %v2165 = vperm.slane %v2163, 0
    %2167 = vmatpush.msra.mxu0 0.0
    %2168 = vmatpush.msra.mxu0 0.0
    %2169 = vmatpush.msra.mxu0 0.0
    %2170 = vmatpush.msra.mxu0 0.0
    %2171 = vmatpush.msra.mxu0 0.0
    %2172 = vmatpush.msra.mxu0 0.0
    %2173 = vmatpush.msra.mxu0 0.0
    %2174 = vmatpush.msra.mxu0 0.0
    %2175 = vmatpush.msra.mxu0 0.0
    %2176 = vmatpush.msra.mxu0 0.0
    %2177 = vmatpush.msra.mxu0 0.0
    %2178 = vmatpush.msra.mxu0 0.0
    %2179 = vmatpush.msra.mxu0 %v2161
    %2180 = vmatpush.msra.mxu0 %v2160
    %2181 = vmatpush.msra.mxu0 %v2159
    %2182 = vmatpush.msra.mxu0 %v2158
    %2183 = vmatmul.f32.gmra.mxu0 %v1411
    %v2184 = vpop.f32.mrf.mxu0
    %v2185 = vadd.f32 %v2165, %v2184
    %2186 = vmatmul.f32.gmra.mxu0 %v1414
    %v2187 = vpop.f32.mrf.mxu0
    %v2188 = vadd.f32 %v2165, %v2187
    %2189 = vdwg.mxu0
    %s2190 = scalar_lea.vmem %s39, 96
    %v2191 = vld [vmem:[%s2190] sm:$0xff]
    %v2192 = vld [vmem:[%s2190 + $0x8] sm:$0xff]
    %v2193 = vld [vmem:[%s2190 + $0x10] sm:$0xff]
    %v2194 = vld [vmem:[%s2190 + $0x18] sm:$0xff]
    %s2195 = scalar_lea.vmem %s41, 3
    %v2196 = vld [vmem:[%s2195] sm:$0x1]
    %v2198 = vperm.slane %v2196, 0
    %2200 = vmatpush.msra.mxu0 0.0
    %2201 = vmatpush.msra.mxu0 0.0
    %2202 = vmatpush.msra.mxu0 0.0
    %2203 = vmatpush.msra.mxu0 0.0
    %2204 = vmatpush.msra.mxu0 0.0
    %2205 = vmatpush.msra.mxu0 0.0
    %2206 = vmatpush.msra.mxu0 0.0
    %2207 = vmatpush.msra.mxu0 0.0
    %2208 = vmatpush.msra.mxu0 0.0
    %2209 = vmatpush.msra.mxu0 0.0
    %2210 = vmatpush.msra.mxu0 0.0
    %2211 = vmatpush.msra.mxu0 0.0
    %2212 = vmatpush.msra.mxu0 %v2194
    %2213 = vmatpush.msra.mxu0 %v2193
    %2214 = vmatpush.msra.mxu0 %v2192
    %2215 = vmatpush.msra.mxu0 %v2191
    %2216 = vmatmul.f32.gmra.mxu0 %v1411
    %v2217 = vpop.f32.mrf.mxu0
    %v2218 = vadd.f32 %v2198, %v2217
    %2219 = vmatmul.f32.gmra.mxu0 %v1414
    %v2220 = vpop.f32.mrf.mxu0
    %v2221 = vadd.f32 %v2198, %v2220
    %2222 = vdwg.mxu0
    %s2223 = scalar_lea.vmem %s43, 96
    %v2224 = vld [vmem:[%s2223] sm:$0xff]
    %v2225 = vld [vmem:[%s2223 + $0x8] sm:$0xff]
    %v2226 = vld [vmem:[%s2223 + $0x10] sm:$0xff]
    %v2227 = vld [vmem:[%s2223 + $0x18] sm:$0xff]
    %s2228 = scalar_lea.vmem %s45, 3
    %v2229 = vld [vmem:[%s2228] sm:$0x1]
    %v2231 = vperm.slane %v2229, 0
    %2233 = vmatpush.msra.mxu0 0.0
    %2234 = vmatpush.msra.mxu0 0.0
    %2235 = vmatpush.msra.mxu0 0.0
    %2236 = vmatpush.msra.mxu0 0.0
    %2237 = vmatpush.msra.mxu0 0.0
    %2238 = vmatpush.msra.mxu0 0.0
    %2239 = vmatpush.msra.mxu0 0.0
    %2240 = vmatpush.msra.mxu0 0.0
    %2241 = vmatpush.msra.mxu0 0.0
    %2242 = vmatpush.msra.mxu0 0.0
    %2243 = vmatpush.msra.mxu0 0.0
    %2244 = vmatpush.msra.mxu0 0.0
    %2245 = vmatpush.msra.mxu0 %v2227
    %2246 = vmatpush.msra.mxu0 %v2226
    %2247 = vmatpush.msra.mxu0 %v2225
    %2248 = vmatpush.msra.mxu0 %v2224
    %2249 = vmatmul.f32.gmra.mxu0 %v1411
    %v2250 = vpop.f32.mrf.mxu0
    %v2251 = vadd.f32 %v2231, %v2250
    %2252 = vmatmul.f32.gmra.mxu0 %v1414
    %v2253 = vpop.f32.mrf.mxu0
    %v2254 = vadd.f32 %v2231, %v2253
    %2255 = vdwg.mxu0
    %v2257 = vsel %vm285, %v2185, 0
    %v2260 = vsel %vm285, %v2218, 0
    %2262 = vmatpush.xpose.msra.mxu0 0.0
    %2263 = vmatpush.xpose.msra.mxu0 0.0
    %2264 = vmatpush.xpose.msra.mxu0 0.0
    %2265 = vmatpush.xpose.msra.mxu0 0.0
    %2266 = vmatpush.xpose.msra.mxu0 0.0
    %2267 = vmatpush.xpose.msra.mxu0 0.0
    %2268 = vmatpush.xpose.msra.mxu0 0.0
    %2269 = vmatpush.xpose.msra.mxu0 0.0
    %2270 = vmatpush.xpose.msra.mxu0 0.0
    %2271 = vmatpush.xpose.msra.mxu0 0.0
    %2272 = vmatpush.xpose.msra.mxu0 0.0
    %2273 = vmatpush.xpose.msra.mxu0 0.0
    %2274 = vmatpush.xpose.msra.mxu0 0.0
    %2275 = vmatpush.xpose.msra.mxu0 0.0
    %2276 = vmatpush.xpose.msra.mxu0 0.0
    %2277 = vmatpush.xpose.msra.mxu0 %v2260
    %2278 = vmatmul.f32.gmra.mxu0 %v2257
    %v2279 = vpop.f32.mrf.mxu0
    %v2280 = vadd.f32 0.0, %v2279
    %2281 = vdwg.mxu0
    %v2283 = vsel %vm285, %v2188, 0
    %v2286 = vsel %vm285, %v2221, 0
    %2288 = vmatpush.xpose.msra.mxu0 0.0
    %2289 = vmatpush.xpose.msra.mxu0 0.0
    %2290 = vmatpush.xpose.msra.mxu0 0.0
    %2291 = vmatpush.xpose.msra.mxu0 0.0
    %2292 = vmatpush.xpose.msra.mxu0 0.0
    %2293 = vmatpush.xpose.msra.mxu0 0.0
    %2294 = vmatpush.xpose.msra.mxu0 0.0
    %2295 = vmatpush.xpose.msra.mxu0 0.0
    %2296 = vmatpush.xpose.msra.mxu0 0.0
    %2297 = vmatpush.xpose.msra.mxu0 0.0
    %2298 = vmatpush.xpose.msra.mxu0 0.0
    %2299 = vmatpush.xpose.msra.mxu0 0.0
    %2300 = vmatpush.xpose.msra.mxu0 0.0
    %2301 = vmatpush.xpose.msra.mxu0 0.0
    %2302 = vmatpush.xpose.msra.mxu0 0.0
    %2303 = vmatpush.xpose.msra.mxu0 %v2286
    %2304 = vmatmul.f32.gmra.mxu0 %v2283
    %v2305 = vpop.f32.mrf.mxu0
    %v2306 = vadd.f32 0.0, %v2305
    %2307 = vdwg.mxu0
    %v2308 = vsel %vm285, %v2280, -inf
    %2309 = vmax.xlane.f32.xlu0 %v2308
    %v2310 = vpop.xlane.xlu0 %2309
    %v2311 = vsel %vm285, %v2306, -inf
    %2312 = vmax.xlane.f32.xlu0 %v2311
    %v2313 = vpop.xlane.xlu0 %2312
    %v2314 = vsub.f32 %v2280, %v2310
    %v2315 = vsub.f32 %v2306, %v2313
    %v2316 = vmul.f32 %v2314, 1.442695
    %v2317 = vpow.pop %v2316
    %v2318 = vmul.f32 %v2315, 1.442695
    %v2319 = vpow.pop %v2318
    %v2320 = vsel %vm285, %v2317, 0.0
    %2321 = vadd.xlane.f32.xlu0 %v2320
    %v2322 = vpop.xlane.xlu0 %2321
    %v2323 = vsel %vm285, %v2319, 0.0
    %2324 = vadd.xlane.f32.xlu0 %v2323
    %v2325 = vpop.xlane.xlu0 %2324
    %v2326 = vrcp.pop %v2322
    %v2327 = vrcp.pop %v2325
    %v2328 = vmul.f32 %v2317, %v2326
    %v2329 = vmul.f32 %v2319, %v2327
    %v2331 = vsel %vm285, %v2328, 0
    %2333 = vmatpush.msra.mxu0 0.0
    %2334 = vmatpush.msra.mxu0 0.0
    %2335 = vmatpush.msra.mxu0 0.0
    %2336 = vmatpush.msra.mxu0 0.0
    %2337 = vmatpush.msra.mxu0 0.0
    %2338 = vmatpush.msra.mxu0 0.0
    %2339 = vmatpush.msra.mxu0 0.0
    %2340 = vmatpush.msra.mxu0 0.0
    %2341 = vmatpush.msra.mxu0 0.0
    %2342 = vmatpush.msra.mxu0 0.0
    %2343 = vmatpush.msra.mxu0 0.0
    %2344 = vmatpush.msra.mxu0 0.0
    %2345 = vmatpush.msra.mxu0 0.0
    %2346 = vmatpush.msra.mxu0 0.0
    %2347 = vmatpush.msra.mxu0 0.0
    %2348 = vmatpush.msra.mxu0 %v2251
    %2349 = vmatmul.f32.gmra.mxu0 %v2331
    %v2350 = vpop.f32.mrf.mxu0
    %v2351 = vadd.f32 0.0, %v2350
    %2352 = vdwg.mxu0
    %v2354 = vsel %vm285, %v2329, 0
    %2356 = vmatpush.msra.mxu0 0.0
    %2357 = vmatpush.msra.mxu0 0.0
    %2358 = vmatpush.msra.mxu0 0.0
    %2359 = vmatpush.msra.mxu0 0.0
    %2360 = vmatpush.msra.mxu0 0.0
    %2361 = vmatpush.msra.mxu0 0.0
    %2362 = vmatpush.msra.mxu0 0.0
    %2363 = vmatpush.msra.mxu0 0.0
    %2364 = vmatpush.msra.mxu0 0.0
    %2365 = vmatpush.msra.mxu0 0.0
    %2366 = vmatpush.msra.mxu0 0.0
    %2367 = vmatpush.msra.mxu0 0.0
    %2368 = vmatpush.msra.mxu0 0.0
    %2369 = vmatpush.msra.mxu0 0.0
    %2370 = vmatpush.msra.mxu0 0.0
    %2371 = vmatpush.msra.mxu0 %v2254
    %2372 = vmatmul.f32.gmra.mxu0 %v2354
    %v2373 = vpop.f32.mrf.mxu0
    %v2374 = vadd.f32 0.0, %v2373
    %2375 = vdwg.mxu0
    %s2376 = scalar_lea.vmem %s47, 24
    %v2377 = vld [vmem:[%s2376] sm:$0xff]
    %v2379 = vsel %vm285, %v2351, 0
    %v2382 = vsel %vm285, %v2374, 0
    %2384 = vmatpush.msra.mxu0 0.0
    %2385 = vmatpush.msra.mxu0 0.0
    %2386 = vmatpush.msra.mxu0 0.0
    %2387 = vmatpush.msra.mxu0 0.0
    %2388 = vmatpush.msra.mxu0 0.0
    %2389 = vmatpush.msra.mxu0 0.0
    %2390 = vmatpush.msra.mxu0 0.0
    %2391 = vmatpush.msra.mxu0 0.0
    %2392 = vmatpush.msra.mxu0 0.0
    %2393 = vmatpush.msra.mxu0 0.0
    %2394 = vmatpush.msra.mxu0 0.0
    %2395 = vmatpush.msra.mxu0 0.0
    %2396 = vmatpush.msra.mxu0 0.0
    %2397 = vmatpush.msra.mxu0 0.0
    %2398 = vmatpush.msra.mxu0 0.0
    %2399 = vmatpush.msra.mxu0 %v2377
    %2400 = vmatmul.f32.gmra.mxu0 %v2379
    %v2401 = vpop.f32.mrf.mxu0
    %v2402 = vadd.f32 0.0, %v2401
    %2403 = vmatmul.f32.gmra.mxu0 %v2382
    %v2404 = vpop.f32.mrf.mxu0
    %v2405 = vadd.f32 0.0, %v2404
    %2406 = vdwg.mxu0
    %v2407 = vadd.f32 %v2155, %v2402
    %v2408 = vadd.f32 %v2156, %v2405
    %v2409 = vadd.f32 %v1396, %v2407
    %v2410 = vadd.f32 %v1397, %v2408
    %v2411 = vld [vmem:[%s51] sm:$0x1]
    %v2412 = vld [vmem:[%s53] sm:$0x1]
    %v2413 = vsel %vm193, %v2409, 0.0
    %2414 = vadd.xlane.f32.xlu0 %v2413
    %v2415 = vpop.xlane.xlu0 %2414
    %v2416 = vsel %vm193, %v2410, 0.0
    %2417 = vadd.xlane.f32.xlu0 %v2416
    %v2418 = vpop.xlane.xlu0 %2417
    %v2419 = vmul.f32 %v2415, %v1210
    %v2420 = vmul.f32 %v2418, %v1210
    %v2421 = vsub.f32 %v2409, %v2419
    %v2422 = vsub.f32 %v2410, %v2420
    %v2423 = vmul.f32 %v2421, %v2421
    %v2424 = vmul.f32 %v2422, %v2422
    %v2425 = vsel %vm193, %v2423, 0.0
    %2426 = vadd.xlane.f32.xlu0 %v2425
    %v2427 = vpop.xlane.xlu0 %2426
    %v2428 = vsel %vm193, %v2424, 0.0
    %2429 = vadd.xlane.f32.xlu0 %v2428
    %v2430 = vpop.xlane.xlu0 %2429
    %v2431 = vmul.f32 %v2427, %v1210
    %v2432 = vmul.f32 %v2430, %v1210
    %v2433 = vadd.f32 %v2431, 1e-05
    %v2434 = vadd.f32 %v2432, 1e-05
    %v2435 = vrsqrt.pop %v2433
    %v2436 = vmul.f32 %v2435, %v2433
    %v2437 = vmul.f32 %v2436, %v2435
    %v2438 = vmul.f32 0.5, %v2437
    %v2439 = vsub.f32 1.5, %v2438
    %v2440 = vmul.f32 %v2435, %v2439
    %vm2441 = vweird.f32 %v2433
    %vm2442 = vweird.f32 %v2435
    %vm2443 = vmor %vm2441, %vm2442
    %v2444 = vsel %vm2443, %v2435, %v2440
    %v2445 = vrsqrt.pop %v2434
    %v2446 = vmul.f32 %v2445, %v2434
    %v2447 = vmul.f32 %v2446, %v2445
    %v2448 = vmul.f32 0.5, %v2447
    %v2449 = vsub.f32 1.5, %v2448
    %v2450 = vmul.f32 %v2445, %v2449
    %vm2451 = vweird.f32 %v2434
    %vm2452 = vweird.f32 %v2445
    %vm2453 = vmor %vm2451, %vm2452
    %v2454 = vsel %vm2453, %v2445, %v2450
    %v2455 = vmul.f32 %v2421, %v2444
    %v2456 = vmul.f32 %v2422, %v2454
    %v2458 = vperm.slane %v2411, 0
    %v2460 = vmul.f32 %v2455, %v2458
    %v2461 = vmul.f32 %v2456, %v2458
    %v2463 = vperm.slane %v2412, 0
    %v2465 = vadd.f32 %v2460, %v2463
    %v2466 = vadd.f32 %v2461, %v2463
    %v2467 = vld [vmem:[%s55] sm:$0xff]
    %v2468 = vld [vmem:[%s55 + $0x8] sm:$0xff]
    %v2469 = vld [vmem:[%s55 + $0x10] sm:$0xff]
    %v2470 = vld [vmem:[%s55 + $0x18] sm:$0xff]
    %v2471 = vld [vmem:[%s57] sm:$0x1]
    %v2473 = vperm.slane %v2471, 0
    %v2476 = vsel %vm193, %v2465, 0
    %v2479 = vsel %vm193, %v2466, 0
    %2481 = vmatpush.msra.mxu0 0.0
    %2482 = vmatpush.msra.mxu0 0.0
    %2483 = vmatpush.msra.mxu0 0.0
    %2484 = vmatpush.msra.mxu0 0.0
    %2485 = vmatpush.msra.mxu0 0.0
    %2486 = vmatpush.msra.mxu0 0.0
    %2487 = vmatpush.msra.mxu0 0.0
    %2488 = vmatpush.msra.mxu0 0.0
    %2489 = vmatpush.msra.mxu0 0.0
    %2490 = vmatpush.msra.mxu0 0.0
    %2491 = vmatpush.msra.mxu0 0.0
    %2492 = vmatpush.msra.mxu0 0.0
    %2493 = vmatpush.msra.mxu0 %v2470
    %2494 = vmatpush.msra.mxu0 %v2469
    %2495 = vmatpush.msra.mxu0 %v2468
    %2496 = vmatpush.msra.mxu0 %v2467
    %2497 = vmatmul.f32.gmra.mxu0 %v2476
    %v2498 = vpop.f32.mrf.mxu0
    %v2499 = vadd.f32 %v2473, %v2498
    %2500 = vmatmul.f32.gmra.mxu0 %v2479
    %v2501 = vpop.f32.mrf.mxu0
    %v2502 = vadd.f32 %v2473, %v2501
    %2503 = vdwg.mxu0
    %v2504 = vmax.f32 %v2499, 0.0
    %v2505 = vmax.f32 %v2502, 0.0
    %v2506 = vld [vmem:[%s59] sm:$0xff]
    %v2507 = vld [vmem:[%s59 + $0x8] sm:$0xff]
    %v2508 = vld [vmem:[%s59 + $0x10] sm:$0xff]
    %v2509 = vld [vmem:[%s59 + $0x18] sm:$0xff]
    %v2510 = vld [vmem:[%s59 + $0x20] sm:$0xff]
    %v2511 = vld [vmem:[%s59 + $0x28] sm:$0xff]
    %v2512 = vld [vmem:[%s59 + $0x30] sm:$0xff]
    %v2513 = vld [vmem:[%s59 + $0x38] sm:$0xff]
    %v2514 = vld [vmem:[%s61] sm:$0x1]
    %v2516 = vperm.slane %v2514, 0
    %v2519 = vsel %vm1310, %v2504, 0
    %v2522 = vsel %vm1310, %v2505, 0
    %2524 = vmatpush.msra.mxu0 0.0
    %2525 = vmatpush.msra.mxu0 0.0
    %2526 = vmatpush.msra.mxu0 0.0
    %2527 = vmatpush.msra.mxu0 0.0
    %2528 = vmatpush.msra.mxu0 0.0
    %2529 = vmatpush.msra.mxu0 0.0
    %2530 = vmatpush.msra.mxu0 0.0
    %2531 = vmatpush.msra.mxu0 0.0
    %2532 = vmatpush.msra.mxu0 %v2513
    %2533 = vmatpush.msra.mxu0 %v2512
    %2534 = vmatpush.msra.mxu0 %v2511
    %2535 = vmatpush.msra.mxu0 %v2510
    %2536 = vmatpush.msra.mxu0 %v2509
    %2537 = vmatpush.msra.mxu0 %v2508
    %2538 = vmatpush.msra.mxu0 %v2507
    %2539 = vmatpush.msra.mxu0 %v2506
    %2540 = vmatmul.f32.gmra.mxu0 %v2519
    %v2541 = vpop.f32.mrf.mxu0
    %v2542 = vadd.f32 %v2516, %v2541
    %2543 = vmatmul.f32.gmra.mxu0 %v2522
    %v2544 = vpop.f32.mrf.mxu0
    %v2545 = vadd.f32 %v2516, %v2544
    %2546 = vdwg.mxu0
    %v2547 = vadd.f32 %v2465, %v2542
    %v2548 = vadd.f32 %v2466, %v2545
    %v2549 = vld [vmem:[%s63] sm:$0x1]
    %v2550 = vld [vmem:[%s65] sm:$0x1]
    %v2551 = vsel %vm193, %v2547, 0.0
    %2552 = vadd.xlane.f32.xlu0 %v2551
    %v2553 = vpop.xlane.xlu0 %2552
    %v2554 = vsel %vm193, %v2548, 0.0
    %2555 = vadd.xlane.f32.xlu0 %v2554
    %v2556 = vpop.xlane.xlu0 %2555
    %v2557 = vmul.f32 %v2553, %v1210
    %v2558 = vmul.f32 %v2556, %v1210
    %v2559 = vsub.f32 %v2547, %v2557
    %v2560 = vsub.f32 %v2548, %v2558
    %v2561 = vmul.f32 %v2559, %v2559
    %v2562 = vmul.f32 %v2560, %v2560
    %v2563 = vsel %vm193, %v2561, 0.0
    %2564 = vadd.xlane.f32.xlu0 %v2563
    %v2565 = vpop.xlane.xlu0 %2564
    %v2566 = vsel %vm193, %v2562, 0.0
    %2567 = vadd.xlane.f32.xlu0 %v2566
    %v2568 = vpop.xlane.xlu0 %2567
    %v2569 = vmul.f32 %v2565, %v1210
    %v2570 = vmul.f32 %v2568, %v1210
    %v2571 = vadd.f32 %v2569, 1e-05
    %v2572 = vadd.f32 %v2570, 1e-05
    %v2573 = vrsqrt.pop %v2571
    %v2574 = vmul.f32 %v2573, %v2571
    %v2575 = vmul.f32 %v2574, %v2573
    %v2576 = vmul.f32 0.5, %v2575
    %v2577 = vsub.f32 1.5, %v2576
    %v2578 = vmul.f32 %v2573, %v2577
    %vm2579 = vweird.f32 %v2571
    %vm2580 = vweird.f32 %v2573
    %vm2581 = vmor %vm2579, %vm2580
    %v2582 = vsel %vm2581, %v2573, %v2578
    %v2583 = vrsqrt.pop %v2572
    %v2584 = vmul.f32 %v2583, %v2572
    %v2585 = vmul.f32 %v2584, %v2583
    %v2586 = vmul.f32 0.5, %v2585
    %v2587 = vsub.f32 1.5, %v2586
    %v2588 = vmul.f32 %v2583, %v2587
    %vm2589 = vweird.f32 %v2572
    %vm2590 = vweird.f32 %v2583
    %vm2591 = vmor %vm2589, %vm2590
    %v2592 = vsel %vm2591, %v2583, %v2588
    %v2593 = vmul.f32 %v2559, %v2582
    %v2594 = vmul.f32 %v2560, %v2592
    %v2596 = vperm.slane %v2549, 0
    %v2598 = vmul.f32 %v2593, %v2596
    %v2599 = vmul.f32 %v2594, %v2596
    %v2601 = vperm.slane %v2550, 0
    %v2603 = vadd.f32 %v2598, %v2601
    %v2604 = vadd.f32 %v2599, %v2601
    %v2605 = vld [vmem:[%s69] sm:$0x3]
    %v2607 = vperm.slane %v2605, 0
    %v2608 = vperm.slane %v2605, 1
    %v2611 = vld [vmem:[#allocation2] sm:$0xff]
    %v2612 = vld [vmem:[#allocation2 + $0x8] sm:$0xff]
    %v2613 = vld [vmem:[#allocation2 + $0x10] sm:$0xff]
    %v2614 = vld [vmem:[#allocation2 + $0x18] sm:$0xff]
    %v2615 = vld [vmem:[#allocation2 + $0x20] sm:$0xff]
    %v2616 = vld [vmem:[#allocation2 + $0x28] sm:$0xff]
    %v2617 = vld [vmem:[#allocation2 + $0x30] sm:$0xff]
    %v2618 = vld [vmem:[#allocation2 + $0x38] sm:$0xff]
    %v2621 = vrot.slane %v2604, 7
    %vm2622 = vcmask 1041409
    %v2623 = vsel %vm2622, %v2621, %v2603
    %v2624 = vsel %vm193, %v2623, 0
    %2626 = vmatpush.msra.mxu0 0.0
    %2627 = vmatpush.msra.mxu0 0.0
    %2628 = vmatpush.msra.mxu0 0.0
    %2629 = vmatpush.msra.mxu0 0.0
    %2630 = vmatpush.msra.mxu0 0.0
    %2631 = vmatpush.msra.mxu0 0.0
    %2632 = vmatpush.msra.mxu0 0.0
    %2633 = vmatpush.msra.mxu0 0.0
    %2634 = vmatpush.msra.mxu0 0.0
    %2635 = vmatpush.msra.mxu0 0.0
    %2636 = vmatpush.msra.mxu0 0.0
    %2637 = vmatpush.msra.mxu0 0.0
    %2638 = vmatpush.msra.mxu0 %v2617
    %2639 = vmatpush.msra.mxu0 %v2615
    %2640 = vmatpush.msra.mxu0 %v2613
    %2641 = vmatpush.msra.mxu0 %v2611
    %2642 = vmatmul.f32.gmra.mxu0 %v2624
    %v2643 = vpop.f32.mrf.mxu0
    %v2644 = vadd.f32 0.0, %v2643
    %2645 = vdwg.mxu0
    %2646 = vmatpush.msra.mxu0 0.0
    %2647 = vmatpush.msra.mxu0 0.0
    %2648 = vmatpush.msra.mxu0 0.0
    %2649 = vmatpush.msra.mxu0 0.0
    %2650 = vmatpush.msra.mxu0 0.0
    %2651 = vmatpush.msra.mxu0 0.0
    %2652 = vmatpush.msra.mxu0 0.0
    %2653 = vmatpush.msra.mxu0 0.0
    %2654 = vmatpush.msra.mxu0 0.0
    %2655 = vmatpush.msra.mxu0 0.0
    %2656 = vmatpush.msra.mxu0 0.0
    %2657 = vmatpush.msra.mxu0 0.0
    %2658 = vmatpush.msra.mxu0 %v2618
    %2659 = vmatpush.msra.mxu0 %v2616
    %2660 = vmatpush.msra.mxu0 %v2614
    %2661 = vmatpush.msra.mxu0 %v2612
    %2662 = vmatmul.f32.gmra.mxu0 %v2624
    %v2663 = vpop.f32.mrf.mxu0
    %v2664 = vadd.f32 0.0, %v2663
    %2665 = vdwg.mxu0
    %v2666 = vadd.f32 %v2607, %v2644
    %v2667 = vadd.f32 %v2608, %v2664
    %s2668 = scalar_lea.vmem [#allocation2], 64
    %v2669 = vld [vmem:[%s2668] sm:$0xff]
    %v2670 = vld [vmem:[%s2668 + $0x8] sm:$0xff]
    %v2671 = vld [vmem:[%s2668 + $0x10] sm:$0xff]
    %v2672 = vld [vmem:[%s2668 + $0x18] sm:$0xff]
    %v2673 = vld [vmem:[%s2668 + $0x20] sm:$0xff]
    %v2674 = vld [vmem:[%s2668 + $0x28] sm:$0xff]
    %v2675 = vld [vmem:[%s2668 + $0x30] sm:$0xff]
    %v2676 = vld [vmem:[%s2668 + $0x38] sm:$0xff]
    %v2677 = vrot.slane %v2603, 1
    %v2678 = vsel %vm2622, %v2604, %v2677
    %v2679 = vsel %vm193, %v2678, 0
    %2681 = vmatpush.msra.mxu0 0.0
    %2682 = vmatpush.msra.mxu0 0.0
    %2683 = vmatpush.msra.mxu0 0.0
    %2684 = vmatpush.msra.mxu0 0.0
    %2685 = vmatpush.msra.mxu0 0.0
    %2686 = vmatpush.msra.mxu0 0.0
    %2687 = vmatpush.msra.mxu0 0.0
    %2688 = vmatpush.msra.mxu0 0.0
    %2689 = vmatpush.msra.mxu0 0.0
    %2690 = vmatpush.msra.mxu0 0.0
    %2691 = vmatpush.msra.mxu0 0.0
    %2692 = vmatpush.msra.mxu0 0.0
    %2693 = vmatpush.msra.mxu0 %v2675
    %2694 = vmatpush.msra.mxu0 %v2673
    %2695 = vmatpush.msra.mxu0 %v2671
    %2696 = vmatpush.msra.mxu0 %v2669
    %2697 = vmatmul.f32.gmra.mxu0 %v2679
    %v2698 = vpop.f32.mrf.mxu0
    %v2699 = vadd.f32 0.0, %v2698
    %2700 = vdwg.mxu0
    %2701 = vmatpush.msra.mxu0 0.0
    %2702 = vmatpush.msra.mxu0 0.0
    %2703 = vmatpush.msra.mxu0 0.0
    %2704 = vmatpush.msra.mxu0 0.0
    %2705 = vmatpush.msra.mxu0 0.0
    %2706 = vmatpush.msra.mxu0 0.0
    %2707 = vmatpush.msra.mxu0 0.0
    %2708 = vmatpush.msra.mxu0 0.0
    %2709 = vmatpush.msra.mxu0 0.0
    %2710 = vmatpush.msra.mxu0 0.0
    %2711 = vmatpush.msra.mxu0 0.0
    %2712 = vmatpush.msra.mxu0 0.0
    %2713 = vmatpush.msra.mxu0 %v2676
    %2714 = vmatpush.msra.mxu0 %v2674
    %2715 = vmatpush.msra.mxu0 %v2672
    %2716 = vmatpush.msra.mxu0 %v2670
    %2717 = vmatmul.f32.gmra.mxu0 %v2679
    %v2718 = vpop.f32.mrf.mxu0
    %v2719 = vadd.f32 0.0, %v2718
    %2720 = vdwg.mxu0
    %v2721 = vadd.f32 %v2666, %v2699
    %v2722 = vadd.f32 %v2667, %v2719
    %s2723 = scalar_lea.vmem [#allocation2], 128
    %v2724 = vld [vmem:[%s2723] sm:$0xff]
    %v2725 = vld [vmem:[%s2723 + $0x8] sm:$0xff]
    %v2726 = vld [vmem:[%s2723 + $0x10] sm:$0xff]
    %v2727 = vld [vmem:[%s2723 + $0x18] sm:$0xff]
    %v2728 = vld [vmem:[%s2723 + $0x20] sm:$0xff]
    %v2729 = vld [vmem:[%s2723 + $0x28] sm:$0xff]
    %v2730 = vld [vmem:[%s2723 + $0x30] sm:$0xff]
    %v2731 = vld [vmem:[%s2723 + $0x38] sm:$0xff]
    %v2732 = vrot.slane %v2603, 2
    %v2733 = vrot.slane %v2604, 1
    %v2734 = vsel %vm2622, %v2733, %v2732
    %v2735 = vsel %vm193, %v2734, 0
    %2737 = vmatpush.msra.mxu0 0.0
    %2738 = vmatpush.msra.mxu0 0.0
    %2739 = vmatpush.msra.mxu0 0.0
    %2740 = vmatpush.msra.mxu0 0.0
    %2741 = vmatpush.msra.mxu0 0.0
    %2742 = vmatpush.msra.mxu0 0.0
    %2743 = vmatpush.msra.mxu0 0.0
    %2744 = vmatpush.msra.mxu0 0.0
    %2745 = vmatpush.msra.mxu0 0.0
    %2746 = vmatpush.msra.mxu0 0.0
    %2747 = vmatpush.msra.mxu0 0.0
    %2748 = vmatpush.msra.mxu0 0.0
    %2749 = vmatpush.msra.mxu0 %v2730
    %2750 = vmatpush.msra.mxu0 %v2728
    %2751 = vmatpush.msra.mxu0 %v2726
    %2752 = vmatpush.msra.mxu0 %v2724
    %2753 = vmatmul.f32.gmra.mxu0 %v2735
    %v2754 = vpop.f32.mrf.mxu0
    %v2755 = vadd.f32 0.0, %v2754
    %2756 = vdwg.mxu0
    %2757 = vmatpush.msra.mxu0 0.0
    %2758 = vmatpush.msra.mxu0 0.0
    %2759 = vmatpush.msra.mxu0 0.0
    %2760 = vmatpush.msra.mxu0 0.0
    %2761 = vmatpush.msra.mxu0 0.0
    %2762 = vmatpush.msra.mxu0 0.0
    %2763 = vmatpush.msra.mxu0 0.0
    %2764 = vmatpush.msra.mxu0 0.0
    %2765 = vmatpush.msra.mxu0 0.0
    %2766 = vmatpush.msra.mxu0 0.0
    %2767 = vmatpush.msra.mxu0 0.0
    %2768 = vmatpush.msra.mxu0 0.0
    %2769 = vmatpush.msra.mxu0 %v2731
    %2770 = vmatpush.msra.mxu0 %v2729
    %2771 = vmatpush.msra.mxu0 %v2727
    %2772 = vmatpush.msra.mxu0 %v2725
    %2773 = vmatmul.f32.gmra.mxu0 %v2735
    %v2774 = vpop.f32.mrf.mxu0
    %v2775 = vadd.f32 0.0, %v2774
    %2776 = vdwg.mxu0
    %v2777 = vadd.f32 %v2721, %v2755
    %v2778 = vadd.f32 %v2722, %v2775
    %s2779 = scalar_lea.vmem [#allocation2], 192
    %v2780 = vld [vmem:[%s2779] sm:$0xff]
    %v2781 = vld [vmem:[%s2779 + $0x8] sm:$0xff]
    %v2782 = vld [vmem:[%s2779 + $0x10] sm:$0xff]
    %v2783 = vld [vmem:[%s2779 + $0x18] sm:$0xff]
    %v2784 = vld [vmem:[%s2779 + $0x20] sm:$0xff]
    %v2785 = vld [vmem:[%s2779 + $0x28] sm:$0xff]
    %v2786 = vld [vmem:[%s2779 + $0x30] sm:$0xff]
    %v2787 = vld [vmem:[%s2779 + $0x38] sm:$0xff]
    %v2788 = vrot.slane %v2603, 3
    %v2789 = vrot.slane %v2604, 2
    %v2790 = vsel %vm2622, %v2789, %v2788
    %v2791 = vsel %vm193, %v2790, 0
    %2793 = vmatpush.msra.mxu0 0.0
    %2794 = vmatpush.msra.mxu0 0.0
    %2795 = vmatpush.msra.mxu0 0.0
    %2796 = vmatpush.msra.mxu0 0.0
    %2797 = vmatpush.msra.mxu0 0.0
    %2798 = vmatpush.msra.mxu0 0.0
    %2799 = vmatpush.msra.mxu0 0.0
    %2800 = vmatpush.msra.mxu0 0.0
    %2801 = vmatpush.msra.mxu0 0.0
    %2802 = vmatpush.msra.mxu0 0.0
    %2803 = vmatpush.msra.mxu0 0.0
    %2804 = vmatpush.msra.mxu0 0.0
    %2805 = vmatpush.msra.mxu0 %v2786
    %2806 = vmatpush.msra.mxu0 %v2784
    %2807 = vmatpush.msra.mxu0 %v2782
    %2808 = vmatpush.msra.mxu0 %v2780
    %2809 = vmatmul.f32.gmra.mxu0 %v2791
    %v2810 = vpop.f32.mrf.mxu0
    %v2811 = vadd.f32 0.0, %v2810
    %2812 = vdwg.mxu0
    %2813 = vmatpush.msra.mxu0 0.0
    %2814 = vmatpush.msra.mxu0 0.0
    %2815 = vmatpush.msra.mxu0 0.0
    %2816 = vmatpush.msra.mxu0 0.0
    %2817 = vmatpush.msra.mxu0 0.0
    %2818 = vmatpush.msra.mxu0 0.0
    %2819 = vmatpush.msra.mxu0 0.0
    %2820 = vmatpush.msra.mxu0 0.0
    %2821 = vmatpush.msra.mxu0 0.0
    %2822 = vmatpush.msra.mxu0 0.0
    %2823 = vmatpush.msra.mxu0 0.0
    %2824 = vmatpush.msra.mxu0 0.0
    %2825 = vmatpush.msra.mxu0 %v2787
    %2826 = vmatpush.msra.mxu0 %v2785
    %2827 = vmatpush.msra.mxu0 %v2783
    %2828 = vmatpush.msra.mxu0 %v2781
    %2829 = vmatmul.f32.gmra.mxu0 %v2791
    %v2830 = vpop.f32.mrf.mxu0
    %v2831 = vadd.f32 0.0, %v2830
    %2832 = vdwg.mxu0
    %v2833 = vadd.f32 %v2777, %v2811
    %v2834 = vadd.f32 %v2778, %v2831
    %s2835 = scalar_lea.vmem [#allocation2], 256
    %v2836 = vld [vmem:[%s2835] sm:$0xff]
    %v2837 = vld [vmem:[%s2835 + $0x8] sm:$0xff]
    %v2838 = vld [vmem:[%s2835 + $0x10] sm:$0xff]
    %v2839 = vld [vmem:[%s2835 + $0x18] sm:$0xff]
    %v2840 = vld [vmem:[%s2835 + $0x20] sm:$0xff]
    %v2841 = vld [vmem:[%s2835 + $0x28] sm:$0xff]
    %v2842 = vld [vmem:[%s2835 + $0x30] sm:$0xff]
    %v2843 = vld [vmem:[%s2835 + $0x38] sm:$0xff]
    %v2844 = vrot.slane %v2603, 4
    %v2845 = vrot.slane %v2604, 3
    %v2846 = vsel %vm2622, %v2845, %v2844
    %v2847 = vsel %vm193, %v2846, 0
    %2849 = vmatpush.msra.mxu0 0.0
    %2850 = vmatpush.msra.mxu0 0.0
    %2851 = vmatpush.msra.mxu0 0.0
    %2852 = vmatpush.msra.mxu0 0.0
    %2853 = vmatpush.msra.mxu0 0.0
    %2854 = vmatpush.msra.mxu0 0.0
    %2855 = vmatpush.msra.mxu0 0.0
    %2856 = vmatpush.msra.mxu0 0.0
    %2857 = vmatpush.msra.mxu0 0.0
    %2858 = vmatpush.msra.mxu0 0.0
    %2859 = vmatpush.msra.mxu0 0.0
    %2860 = vmatpush.msra.mxu0 0.0
    %2861 = vmatpush.msra.mxu0 %v2842
    %2862 = vmatpush.msra.mxu0 %v2840
    %2863 = vmatpush.msra.mxu0 %v2838
    %2864 = vmatpush.msra.mxu0 %v2836
    %2865 = vmatmul.f32.gmra.mxu0 %v2847
    %v2866 = vpop.f32.mrf.mxu0
    %v2867 = vadd.f32 0.0, %v2866
    %2868 = vdwg.mxu0
    %2869 = vmatpush.msra.mxu0 0.0
    %2870 = vmatpush.msra.mxu0 0.0
    %2871 = vmatpush.msra.mxu0 0.0
    %2872 = vmatpush.msra.mxu0 0.0
    %2873 = vmatpush.msra.mxu0 0.0
    %2874 = vmatpush.msra.mxu0 0.0
    %2875 = vmatpush.msra.mxu0 0.0
    %2876 = vmatpush.msra.mxu0 0.0
    %2877 = vmatpush.msra.mxu0 0.0
    %2878 = vmatpush.msra.mxu0 0.0
    %2879 = vmatpush.msra.mxu0 0.0
    %2880 = vmatpush.msra.mxu0 0.0
    %2881 = vmatpush.msra.mxu0 %v2843
    %2882 = vmatpush.msra.mxu0 %v2841
    %2883 = vmatpush.msra.mxu0 %v2839
    %2884 = vmatpush.msra.mxu0 %v2837
    %2885 = vmatmul.f32.gmra.mxu0 %v2847
    %v2886 = vpop.f32.mrf.mxu0
    %v2887 = vadd.f32 0.0, %v2886
    %2888 = vdwg.mxu0
    %v2889 = vadd.f32 %v2833, %v2867
    %v2890 = vadd.f32 %v2834, %v2887
    %s2891 = scalar_lea.vmem [#allocation2], 320
    %v2892 = vld [vmem:[%s2891] sm:$0xff]
    %v2893 = vld [vmem:[%s2891 + $0x8] sm:$0xff]
    %v2894 = vld [vmem:[%s2891 + $0x10] sm:$0xff]
    %v2895 = vld [vmem:[%s2891 + $0x18] sm:$0xff]
    %v2896 = vld [vmem:[%s2891 + $0x20] sm:$0xff]
    %v2897 = vld [vmem:[%s2891 + $0x28] sm:$0xff]
    %v2898 = vld [vmem:[%s2891 + $0x30] sm:$0xff]
    %v2899 = vld [vmem:[%s2891 + $0x38] sm:$0xff]
    %v2900 = vrot.slane %v2603, 5
    %v2901 = vrot.slane %v2604, 4
    %v2902 = vsel %vm2622, %v2901, %v2900
    %v2903 = vsel %vm193, %v2902, 0
    %2905 = vmatpush.msra.mxu0 0.0
    %2906 = vmatpush.msra.mxu0 0.0
    %2907 = vmatpush.msra.mxu0 0.0
    %2908 = vmatpush.msra.mxu0 0.0
    %2909 = vmatpush.msra.mxu0 0.0
    %2910 = vmatpush.msra.mxu0 0.0
    %2911 = vmatpush.msra.mxu0 0.0
    %2912 = vmatpush.msra.mxu0 0.0
    %2913 = vmatpush.msra.mxu0 0.0
    %2914 = vmatpush.msra.mxu0 0.0
    %2915 = vmatpush.msra.mxu0 0.0
    %2916 = vmatpush.msra.mxu0 0.0
    %2917 = vmatpush.msra.mxu0 %v2898
    %2918 = vmatpush.msra.mxu0 %v2896
    %2919 = vmatpush.msra.mxu0 %v2894
    %2920 = vmatpush.msra.mxu0 %v2892
    %2921 = vmatmul.f32.gmra.mxu0 %v2903
    %v2922 = vpop.f32.mrf.mxu0
    %v2923 = vadd.f32 0.0, %v2922
    %2924 = vdwg.mxu0
    %2925 = vmatpush.msra.mxu0 0.0
    %2926 = vmatpush.msra.mxu0 0.0
    %2927 = vmatpush.msra.mxu0 0.0
    %2928 = vmatpush.msra.mxu0 0.0
    %2929 = vmatpush.msra.mxu0 0.0
    %2930 = vmatpush.msra.mxu0 0.0
    %2931 = vmatpush.msra.mxu0 0.0
    %2932 = vmatpush.msra.mxu0 0.0
    %2933 = vmatpush.msra.mxu0 0.0
    %2934 = vmatpush.msra.mxu0 0.0
    %2935 = vmatpush.msra.mxu0 0.0
    %2936 = vmatpush.msra.mxu0 0.0
    %2937 = vmatpush.msra.mxu0 %v2899
    %2938 = vmatpush.msra.mxu0 %v2897
    %2939 = vmatpush.msra.mxu0 %v2895
    %2940 = vmatpush.msra.mxu0 %v2893
    %2941 = vmatmul.f32.gmra.mxu0 %v2903
    %v2942 = vpop.f32.mrf.mxu0
    %v2943 = vadd.f32 0.0, %v2942
    %2944 = vdwg.mxu0
    %v2945 = vadd.f32 %v2889, %v2923
    %v2946 = vadd.f32 %v2890, %v2943
    %s2947 = scalar_lea.vmem [#allocation2], 384
    %v2948 = vld [vmem:[%s2947] sm:$0xff]
    %v2949 = vld [vmem:[%s2947 + $0x8] sm:$0xff]
    %v2950 = vld [vmem:[%s2947 + $0x10] sm:$0xff]
    %v2951 = vld [vmem:[%s2947 + $0x18] sm:$0xff]
    %v2952 = vld [vmem:[%s2947 + $0x20] sm:$0xff]
    %v2953 = vld [vmem:[%s2947 + $0x28] sm:$0xff]
    %v2954 = vld [vmem:[%s2947 + $0x30] sm:$0xff]
    %v2955 = vld [vmem:[%s2947 + $0x38] sm:$0xff]
    %v2956 = vrot.slane %v2603, 6
    %v2957 = vrot.slane %v2604, 5
    %v2958 = vsel %vm2622, %v2957, %v2956
    %v2959 = vsel %vm193, %v2958, 0
    %2961 = vmatpush.msra.mxu0 0.0
    %2962 = vmatpush.msra.mxu0 0.0
    %2963 = vmatpush.msra.mxu0 0.0
    %2964 = vmatpush.msra.mxu0 0.0
    %2965 = vmatpush.msra.mxu0 0.0
    %2966 = vmatpush.msra.mxu0 0.0
    %2967 = vmatpush.msra.mxu0 0.0
    %2968 = vmatpush.msra.mxu0 0.0
    %2969 = vmatpush.msra.mxu0 0.0
    %2970 = vmatpush.msra.mxu0 0.0
    %2971 = vmatpush.msra.mxu0 0.0
    %2972 = vmatpush.msra.mxu0 0.0
    %2973 = vmatpush.msra.mxu0 %v2954
    %2974 = vmatpush.msra.mxu0 %v2952
    %2975 = vmatpush.msra.mxu0 %v2950
    %2976 = vmatpush.msra.mxu0 %v2948
    %2977 = vmatmul.f32.gmra.mxu0 %v2959
    %v2978 = vpop.f32.mrf.mxu0
    %v2979 = vadd.f32 0.0, %v2978
    %2980 = vdwg.mxu0
    %2981 = vmatpush.msra.mxu0 0.0
    %2982 = vmatpush.msra.mxu0 0.0
    %2983 = vmatpush.msra.mxu0 0.0
    %2984 = vmatpush.msra.mxu0 0.0
    %2985 = vmatpush.msra.mxu0 0.0
    %2986 = vmatpush.msra.mxu0 0.0
    %2987 = vmatpush.msra.mxu0 0.0
    %2988 = vmatpush.msra.mxu0 0.0
    %2989 = vmatpush.msra.mxu0 0.0
    %2990 = vmatpush.msra.mxu0 0.0
    %2991 = vmatpush.msra.mxu0 0.0
    %2992 = vmatpush.msra.mxu0 0.0
    %2993 = vmatpush.msra.mxu0 %v2955
    %2994 = vmatpush.msra.mxu0 %v2953
    %2995 = vmatpush.msra.mxu0 %v2951
    %2996 = vmatpush.msra.mxu0 %v2949
    %2997 = vmatmul.f32.gmra.mxu0 %v2959
    %v2998 = vpop.f32.mrf.mxu0
    %v2999 = vadd.f32 0.0, %v2998
    %3000 = vdwg.mxu0
    %v3001 = vadd.f32 %v2945, %v2979
    %v3002 = vadd.f32 %v2946, %v2999
    %s3003 = scalar_lea.vmem [#allocation2], 448
    %v3004 = vld [vmem:[%s3003] sm:$0xff]
    %v3005 = vld [vmem:[%s3003 + $0x8] sm:$0xff]
    %v3006 = vld [vmem:[%s3003 + $0x10] sm:$0xff]
    %v3007 = vld [vmem:[%s3003 + $0x18] sm:$0xff]
    %v3008 = vld [vmem:[%s3003 + $0x20] sm:$0xff]
    %v3009 = vld [vmem:[%s3003 + $0x28] sm:$0xff]
    %v3010 = vld [vmem:[%s3003 + $0x30] sm:$0xff]
    %v3011 = vld [vmem:[%s3003 + $0x38] sm:$0xff]
    %v3012 = vrot.slane %v2603, 7
    %v3013 = vrot.slane %v2604, 6
    %v3014 = vsel %vm2622, %v3013, %v3012
    %v3015 = vsel %vm193, %v3014, 0
    %3017 = vmatpush.msra.mxu0 0.0
    %3018 = vmatpush.msra.mxu0 0.0
    %3019 = vmatpush.msra.mxu0 0.0
    %3020 = vmatpush.msra.mxu0 0.0
    %3021 = vmatpush.msra.mxu0 0.0
    %3022 = vmatpush.msra.mxu0 0.0
    %3023 = vmatpush.msra.mxu0 0.0
    %3024 = vmatpush.msra.mxu0 0.0
    %3025 = vmatpush.msra.mxu0 0.0
    %3026 = vmatpush.msra.mxu0 0.0
    %3027 = vmatpush.msra.mxu0 0.0
    %3028 = vmatpush.msra.mxu0 0.0
    %3029 = vmatpush.msra.mxu0 %v3010
    %3030 = vmatpush.msra.mxu0 %v3008
    %3031 = vmatpush.msra.mxu0 %v3006
    %3032 = vmatpush.msra.mxu0 %v3004
    %3033 = vmatmul.f32.gmra.mxu0 %v3015
    %v3034 = vpop.f32.mrf.mxu0
    %v3035 = vadd.f32 0.0, %v3034
    %3036 = vdwg.mxu0
    %3037 = vmatpush.msra.mxu0 0.0
    %3038 = vmatpush.msra.mxu0 0.0
    %3039 = vmatpush.msra.mxu0 0.0
    %3040 = vmatpush.msra.mxu0 0.0
    %3041 = vmatpush.msra.mxu0 0.0
    %3042 = vmatpush.msra.mxu0 0.0
    %3043 = vmatpush.msra.mxu0 0.0
    %3044 = vmatpush.msra.mxu0 0.0
    %3045 = vmatpush.msra.mxu0 0.0
    %3046 = vmatpush.msra.mxu0 0.0
    %3047 = vmatpush.msra.mxu0 0.0
    %3048 = vmatpush.msra.mxu0 0.0
    %3049 = vmatpush.msra.mxu0 %v3011
    %3050 = vmatpush.msra.mxu0 %v3009
    %3051 = vmatpush.msra.mxu0 %v3007
    %3052 = vmatpush.msra.mxu0 %v3005
    %3053 = vmatmul.f32.gmra.mxu0 %v3015
    %v3054 = vpop.f32.mrf.mxu0
    %v3055 = vadd.f32 0.0, %v3054
    %3056 = vdwg.mxu0
    %v3057 = vadd.f32 %v3001, %v3035
    %v3058 = vadd.f32 %v3002, %v3055
    %v3059 = vmax.f32 %v3057, 0.0
    %v3060 = vmax.f32 %v3058, 0.0
    %v3061 = vld [vmem:[%s71] sm:$0xff]
    %v3062 = vld [vmem:[%s71 + $0x8] sm:$0xff]
    %v3063 = vld [vmem:[%s71 + $0x10] sm:$0xff]
    %v3064 = vld [vmem:[%s71 + $0x18] sm:$0xff]
    %v3065 = vld [vmem:[%s71 + $0x20] sm:$0xff]
    %v3066 = vld [vmem:[%s71 + $0x28] sm:$0xff]
    %v3067 = vld [vmem:[%s71 + $0x30] sm:$0xff]
    %v3068 = vld [vmem:[%s71 + $0x38] sm:$0xff]
    %v3069 = vld [vmem:[%s71 + $0x40] sm:$0xff]
    %v3070 = vld [vmem:[%s71 + $0x48] sm:$0xff]
    %v3071 = vld [vmem:[%s71 + $0x50] sm:$0xff]
    %v3072 = vld [vmem:[%s71 + $0x58] sm:$0xff]
    %v3073 = vld [vmem:[%s71 + $0x60] sm:$0xff]
    %v3074 = vld [vmem:[%s71 + $0x68] sm:$0xff]
    %v3075 = vld [vmem:[%s71 + $0x70] sm:$0xff]
    %v3076 = vld [vmem:[%s71 + $0x78] sm:$0xff]
    %v3077 = vld [vmem:[%s71 + $0x80] sm:$0xff]
    %v3078 = vld [vmem:[%s71 + $0x88] sm:$0xff]
    %v3079 = vld [vmem:[%s71 + $0x90] sm:$0xff]
    %v3080 = vld [vmem:[%s71 + $0x98] sm:$0xff]
    %v3081 = vld [vmem:[%s71 + $0xa0] sm:$0xff]
    %v3082 = vld [vmem:[%s71 + $0xa8] sm:$0xff]
    %v3083 = vld [vmem:[%s71 + $0xb0] sm:$0xff]
    %v3084 = vld [vmem:[%s71 + $0xb8] sm:$0xff]
    %v3085 = vld [vmem:[%s71 + $0xc0] sm:$0xff]
    %v3086 = vld [vmem:[%s71 + $0xc8] sm:$0xff]
    %v3087 = vld [vmem:[%s71 + $0xd0] sm:$0xff]
    %v3088 = vld [vmem:[%s71 + $0xd8] sm:$0xff]
    %v3089 = vld [vmem:[%s71 + $0xe0] sm:$0xff]
    %v3090 = vld [vmem:[%s71 + $0xe8] sm:$0xff]
    %v3091 = vld [vmem:[%s71 + $0xf0] sm:$0xff]
    %v3092 = vld [vmem:[%s71 + $0xf8] sm:$0xff]
    %v3093 = vld [vmem:[%s73] sm:$0x1]
    %v3095 = vperm.slane %v3093, 0
    %3097 = vmatpush.msra.mxu0 %v3076
    %3098 = vmatpush.msra.mxu0 %v3075
    %3099 = vmatpush.msra.mxu0 %v3074
    %3100 = vmatpush.msra.mxu0 %v3073
    %3101 = vmatpush.msra.mxu0 %v3072
    %3102 = vmatpush.msra.mxu0 %v3071
    %3103 = vmatpush.msra.mxu0 %v3070
    %3104 = vmatpush.msra.mxu0 %v3069
    %3105 = vmatpush.msra.mxu0 %v3068
    %3106 = vmatpush.msra.mxu0 %v3067
    %3107 = vmatpush.msra.mxu0 %v3066
    %3108 = vmatpush.msra.mxu0 %v3065
    %3109 = vmatpush.msra.mxu0 %v3064
    %3110 = vmatpush.msra.mxu0 %v3063
    %3111 = vmatpush.msra.mxu0 %v3062
    %3112 = vmatpush.msra.mxu0 %v3061
    %3113 = vmatmul.f32.gmra.mxu0 %v3059
    %v3114 = vpop.f32.mrf.mxu0
    %v3115 = vadd.f32 %v3095, %v3114
    %3116 = vdwg.mxu0
    %3117 = vmatpush.msra.mxu0 %v3092
    %3118 = vmatpush.msra.mxu0 %v3091
    %3119 = vmatpush.msra.mxu0 %v3090
    %3120 = vmatpush.msra.mxu0 %v3089
    %3121 = vmatpush.msra.mxu0 %v3088
    %3122 = vmatpush.msra.mxu0 %v3087
    %3123 = vmatpush.msra.mxu0 %v3086
    %3124 = vmatpush.msra.mxu0 %v3085
    %3125 = vmatpush.msra.mxu0 %v3084
    %3126 = vmatpush.msra.mxu0 %v3083
    %3127 = vmatpush.msra.mxu0 %v3082
    %3128 = vmatpush.msra.mxu0 %v3081
    %3129 = vmatpush.msra.mxu0 %v3080
    %3130 = vmatpush.msra.mxu0 %v3079
    %3131 = vmatpush.msra.mxu0 %v3078
    %3132 = vmatpush.msra.mxu0 %v3077
    %3133 = vmatmul.f32.gmra.mxu0 %v3060
    %v3134 = vpop.f32.mrf.mxu0
    %v3135 = vadd.f32 %v3115, %v3134
    %3136 = vdwg.mxu0
    %v3137 = vmax.f32 %v3135, 0.0
    %v3138 = vld [vmem:[%s75] sm:$0xff]
    %v3139 = vld [vmem:[%s75 + $0x8] sm:$0xff]
    %v3140 = vld [vmem:[%s75 + $0x10] sm:$0xff]
    %v3141 = vld [vmem:[%s75 + $0x18] sm:$0xff]
    %v3142 = vld [vmem:[%s75 + $0x20] sm:$0xff]
    %v3143 = vld [vmem:[%s75 + $0x28] sm:$0xff]
    %v3144 = vld [vmem:[%s75 + $0x30] sm:$0xff]
    %v3145 = vld [vmem:[%s75 + $0x38] sm:$0xff]
    %v3146 = vld [vmem:[%s75 + $0x40] sm:$0xff]
    %v3147 = vld [vmem:[%s75 + $0x48] sm:$0xff]
    %v3148 = vld [vmem:[%s75 + $0x50] sm:$0xff]
    %v3149 = vld [vmem:[%s75 + $0x58] sm:$0xff]
    %v3150 = vld [vmem:[%s75 + $0x60] sm:$0xff]
    %v3151 = vld [vmem:[%s75 + $0x68] sm:$0xff]
    %v3152 = vld [vmem:[%s75 + $0x70] sm:$0xff]
    %v3153 = vld [vmem:[%s75 + $0x78] sm:$0xff]
    %v3154 = vld [vmem:[%s77] sm:$0x1]
    %v3156 = vperm.slane %v3154, 0
    %3158 = vmatpush.msra.mxu0 %v3153
    %3159 = vmatpush.msra.mxu0 %v3152
    %3160 = vmatpush.msra.mxu0 %v3151
    %3161 = vmatpush.msra.mxu0 %v3150
    %3162 = vmatpush.msra.mxu0 %v3149
    %3163 = vmatpush.msra.mxu0 %v3148
    %3164 = vmatpush.msra.mxu0 %v3147
    %3165 = vmatpush.msra.mxu0 %v3146
    %3166 = vmatpush.msra.mxu0 %v3145
    %3167 = vmatpush.msra.mxu0 %v3144
    %3168 = vmatpush.msra.mxu0 %v3143
    %3169 = vmatpush.msra.mxu0 %v3142
    %3170 = vmatpush.msra.mxu0 %v3141
    %3171 = vmatpush.msra.mxu0 %v3140
    %3172 = vmatpush.msra.mxu0 %v3139
    %3173 = vmatpush.msra.mxu0 %v3138
    %3174 = vmatmul.f32.gmra.mxu0 %v3137
    %v3175 = vpop.f32.mrf.mxu0
    %v3176 = vadd.f32 %v3156, %v3175
    %3177 = vdwg.mxu0
    %3178 = vst [vmem:[#allocation5] sm:$0x3] %v3176
    // Predicated region
    $region162: #{tpu_custom_call.1} parent=1 // pred_check
      _
    $region163: #{tpu_custom_call.1} parent=1 // pred_check_branch
      %3180 = sbr.rel (0) target = $region165
    $region164: #{tpu_custom_call.1} parent=1 // pred_region
      %3182 = vsyncadd [#allocation4], 0
      %s3184 = sshll.u32 [#allocation5], 4
      %s3185 = int_to_ptr.vmem [resolvable:$true] %s3184
      %s3186 = sshll.u32 %s79, 4
      %s3187 = int_to_ptr.hbm [resolvable:$true] %s3186
      %3189 = dma.vmem_to_hbm [thread:$0]  %s3185, 32, %s3187, [#allocation4]
    $region165: #{tpu_custom_call.1} parent=1 // pred_fallthru
      _
    // Predicated region
    $region166: #{tpu_custom_call.1} parent=1 // pred_check
      _
    $region167: #{tpu_custom_call.1} parent=1 // pred_check_branch
      %3191 = sbr.rel (0) target = $region169
    $region168: #{tpu_custom_call.1} parent=1 // pred_region
      %3193 = dma.done [#allocation4], 32
    $region169: #{tpu_custom_call.1} parent=1 // pred_fallthru
      _
    %3194 = vsyncpa [#allocation3], 1
    %3195 = vsyncpa [#allocation4], 1

</llo_original>
